<compile_context>
chip_gen: v5e
topology: v5e:2x2
jax: 0.10.0
libtpu: 0.0.40
codegen_flags: <defaults>
</compile_context>

<pallas_src>
import functools

import jax
import jax.numpy as jnp
from jax.experimental import pallas as pl
from jax.experimental.pallas import tpu as pltpu

EPS = 1e-5  # torch nn.LayerNorm default

# Set once in __main__ (or by callers) before the first forward pass.
_WEIGHT_PIPELINE_MODE = None


def _set_weight_pipeline_mode(mode):
    global _WEIGHT_PIPELINE_MODE
    _WEIGHT_PIPELINE_MODE = mode


def _probe_buffered_support():
    """Return pl.Buffered(1) if this JAX/libtpu supports single-buffered
    constant-index BlockSpecs in pallas_call, else None (fallback)."""
    if not hasattr(pl, "Buffered"):
        return None
    try:
        def k(x_ref, o_ref):
            o_ref[...] = x_ref[...] + 1.0

        x = jnp.zeros((8, 128), jnp.float32)
        spec = pl.BlockSpec((8, 128), lambda i: (0, 0),
                            pipeline_mode=pl.Buffered(1))
        out = pl.pallas_call(
            k,
            out_shape=jax.ShapeDtypeStruct((8, 128), jnp.float32),
            grid=(2,),
            in_specs=[spec],
            out_specs=pl.BlockSpec((8, 128), lambda i: (0, 0)),
        )(x)
        jax.block_until_ready(out)
        return pl.Buffered(1)
    except Exception:
        return None


def _layernorm(x, g, b):
    mean = jnp.mean(x, axis=-1, keepdims=True)
    var = jnp.mean(jnp.square(x - mean), axis=-1, keepdims=True)
    return (x - mean) * jax.lax.rsqrt(var + EPS) * g + b


# ----------------------------- kernel --------------------------------------- #

def layer_kernel(x_ref,
                 ln1_g_ref, ln1_b_ref, wqkv_ref, wo_ref, bo_ref,
                 ln2_g_ref, ln2_b_ref, w1_ref, fb1_ref, w2_ref, fb2_ref,
                 o_ref, *, heads, dim_head):
    """One full transformer layer for one batch element."""
    x = x_ref[0]                                              # (N, D) f32
    N, D = x.shape
    inner = heads * dim_head

    # ---------------- attention: x + Attn(LN(x)) @ Wo ---------------- #
    xn = _layernorm(x, ln1_g_ref[...], ln1_b_ref[...])        # f32 (N, D)

    # Single lane-dense projection (scale already folded into Wq columns).
    qkv = jnp.dot(xn.astype(jnp.bfloat16), wqkv_ref[...],
                  preferred_element_type=jnp.float32)         # (N, 3*inner) f32
    q = qkv[:, :inner]
    k = qkv[:, inner:2 * inner]
    v = qkv[:, 2 * inner:]

    def to_heads(t):                                          # (N, inner) -> (H, N, dh) bf16
        return t.reshape(N, heads, dim_head).transpose(1, 0, 2).astype(jnp.bfloat16)

    qh, kh, vh = to_heads(q), to_heads(k), to_heads(v)

    # scores: (H, N, dh) x (H, N, dh) -> (H, N, N)
    dots = jnp.einsum('hid,hjd->hij', qh, kh,
                      preferred_element_type=jnp.float32)
    dots = dots - jnp.max(dots, axis=-1, keepdims=True)
    p = jnp.exp(dots)                                          # f32 exp (v5e-safe)
    attn = p * pl.reciprocal(jnp.sum(p, axis=-1, keepdims=True), approx=True)

    # context: (H, N, N) @ (H, N, dh) -> (H, N, dh)
    ctx = jnp.einsum('hij,hjd->hid', attn.astype(jnp.bfloat16), vh,
                     preferred_element_type=jnp.float32)

    # single deep output projection: (N, inner) @ (inner, D) -> (N, D)
    ctx2 = ctx.transpose(1, 0, 2).reshape(N, inner)
    out = jnp.dot(ctx2.astype(jnp.bfloat16), wo_ref[...],
                  preferred_element_type=jnp.float32) + bo_ref[...]
    x = x + out

    # ---------------- feed-forward: x + W2 ReLU(W1 LN(x)) ------------- #
    xn2 = _layernorm(x, ln2_g_ref[...], ln2_b_ref[...])
    h = jnp.dot(xn2.astype(jnp.bfloat16), w1_ref[...],
                preferred_element_type=jnp.float32) + fb1_ref[...]
    h = jnp.maximum(h, 0.0)
    y = jnp.dot(h.astype(jnp.bfloat16), w2_ref[...],
                preferred_element_type=jnp.float32) + fb2_ref[...]

    o_ref[0] = (x + y).astype(o_ref.dtype)


# ----------------------------- wrapper -------------------------------------- #

def _vmem_limit_bytes(N, D, heads, dim_head, mlp_dim):
    inner = heads * dim_head
    weight_bytes = 2 * (D * 3 * inner + inner * D + D * mlp_dim + mlp_dim * D)
    act_bytes = 4 * (4 * N * D                # x / xn / residual copies
                     + 3 * N * 3 * inner      # qkv f32 + bf16 head copies
                     + 3 * heads * N * N      # dots / p / attn
                     + 2 * N * inner          # ctx
                     + 2 * N * mlp_dim)       # MLP hidden (f32 + bf16)
    # Weights may be double-buffered if pl.Buffered(1) is unsupported; x/out
    # are double-buffered across the batch grid; add headroom.
    need = 2 * weight_bytes + act_bytes + 4 * (4 * N * D) + (4 << 20)
    # Keep within the smallest physical VMEM across v5e/v6e/v7x.
    return int(min(max(need, 32 << 20), 64 << 20))


def layer_block(x, p, *, heads, dim_head, mlp_dim):
    B, N, D = x.shape
    inner = heads * dim_head

    def w_spec(shape):
        idx = lambda b: (0,) * len(shape)
        if _WEIGHT_PIPELINE_MODE is not None:
            return pl.BlockSpec(shape, idx, pipeline_mode=_WEIGHT_PIPELINE_MODE)
        return pl.BlockSpec(shape, idx)

    kern = functools.partial(layer_kernel, heads=heads, dim_head=dim_head)
    return pl.pallas_call(
        kern,
        out_shape=jax.ShapeDtypeStruct((B, N, D), x.dtype),
        grid=(B,),
        in_specs=[
            pl.BlockSpec((1, N, D), lambda b: (b, 0, 0)),    # x (double-buffered)
            w_spec((1, D)), w_spec((1, D)),                  # LN1 gamma / beta
            w_spec((D, 3 * inner)),                          # Wqkv (bf16, q pre-scaled)
            w_spec((inner, D)),                              # Wo (bf16)
            w_spec((1, D)),                                  # bo
            w_spec((1, D)), w_spec((1, D)),                  # LN2 gamma / beta
            w_spec((D, mlp_dim)),                            # W1 (bf16)
            w_spec((1, mlp_dim)),                            # b1
            w_spec((mlp_dim, D)),                            # W2 (bf16)
            w_spec((1, D)),                                  # b2
        ],
        out_specs=pl.BlockSpec((1, N, D), lambda b: (b, 0, 0)),
        compiler_params=pltpu.CompilerParams(
            dimension_semantics=("parallel",),
            vmem_limit_bytes=_vmem_limit_bytes(N, D, heads, dim_head, mlp_dim)),
    )(x, p["ln1_g"], p["ln1_b"], p["wqkv"], p["wo"], p["bo"],
      p["ln2_g"], p["ln2_b"], p["w1"], p["b1"], p["w2"], p["b2"])


@functools.partial(jax.jit, static_argnames=("heads", "dim_head", "mlp_dim"))
def transformer_forward(x, prepared_layers, *, heads, dim_head, mlp_dim):
    for p in prepared_layers:
        x = layer_block(x, p, heads=heads, dim_head=dim_head, mlp_dim=mlp_dim)
    return x


# ------------------------- params, prep & reference ------------------------- #

def init_params(key, *, dim, depth, heads, dim_head, mlp_dim):
    inner = heads * dim_head
    layers = []
    for _ in range(depth):
        key, k1, k2, k3, k4 = jax.random.split(key, 5)
        attn_p = {
            "ln_g": jnp.ones((1, dim), jnp.float32),
            "ln_b": jnp.zeros((1, dim), jnp.float32),
            "wqkv": 0.02 * jax.random.normal(k1, (dim, 3 * inner), jnp.float32),
            "wo": 0.02 * jax.random.normal(k2, (inner, dim), jnp.float32),
            "bo": jnp.zeros((1, dim), jnp.float32),
        }
        ff_p = {
            "ln_g": jnp.ones((1, dim), jnp.float32),
            "ln_b": jnp.zeros((1, dim), jnp.float32),
            "w1": 0.02 * jax.random.normal(k3, (dim, mlp_dim), jnp.float32),
            "b1": jnp.zeros((1, mlp_dim), jnp.float32),
            "w2": 0.02 * jax.random.normal(k4, (mlp_dim, dim), jnp.float32),
            "b2": jnp.zeros((1, dim), jnp.float32),
        }
        layers.append((attn_p, ff_p))
    return layers


def prepare_params(layers, *, heads, dim_head):
    """One-time, off the per-forward path: fold 1/sqrt(dh) into Wq and cast
    matmul weights to bf16 (kernel-ready, cached)."""
    inner = heads * dim_head
    scale = dim_head ** -0.5
    prepared = []
    for attn_p, ff_p in layers:
        wqkv = attn_p["wqkv"]
        wqkv = jnp.concatenate([wqkv[:, :inner] * scale, wqkv[:, inner:]], axis=1)
        prepared.append({
            "ln1_g": attn_p["ln_g"], "ln1_b": attn_p["ln_b"],
            "wqkv": wqkv.astype(jnp.bfloat16),
            "wo": attn_p["wo"].astype(jnp.bfloat16),
            "bo": attn_p["bo"],
            "ln2_g": ff_p["ln_g"], "ln2_b": ff_p["ln_b"],
            "w1": ff_p["w1"].astype(jnp.bfloat16), "b1": ff_p["b1"],
            "w2": ff_p["w2"].astype(jnp.bfloat16), "b2": ff_p["b2"],
        })
    return prepared


def reference_forward(x, layers, *, heads, dim_head):
    """Pure-JAX (f32) mirror of the PyTorch module for correctness checking."""
    for attn_p, ff_p in layers:
        xn = _layernorm(x, attn_p["ln_g"], attn_p["ln_b"])
        qkv = jnp.einsum("bnd,de->bne", xn, attn_p["wqkv"])
        q, k, v = jnp.split(qkv, 3, axis=-1)
        B, N, inner = q.shape

        def split_heads(t):
            return t.reshape(B, N, heads, dim_head).transpose(0, 2, 1, 3)

        q, k, v = map(split_heads, (q, k, v))
        dots = jnp.einsum("bhid,bhjd->bhij", q, k) * (dim_head ** -0.5)
        attn = jax.nn.softmax(dots, axis=-1)
        o = jnp.einsum("bhij,bhjd->bhid", attn, v)
        o = o.transpose(0, 2, 1, 3).reshape(B, N, inner)
        o = jnp.einsum("bne,ed->bnd", o, attn_p["wo"]) + attn_p["bo"]
        x = x + o

        xn = _layernorm(x, ff_p["ln_g"], ff_p["ln_b"])
        h = jnp.maximum(jnp.einsum("bnd,dm->bnm", xn, ff_p["w1"]) + ff_p["b1"], 0.0)
        y = jnp.einsum("bnm,md->bnd", h, ff_p["w2"]) + ff_p["b2"]
        x = x + y
    return x


# --------------------------------- main -------------------------------------- #

if __name__ == "__main__":
    # Small but lane-/sublane-aligned shapes (D=128 lanes, inner=128).
    dim, depth, heads, dim_head, mlp_dim = 128, 2, 4, 32, 256
    B, N = 2, 16

    key = jax.random.PRNGKey(0)
    kx, kp = jax.random.split(key)
    x = jax.random.normal(kx, (B, N, dim), jnp.float32)
    layers = init_params(kp, dim=dim, depth=depth, heads=heads,
                         dim_head=dim_head, mlp_dim=mlp_dim)

    # One-time weight preparation (hoisted out of the per-call path).
    prepared = prepare_params(layers, heads=heads, dim_head=dim_head)

    # Probe once whether single-buffered weight blocks are supported.
    _set_weight_pipeline_mode(_probe_buffered_support())

    out = transformer_forward(x, prepared, heads=heads, dim_head=dim_head,
                              mlp_dim=mlp_dim)
    out = jax.block_until_ready(out)

    ref = reference_forward(x, layers, heads=heads, dim_head=dim_head)
    assert out.shape == (B, N, dim)
    # bf16 MXU operands + approx reciprocal vs. f32 reference -> bf16-class tol.
    assert jnp.allclose(out, ref, rtol=2e-2, atol=5e-3), "mismatch vs. JAX reference"

    print("KERNEL_OK")
</pallas_src>

<mosaic_0001>
module attributes {stable_mosaic.version = 11 : i64} {
  func.func @k(%arg0: i32, %arg1: memref<8x128xf32, #tpu.memory_space<vmem>>, %arg2: memref<8x128xf32, #tpu.memory_space<vmem>>) attributes {dimension_semantics = [#tpu.dimension_semantics<arbitrary>], iteration_bounds = array<i64: 2>, scalar_prefetch = 0 : i64, scratch_operands = 0 : i64, tpu.core_type = #tpu.core_type<tc>, window_params = [{pipeline_mode = #tpu.pipeline_mode<synchronous>, transform_indices = @transform_0, window_bounds = array<i64: 8, 128>}, {pipeline_mode = #tpu.pipeline_mode<synchronous>, transform_indices = @transform_1, window_bounds = array<i64: 8, 128>}]} {
    %c0 = arith.constant 0 : index
    %c0_0 = arith.constant 0 : index
    %0 = vector.load %arg1[%c0, %c0_0] : memref<8x128xf32, #tpu.memory_space<vmem>>, vector<8x128xf32>
    %cst = arith.constant 1.000000e+00 : f32
    %1 = vector.broadcast %cst : f32 to vector<8x128xf32>
    %2 = arith.addf %0, %1 : vector<8x128xf32>
    %c0_1 = arith.constant 0 : index
    %c0_2 = arith.constant 0 : index
    %3 = vector.load %arg2[%c0_1, %c0_2] : memref<8x128xf32, #tpu.memory_space<vmem>>, vector<8x128xf32>
    tpu.vector_store %arg2[%c0_1, %c0_2], %2 {strides = array<i32>} : memref<8x128xf32, #tpu.memory_space<vmem>>, vector<8x128xf32>,
    return
  }
  func.func @transform_0(%arg0: i32) -> (i32, i32) {
    %c0_i32 = arith.constant 0 : i32
    %c0_i32_0 = arith.constant 0 : i32
    %c0_i32_1 = arith.constant 0 : i32
    return %c0_i32, %c0_i32_0 : i32, i32
  }
  func.func @transform_1(%arg0: i32) -> (i32, i32) {
    %c0_i32 = arith.constant 0 : i32
    %c0_i32_0 = arith.constant 0 : i32
    %c0_i32_1 = arith.constant 0 : i32
    return %c0_i32, %c0_i32_0 : i32, i32
  }
}

module attributes {stable_mosaic.version = 11 : i64} {
  func.func @layer_kernel(%arg0: i32, %arg1: memref<1x16x128xf32, #tpu.memory_space<vmem>>, %arg2: memref<1x128xf32, #tpu.memory_space<vmem>>, %arg3: memref<1x128xf32, #tpu.memory_space<vmem>>, %arg4: memref<128x384xbf16, #tpu.memory_space<vmem>>, %arg5: memref<128x128xbf16, #tpu.memory_space<vmem>>, %arg6: memref<1x128xf32, #tpu.memory_space<vmem>>, %arg7: memref<1x128xf32, #tpu.memory_space<vmem>>, %arg8: memref<1x128xf32, #tpu.memory_space<vmem>>, %arg9: memref<128x256xbf16, #tpu.memory_space<vmem>>, %arg10: memref<1x256xf32, #tpu.memory_space<vmem>>, %arg11: memref<256x128xbf16, #tpu.memory_space<vmem>>, %arg12: memref<1x128xf32, #tpu.memory_space<vmem>>, %arg13: memref<1x16x128xf32, #tpu.memory_space<vmem>>) attributes {dimension_semantics = [#tpu.dimension_semantics<parallel>], iteration_bounds = array<i64: 2>, scalar_prefetch = 0 : i64, scratch_operands = 0 : i64, tpu.core_type = #tpu.core_type<tc>, window_params = [{transform_indices = @transform_0, window_bounds = array<i64: 1, 16, 128>}, {pipeline_mode = #tpu.pipeline_mode<synchronous>, transform_indices = @transform_1, window_bounds = array<i64: 1, 128>}, {pipeline_mode = #tpu.pipeline_mode<synchronous>, transform_indices = @transform_2, window_bounds = array<i64: 1, 128>}, {pipeline_mode = #tpu.pipeline_mode<synchronous>, transform_indices = @transform_3, window_bounds = array<i64: 128, 384>}, {pipeline_mode = #tpu.pipeline_mode<synchronous>, transform_indices = @transform_4, window_bounds = array<i64: 128, 128>}, {pipeline_mode = #tpu.pipeline_mode<synchronous>, transform_indices = @transform_5, window_bounds = array<i64: 1, 128>}, {pipeline_mode = #tpu.pipeline_mode<synchronous>, transform_indices = @transform_6, window_bounds = array<i64: 1, 128>}, {pipeline_mode = #tpu.pipeline_mode<synchronous>, transform_indices = @transform_7, window_bounds = array<i64: 1, 128>}, {pipeline_mode = #tpu.pipeline_mode<synchronous>, transform_indices = @transform_8, window_bounds = array<i64: 128, 256>}, {pipeline_mode = #tpu.pipeline_mode<synchronous>, transform_indices = @transform_9, window_bounds = array<i64: 1, 256>}, {pipeline_mode = #tpu.pipeline_mode<synchronous>, transform_indices = @transform_10, window_bounds = array<i64: 256, 128>}, {pipeline_mode = #tpu.pipeline_mode<synchronous>, transform_indices = @transform_11, window_bounds = array<i64: 1, 128>}, {transform_indices = @transform_12, window_bounds = array<i64: 1, 16, 128>}]} {
    %c0 = arith.constant 0 : index
    %c0_0 = arith.constant 0 : index
    %c0_1 = arith.constant 0 : index
    %0 = vector.load %arg1[%c0, %c0_0, %c0_1] : memref<1x16x128xf32, #tpu.memory_space<vmem>>, vector<1x16x128xf32>
    %1 = vector.shape_cast %0 : vector<1x16x128xf32> to vector<16x128xf32>
    %c0_2 = arith.constant 0 : index
    %c0_3 = arith.constant 0 : index
    %2 = vector.load %arg2[%c0_2, %c0_3] : memref<1x128xf32, #tpu.memory_space<vmem>>, vector<1x128xf32>
    %c0_4 = arith.constant 0 : index
    %c0_5 = arith.constant 0 : index
    %3 = vector.load %arg3[%c0_4, %c0_5] : memref<1x128xf32, #tpu.memory_space<vmem>>, vector<1x128xf32>
    %cst = arith.constant dense<0.000000e+00> : vector<16xf32>
    %4 = vector.multi_reduction <add>, %1, %cst [1] : vector<16x128xf32> to vector<16xf32>
    %5 = vector.shape_cast %4 : vector<16xf32> to vector<16x1xf32>
    %cst_6 = arith.constant 1.280000e+02 : f32
    %6 = vector.broadcast %cst_6 : f32 to vector<16x1xf32>
    %7 = arith.divf %5, %6 : vector<16x1xf32>
    %8 = vector.broadcast %7 : vector<16x1xf32> to vector<16x128xf32>
    %9 = arith.subf %1, %8 : vector<16x128xf32>
    %10 = arith.mulf %9, %9 : vector<16x128xf32>
    %cst_7 = arith.constant dense<0.000000e+00> : vector<16xf32>
    %11 = vector.multi_reduction <add>, %10, %cst_7 [1] : vector<16x128xf32> to vector<16xf32>
    %12 = vector.shape_cast %11 : vector<16xf32> to vector<16x1xf32>
    %cst_8 = arith.constant 1.280000e+02 : f32
    %13 = vector.broadcast %cst_8 : f32 to vector<16x1xf32>
    %14 = arith.divf %12, %13 : vector<16x1xf32>
    %15 = vector.broadcast %7 : vector<16x1xf32> to vector<16x128xf32>
    %16 = arith.subf %1, %15 : vector<16x128xf32>
    %cst_9 = arith.constant 9.99999974E-6 : f32
    %17 = vector.broadcast %cst_9 : f32 to vector<16x1xf32>
    %18 = arith.addf %14, %17 : vector<16x1xf32>
    %19 = math.rsqrt %18 : vector<16x1xf32>
    %20 = vector.broadcast %19 : vector<16x1xf32> to vector<16x128xf32>
    %21 = arith.mulf %16, %20 : vector<16x128xf32>
    %22 = vector.broadcast %2 : vector<1x128xf32> to vector<16x128xf32>
    %23 = arith.mulf %21, %22 : vector<16x128xf32>
    %24 = vector.broadcast %3 : vector<1x128xf32> to vector<16x128xf32>
    %25 = arith.addf %23, %24 : vector<16x128xf32>
    %26 = arith.truncf %25 : vector<16x128xf32> to vector<16x128xbf16>
    %c0_10 = arith.constant 0 : index
    %c0_11 = arith.constant 0 : index
    %27 = vector.load %arg4[%c0_10, %c0_11] : memref<128x384xbf16, #tpu.memory_space<vmem>>, vector<128x384xbf16>
    %cst_12 = arith.constant dense<0.000000e+00> : vector<16x384xf32>
    %28 = tpu.matmul %26, %27, %cst_12 {dimension_numbers = #tpu.dot_dimension_numbers<[1], [0], [0], [1], [0, 0, 1, 1], [], []>} : vector<16x128xbf16>, vector<128x384xbf16>, vector<16x384xf32> -> vector<16x384xf32>
    %29 = vector.extract_strided_slice %28 {offsets = [0, 0], sizes = [16, 128], strides = [1, 1]} : vector<16x384xf32> to vector<16x128xf32>
    %30 = vector.extract_strided_slice %28 {offsets = [0, 128], sizes = [16, 128], strides = [1, 1]} : vector<16x384xf32> to vector<16x128xf32>
    %31 = vector.extract_strided_slice %28 {offsets = [0, 256], sizes = [16, 128], strides = [1, 1]} : vector<16x384xf32> to vector<16x128xf32>
    %32 = vector.shape_cast %29 : vector<16x128xf32> to vector<16x4x32xf32>
    %33 = tpu.transpose %32, [1, 0, 2] : vector<16x4x32xf32> -> vector<4x16x32xf32>
    %34 = arith.truncf %33 : vector<4x16x32xf32> to vector<4x16x32xbf16>
    %35 = vector.shape_cast %30 : vector<16x128xf32> to vector<16x4x32xf32>
    %36 = tpu.transpose %35, [1, 0, 2] : vector<16x4x32xf32> -> vector<4x16x32xf32>
    %37 = arith.truncf %36 : vector<4x16x32xf32> to vector<4x16x32xbf16>
    %38 = vector.shape_cast %31 : vector<16x128xf32> to vector<16x4x32xf32>
    %39 = tpu.transpose %38, [1, 0, 2] : vector<16x4x32xf32> -> vector<4x16x32xf32>
    %40 = arith.truncf %39 : vector<4x16x32xf32> to vector<4x16x32xbf16>
    "tpu.trace_start"() <{level = 10 : i32, message = "hid,hjd->hij"}> : () -> ()
    %cst_13 = arith.constant dense<0.000000e+00> : vector<4x16x16xf32>
    %41 = tpu.matmul %34, %37, %cst_13 {dimension_numbers = #tpu.dot_dimension_numbers<[2], [2], [1], [1], [0, 0, 0, 1, 1, 1], [0], [0]>} : vector<4x16x32xbf16>, vector<4x16x32xbf16>, vector<4x16x16xf32> -> vector<4x16x16xf32>
    "tpu.trace_stop"() : () -> ()
    %cst_14 = arith.constant dense<0xFF800000> : vector<4x16xf32>
    %42 = vector.multi_reduction <maximumf>, %41, %cst_14 [2] : vector<4x16x16xf32> to vector<4x16xf32>
    %43 = vector.shape_cast %42 : vector<4x16xf32> to vector<4x16x1xf32>
    %44 = vector.broadcast %43 : vector<4x16x1xf32> to vector<4x16x16xf32>
    %45 = arith.subf %41, %44 : vector<4x16x16xf32>
    %46 = math.exp %45 : vector<4x16x16xf32>
    %cst_15 = arith.constant dense<0.000000e+00> : vector<4x16xf32>
    %47 = vector.multi_reduction <add>, %46, %cst_15 [2] : vector<4x16x16xf32> to vector<4x16xf32>
    %48 = vector.shape_cast %47 : vector<4x16xf32> to vector<4x16x1xf32>
    %49 = tpu.reciprocal %48 {approx = true} : vector<4x16x1xf32> -> vector<4x16x1xf32>
    %50 = vector.broadcast %49 : vector<4x16x1xf32> to vector<4x16x16xf32>
    %51 = arith.mulf %46, %50 : vector<4x16x16xf32>
    %52 = arith.truncf %51 : vector<4x16x16xf32> to vector<4x16x16xbf16>
    "tpu.trace_start"() <{level = 10 : i32, message = "hij,hjd->hid"}> : () -> ()
    %cst_16 = arith.constant dense<0.000000e+00> : vector<4x16x32xf32>
    %53 = tpu.matmul %52, %40, %cst_16 {dimension_numbers = #tpu.dot_dimension_numbers<[2], [1], [1], [2], [0, 0, 0, 1, 1, 2], [0], [0]>} : vector<4x16x16xbf16>, vector<4x16x32xbf16>, vector<4x16x32xf32> -> vector<4x16x32xf32>
    "tpu.trace_stop"() : () -> ()
    %54 = tpu.transpose %53, [1, 0, 2] : vector<4x16x32xf32> -> vector<16x4x32xf32>
    %55 = vector.shape_cast %54 : vector<16x4x32xf32> to vector<16x128xf32>
    %56 = arith.truncf %55 : vector<16x128xf32> to vector<16x128xbf16>
    %c0_17 = arith.constant 0 : index
    %c0_18 = arith.constant 0 : index
    %57 = vector.load %arg5[%c0_17, %c0_18] : memref<128x128xbf16, #tpu.memory_space<vmem>>, vector<128x128xbf16>
    %cst_19 = arith.constant dense<0.000000e+00> : vector<16x128xf32>
    %58 = tpu.matmul %56, %57, %cst_19 {dimension_numbers = #tpu.dot_dimension_numbers<[1], [0], [0], [1], [0, 0, 1, 1], [], []>} : vector<16x128xbf16>, vector<128x128xbf16>, vector<16x128xf32> -> vector<16x128xf32>
    %c0_20 = arith.constant 0 : index
    %c0_21 = arith.constant 0 : index
    %59 = vector.load %arg6[%c0_20, %c0_21] : memref<1x128xf32, #tpu.memory_space<vmem>>, vector<1x128xf32>
    %60 = vector.broadcast %59 : vector<1x128xf32> to vector<16x128xf32>
    %61 = arith.addf %58, %60 : vector<16x128xf32>
    %62 = arith.addf %1, %61 : vector<16x128xf32>
    %c0_22 = arith.constant 0 : index
    %c0_23 = arith.constant 0 : index
    %63 = vector.load %arg7[%c0_22, %c0_23] : memref<1x128xf32, #tpu.memory_space<vmem>>, vector<1x128xf32>
    %c0_24 = arith.constant 0 : index
    %c0_25 = arith.constant 0 : index
    %64 = vector.load %arg8[%c0_24, %c0_25] : memref<1x128xf32, #tpu.memory_space<vmem>>, vector<1x128xf32>
    %cst_26 = arith.constant dense<0.000000e+00> : vector<16xf32>
    %65 = vector.multi_reduction <add>, %62, %cst_26 [1] : vector<16x128xf32> to vector<16xf32>
    %66 = vector.shape_cast %65 : vector<16xf32> to vector<16x1xf32>
    %cst_27 = arith.constant 1.280000e+02 : f32
    %67 = vector.broadcast %cst_27 : f32 to vector<16x1xf32>
    %68 = arith.divf %66, %67 : vector<16x1xf32>
    %69 = vector.broadcast %68 : vector<16x1xf32> to vector<16x128xf32>
    %70 = arith.subf %62, %69 : vector<16x128xf32>
    %71 = arith.mulf %70, %70 : vector<16x128xf32>
    %cst_28 = arith.constant dense<0.000000e+00> : vector<16xf32>
    %72 = vector.multi_reduction <add>, %71, %cst_28 [1] : vector<16x128xf32> to vector<16xf32>
    %73 = vector.shape_cast %72 : vector<16xf32> to vector<16x1xf32>
    %cst_29 = arith.constant 1.280000e+02 : f32
    %74 = vector.broadcast %cst_29 : f32 to vector<16x1xf32>
    %75 = arith.divf %73, %74 : vector<16x1xf32>
    %76 = vector.broadcast %68 : vector<16x1xf32> to vector<16x128xf32>
    %77 = arith.subf %62, %76 : vector<16x128xf32>
    %cst_30 = arith.constant 9.99999974E-6 : f32
    %78 = vector.broadcast %cst_30 : f32 to vector<16x1xf32>
    %79 = arith.addf %75, %78 : vector<16x1xf32>
    %80 = math.rsqrt %79 : vector<16x1xf32>
    %81 = vector.broadcast %80 : vector<16x1xf32> to vector<16x128xf32>
    %82 = arith.mulf %77, %81 : vector<16x128xf32>
    %83 = vector.broadcast %63 : vector<1x128xf32> to vector<16x128xf32>
    %84 = arith.mulf %82, %83 : vector<16x128xf32>
    %85 = vector.broadcast %64 : vector<1x128xf32> to vector<16x128xf32>
    %86 = arith.addf %84, %85 : vector<16x128xf32>
    %87 = arith.truncf %86 : vector<16x128xf32> to vector<16x128xbf16>
    %c0_31 = arith.constant 0 : index
    %c0_32 = arith.constant 0 : index
    %88 = vector.load %arg9[%c0_31, %c0_32] : memref<128x256xbf16, #tpu.memory_space<vmem>>, vector<128x256xbf16>
    %cst_33 = arith.constant dense<0.000000e+00> : vector<16x256xf32>
    %89 = tpu.matmul %87, %88, %cst_33 {dimension_numbers = #tpu.dot_dimension_numbers<[1], [0], [0], [1], [0, 0, 1, 1], [], []>} : vector<16x128xbf16>, vector<128x256xbf16>, vector<16x256xf32> -> vector<16x256xf32>
    %c0_34 = arith.constant 0 : index
    %c0_35 = arith.constant 0 : index
    %90 = vector.load %arg10[%c0_34, %c0_35] : memref<1x256xf32, #tpu.memory_space<vmem>>, vector<1x256xf32>
    %91 = vector.broadcast %90 : vector<1x256xf32> to vector<16x256xf32>
    %92 = arith.addf %89, %91 : vector<16x256xf32>
    %cst_36 = arith.constant 0.000000e+00 : f32
    %93 = vector.broadcast %cst_36 : f32 to vector<16x256xf32>
    %94 = arith.maximumf %92, %93 : vector<16x256xf32>
    %95 = arith.truncf %94 : vector<16x256xf32> to vector<16x256xbf16>
    %c0_37 = arith.constant 0 : index
    %c0_38 = arith.constant 0 : index
    %96 = vector.load %arg11[%c0_37, %c0_38] : memref<256x128xbf16, #tpu.memory_space<vmem>>, vector<256x128xbf16>
    %cst_39 = arith.constant dense<0.000000e+00> : vector<16x128xf32>
    %97 = tpu.matmul %95, %96, %cst_39 {dimension_numbers = #tpu.dot_dimension_numbers<[1], [0], [0], [1], [0, 0, 1, 1], [], []>} : vector<16x256xbf16>, vector<256x128xbf16>, vector<16x128xf32> -> vector<16x128xf32>
    %c0_40 = arith.constant 0 : index
    %c0_41 = arith.constant 0 : index
    %98 = vector.load %arg12[%c0_40, %c0_41] : memref<1x128xf32, #tpu.memory_space<vmem>>, vector<1x128xf32>
    %99 = vector.broadcast %98 : vector<1x128xf32> to vector<16x128xf32>
    %100 = arith.addf %97, %99 : vector<16x128xf32>
    %101 = arith.addf %62, %100 : vector<16x128xf32>
    %c0_42 = arith.constant 0 : index
    %c0_43 = arith.constant 0 : index
    %c0_44 = arith.constant 0 : index
    %102 = vector.load %arg13[%c0_42, %c0_43, %c0_44] : memref<1x16x128xf32, #tpu.memory_space<vmem>>, vector<1x16x128xf32>
    %103 = vector.shape_cast %102 : vector<1x16x128xf32> to vector<16x128xf32>
    %104 = vector.shape_cast %101 : vector<16x128xf32> to vector<1x16x128xf32>
    tpu.vector_store %arg13[%c0_42, %c0_43, %c0_44], %104 {strides = array<i32>} : memref<1x16x128xf32, #tpu.memory_space<vmem>>, vector<1x16x128xf32>,
    return
  }
  func.func @transform_0(%arg0: i32) -> (i32, i32, i32) {
    %c0_i32 = arith.constant 0 : i32
    %c0_i32_0 = arith.constant 0 : i32
    %c0_i32_1 = arith.constant 0 : i32
    return %arg0, %c0_i32, %c0_i32_0 : i32, i32, i32
  }
  func.func @transform_1(%arg0: i32) -> (i32, i32) {
    %c0_i32 = arith.constant 0 : i32
    %c0_i32_0 = arith.constant 0 : i32
    %c0_i32_1 = arith.constant 0 : i32
    return %c0_i32, %c0_i32_0 : i32, i32
  }
  func.func @transform_2(%arg0: i32) -> (i32, i32) {
    %c0_i32 = arith.constant 0 : i32
    %c0_i32_0 = arith.constant 0 : i32
    %c0_i32_1 = arith.constant 0 : i32
    return %c0_i32, %c0_i32_0 : i32, i32
  }
  func.func @transform_3(%arg0: i32) -> (i32, i32) {
    %c0_i32 = arith.constant 0 : i32
    %c0_i32_0 = arith.constant 0 : i32
    %c0_i32_1 = arith.constant 0 : i32
    return %c0_i32, %c0_i32_0 : i32, i32
  }
  func.func @transform_4(%arg0: i32) -> (i32, i32) {
    %c0_i32 = arith.constant 0 : i32
    %c0_i32_0 = arith.constant 0 : i32
    %c0_i32_1 = arith.constant 0 : i32
    return %c0_i32, %c0_i32_0 : i32, i32
  }
  func.func @transform_5(%arg0: i32) -> (i32, i32) {
    %c0_i32 = arith.constant 0 : i32
    %c0_i32_0 = arith.constant 0 : i32
    %c0_i32_1 = arith.constant 0 : i32
    return %c0_i32, %c0_i32_0 : i32, i32
  }
  func.func @transform_6(%arg0: i32) -> (i32, i32) {
    %c0_i32 = arith.constant 0 : i32
    %c0_i32_0 = arith.constant 0 : i32
    %c0_i32_1 = arith.constant 0 : i32
    return %c0_i32, %c0_i32_0 : i32, i32
  }
  func.func @transform_7(%arg0: i32) -> (i32, i32) {
    %c0_i32 = arith.constant 0 : i32
    %c0_i32_0 = arith.constant 0 : i32
    %c0_i32_1 = arith.constant 0 : i32
    return %c0_i32, %c0_i32_0 : i32, i32
  }
  func.func @transform_8(%arg0: i32) -> (i32, i32) {
    %c0_i32 = arith.constant 0 : i32
    %c0_i32_0 = arith.constant 0 : i32
    %c0_i32_1 = arith.constant 0 : i32
    return %c0_i32, %c0_i32_0 : i32, i32
  }
  func.func @transform_9(%arg0: i32) -> (i32, i32) {
    %c0_i32 = arith.constant 0 : i32
    %c0_i32_0 = arith.constant 0 : i32
    %c0_i32_1 = arith.constant 0 : i32
    return %c0_i32, %c0_i32_0 : i32, i32
  }
  func.func @transform_10(%arg0: i32) -> (i32, i32) {
    %c0_i32 = arith.constant 0 : i32
    %c0_i32_0 = arith.constant 0 : i32
    %c0_i32_1 = arith.constant 0 : i32
    return %c0_i32, %c0_i32_0 : i32, i32
  }
  func.func @transform_11(%arg0: i32) -> (i32, i32) {
    %c0_i32 = arith.constant 0 : i32
    %c0_i32_0 = arith.constant 0 : i32
    %c0_i32_1 = arith.constant 0 : i32
    return %c0_i32, %c0_i32_0 : i32, i32
  }
  func.func @transform_12(%arg0: i32) -> (i32, i32, i32) {
    %c0_i32 = arith.constant 0 : i32
    %c0_i32_0 = arith.constant 0 : i32
    %c0_i32_1 = arith.constant 0 : i32
    return %arg0, %c0_i32, %c0_i32_0 : i32, i32, i32
  }
}

module attributes {stable_mosaic.version = 11 : i64} {
  func.func @layer_kernel(%arg0: i32, %arg1: memref<1x16x128xf32, #tpu.memory_space<vmem>>, %arg2: memref<1x128xf32, #tpu.memory_space<vmem>>, %arg3: memref<1x128xf32, #tpu.memory_space<vmem>>, %arg4: memref<128x384xbf16, #tpu.memory_space<vmem>>, %arg5: memref<128x128xbf16, #tpu.memory_space<vmem>>, %arg6: memref<1x128xf32, #tpu.memory_space<vmem>>, %arg7: memref<1x128xf32, #tpu.memory_space<vmem>>, %arg8: memref<1x128xf32, #tpu.memory_space<vmem>>, %arg9: memref<128x256xbf16, #tpu.memory_space<vmem>>, %arg10: memref<1x256xf32, #tpu.memory_space<vmem>>, %arg11: memref<256x128xbf16, #tpu.memory_space<vmem>>, %arg12: memref<1x128xf32, #tpu.memory_space<vmem>>, %arg13: memref<1x16x128xf32, #tpu.memory_space<vmem>>) attributes {dimension_semantics = [#tpu.dimension_semantics<parallel>], iteration_bounds = array<i64: 2>, scalar_prefetch = 0 : i64, scratch_operands = 0 : i64, tpu.core_type = #tpu.core_type<tc>, window_params = [{transform_indices = @transform_0, window_bounds = array<i64: 1, 16, 128>}, {pipeline_mode = #tpu.pipeline_mode<synchronous>, transform_indices = @transform_1, window_bounds = array<i64: 1, 128>}, {pipeline_mode = #tpu.pipeline_mode<synchronous>, transform_indices = @transform_2, window_bounds = array<i64: 1, 128>}, {pipeline_mode = #tpu.pipeline_mode<synchronous>, transform_indices = @transform_3, window_bounds = array<i64: 128, 384>}, {pipeline_mode = #tpu.pipeline_mode<synchronous>, transform_indices = @transform_4, window_bounds = array<i64: 128, 128>}, {pipeline_mode = #tpu.pipeline_mode<synchronous>, transform_indices = @transform_5, window_bounds = array<i64: 1, 128>}, {pipeline_mode = #tpu.pipeline_mode<synchronous>, transform_indices = @transform_6, window_bounds = array<i64: 1, 128>}, {pipeline_mode = #tpu.pipeline_mode<synchronous>, transform_indices = @transform_7, window_bounds = array<i64: 1, 128>}, {pipeline_mode = #tpu.pipeline_mode<synchronous>, transform_indices = @transform_8, window_bounds = array<i64: 128, 256>}, {pipeline_mode = #tpu.pipeline_mode<synchronous>, transform_indices = @transform_9, window_bounds = array<i64: 1, 256>}, {pipeline_mode = #tpu.pipeline_mode<synchronous>, transform_indices = @transform_10, window_bounds = array<i64: 256, 128>}, {pipeline_mode = #tpu.pipeline_mode<synchronous>, transform_indices = @transform_11, window_bounds = array<i64: 1, 128>}, {transform_indices = @transform_12, window_bounds = array<i64: 1, 16, 128>}]} {
    %c0 = arith.constant 0 : index
    %c0_0 = arith.constant 0 : index
    %c0_1 = arith.constant 0 : index
    %0 = vector.load %arg1[%c0, %c0_0, %c0_1] : memref<1x16x128xf32, #tpu.memory_space<vmem>>, vector<1x16x128xf32>
    %1 = vector.shape_cast %0 : vector<1x16x128xf32> to vector<16x128xf32>
    %c0_2 = arith.constant 0 : index
    %c0_3 = arith.constant 0 : index
    %2 = vector.load %arg2[%c0_2, %c0_3] : memref<1x128xf32, #tpu.memory_space<vmem>>, vector<1x128xf32>
    %c0_4 = arith.constant 0 : index
    %c0_5 = arith.constant 0 : index
    %3 = vector.load %arg3[%c0_4, %c0_5] : memref<1x128xf32, #tpu.memory_space<vmem>>, vector<1x128xf32>
    %cst = arith.constant dense<0.000000e+00> : vector<16xf32>
    %4 = vector.multi_reduction <add>, %1, %cst [1] : vector<16x128xf32> to vector<16xf32>
    %5 = vector.shape_cast %4 : vector<16xf32> to vector<16x1xf32>
    %cst_6 = arith.constant 1.280000e+02 : f32
    %6 = vector.broadcast %cst_6 : f32 to vector<16x1xf32>
    %7 = arith.divf %5, %6 : vector<16x1xf32>
    %8 = vector.broadcast %7 : vector<16x1xf32> to vector<16x128xf32>
    %9 = arith.subf %1, %8 : vector<16x128xf32>
    %10 = arith.mulf %9, %9 : vector<16x128xf32>
    %cst_7 = arith.constant dense<0.000000e+00> : vector<16xf32>
    %11 = vector.multi_reduction <add>, %10, %cst_7 [1] : vector<16x128xf32> to vector<16xf32>
    %12 = vector.shape_cast %11 : vector<16xf32> to vector<16x1xf32>
    %cst_8 = arith.constant 1.280000e+02 : f32
    %13 = vector.broadcast %cst_8 : f32 to vector<16x1xf32>
    %14 = arith.divf %12, %13 : vector<16x1xf32>
    %15 = vector.broadcast %7 : vector<16x1xf32> to vector<16x128xf32>
    %16 = arith.subf %1, %15 : vector<16x128xf32>
    %cst_9 = arith.constant 9.99999974E-6 : f32
    %17 = vector.broadcast %cst_9 : f32 to vector<16x1xf32>
    %18 = arith.addf %14, %17 : vector<16x1xf32>
    %19 = math.rsqrt %18 : vector<16x1xf32>
    %20 = vector.broadcast %19 : vector<16x1xf32> to vector<16x128xf32>
    %21 = arith.mulf %16, %20 : vector<16x128xf32>
    %22 = vector.broadcast %2 : vector<1x128xf32> to vector<16x128xf32>
    %23 = arith.mulf %21, %22 : vector<16x128xf32>
    %24 = vector.broadcast %3 : vector<1x128xf32> to vector<16x128xf32>
    %25 = arith.addf %23, %24 : vector<16x128xf32>
    %26 = arith.truncf %25 : vector<16x128xf32> to vector<16x128xbf16>
    %c0_10 = arith.constant 0 : index
    %c0_11 = arith.constant 0 : index
    %27 = vector.load %arg4[%c0_10, %c0_11] : memref<128x384xbf16, #tpu.memory_space<vmem>>, vector<128x384xbf16>
    %cst_12 = arith.constant dense<0.000000e+00> : vector<16x384xf32>
    %28 = tpu.matmul %26, %27, %cst_12 {dimension_numbers = #tpu.dot_dimension_numbers<[1], [0], [0], [1], [0, 0, 1, 1], [], []>} : vector<16x128xbf16>, vector<128x384xbf16>, vector<16x384xf32> -> vector<16x384xf32>
    %29 = vector.extract_strided_slice %28 {offsets = [0, 0], sizes = [16, 128], strides = [1, 1]} : vector<16x384xf32> to vector<16x128xf32>
    %30 = vector.extract_strided_slice %28 {offsets = [0, 128], sizes = [16, 128], strides = [1, 1]} : vector<16x384xf32> to vector<16x128xf32>
    %31 = vector.extract_strided_slice %28 {offsets = [0, 256], sizes = [16, 128], strides = [1, 1]} : vector<16x384xf32> to vector<16x128xf32>
    %32 = vector.shape_cast %29 : vector<16x128xf32> to vector<16x4x32xf32>
    %33 = tpu.transpose %32, [1, 0, 2] : vector<16x4x32xf32> -> vector<4x16x32xf32>
    %34 = arith.truncf %33 : vector<4x16x32xf32> to vector<4x16x32xbf16>
    %35 = vector.shape_cast %30 : vector<16x128xf32> to vector<16x4x32xf32>
    %36 = tpu.transpose %35, [1, 0, 2] : vector<16x4x32xf32> -> vector<4x16x32xf32>
    %37 = arith.truncf %36 : vector<4x16x32xf32> to vector<4x16x32xbf16>
    %38 = vector.shape_cast %31 : vector<16x128xf32> to vector<16x4x32xf32>
    %39 = tpu.transpose %38, [1, 0, 2] : vector<16x4x32xf32> -> vector<4x16x32xf32>
    %40 = arith.truncf %39 : vector<4x16x32xf32> to vector<4x16x32xbf16>
    "tpu.trace_start"() <{level = 10 : i32, message = "hid,hjd->hij"}> : () -> ()
    %cst_13 = arith.constant dense<0.000000e+00> : vector<4x16x16xf32>
    %41 = tpu.matmul %34, %37, %cst_13 {dimension_numbers = #tpu.dot_dimension_numbers<[2], [2], [1], [1], [0, 0, 0, 1, 1, 1], [0], [0]>} : vector<4x16x32xbf16>, vector<4x16x32xbf16>, vector<4x16x16xf32> -> vector<4x16x16xf32>
    "tpu.trace_stop"() : () -> ()
    %cst_14 = arith.constant dense<0xFF800000> : vector<4x16xf32>
    %42 = vector.multi_reduction <maximumf>, %41, %cst_14 [2] : vector<4x16x16xf32> to vector<4x16xf32>
    %43 = vector.shape_cast %42 : vector<4x16xf32> to vector<4x16x1xf32>
    %44 = vector.broadcast %43 : vector<4x16x1xf32> to vector<4x16x16xf32>
    %45 = arith.subf %41, %44 : vector<4x16x16xf32>
    %46 = math.exp %45 : vector<4x16x16xf32>
    %cst_15 = arith.constant dense<0.000000e+00> : vector<4x16xf32>
    %47 = vector.multi_reduction <add>, %46, %cst_15 [2] : vector<4x16x16xf32> to vector<4x16xf32>
    %48 = vector.shape_cast %47 : vector<4x16xf32> to vector<4x16x1xf32>
    %49 = tpu.reciprocal %48 {approx = true} : vector<4x16x1xf32> -> vector<4x16x1xf32>
    %50 = vector.broadcast %49 : vector<4x16x1xf32> to vector<4x16x16xf32>
    %51 = arith.mulf %46, %50 : vector<4x16x16xf32>
    %52 = arith.truncf %51 : vector<4x16x16xf32> to vector<4x16x16xbf16>
    "tpu.trace_start"() <{level = 10 : i32, message = "hij,hjd->hid"}> : () -> ()
    %cst_16 = arith.constant dense<0.000000e+00> : vector<4x16x32xf32>
    %53 = tpu.matmul %52, %40, %cst_16 {dimension_numbers = #tpu.dot_dimension_numbers<[2], [1], [1], [2], [0, 0, 0, 1, 1, 2], [0], [0]>} : vector<4x16x16xbf16>, vector<4x16x32xbf16>, vector<4x16x32xf32> -> vector<4x16x32xf32>
    "tpu.trace_stop"() : () -> ()
    %54 = tpu.transpose %53, [1, 0, 2] : vector<4x16x32xf32> -> vector<16x4x32xf32>
    %55 = vector.shape_cast %54 : vector<16x4x32xf32> to vector<16x128xf32>
    %56 = arith.truncf %55 : vector<16x128xf32> to vector<16x128xbf16>
    %c0_17 = arith.constant 0 : index
    %c0_18 = arith.constant 0 : index
    %57 = vector.load %arg5[%c0_17, %c0_18] : memref<128x128xbf16, #tpu.memory_space<vmem>>, vector<128x128xbf16>
    %cst_19 = arith.constant dense<0.000000e+00> : vector<16x128xf32>
    %58 = tpu.matmul %56, %57, %cst_19 {dimension_numbers = #tpu.dot_dimension_numbers<[1], [0], [0], [1], [0, 0, 1, 1], [], []>} : vector<16x128xbf16>, vector<128x128xbf16>, vector<16x128xf32> -> vector<16x128xf32>
    %c0_20 = arith.constant 0 : index
    %c0_21 = arith.constant 0 : index
    %59 = vector.load %arg6[%c0_20, %c0_21] : memref<1x128xf32, #tpu.memory_space<vmem>>, vector<1x128xf32>
    %60 = vector.broadcast %59 : vector<1x128xf32> to vector<16x128xf32>
    %61 = arith.addf %58, %60 : vector<16x128xf32>
    %62 = arith.addf %1, %61 : vector<16x128xf32>
    %c0_22 = arith.constant 0 : index
    %c0_23 = arith.constant 0 : index
    %63 = vector.load %arg7[%c0_22, %c0_23] : memref<1x128xf32, #tpu.memory_space<vmem>>, vector<1x128xf32>
    %c0_24 = arith.constant 0 : index
    %c0_25 = arith.constant 0 : index
    %64 = vector.load %arg8[%c0_24, %c0_25] : memref<1x128xf32, #tpu.memory_space<vmem>>, vector<1x128xf32>
    %cst_26 = arith.constant dense<0.000000e+00> : vector<16xf32>
    %65 = vector.multi_reduction <add>, %62, %cst_26 [1] : vector<16x128xf32> to vector<16xf32>
    %66 = vector.shape_cast %65 : vector<16xf32> to vector<16x1xf32>
    %cst_27 = arith.constant 1.280000e+02 : f32
    %67 = vector.broadcast %cst_27 : f32 to vector<16x1xf32>
    %68 = arith.divf %66, %67 : vector<16x1xf32>
    %69 = vector.broadcast %68 : vector<16x1xf32> to vector<16x128xf32>
    %70 = arith.subf %62, %69 : vector<16x128xf32>
    %71 = arith.mulf %70, %70 : vector<16x128xf32>
    %cst_28 = arith.constant dense<0.000000e+00> : vector<16xf32>
    %72 = vector.multi_reduction <add>, %71, %cst_28 [1] : vector<16x128xf32> to vector<16xf32>
    %73 = vector.shape_cast %72 : vector<16xf32> to vector<16x1xf32>
    %cst_29 = arith.constant 1.280000e+02 : f32
    %74 = vector.broadcast %cst_29 : f32 to vector<16x1xf32>
    %75 = arith.divf %73, %74 : vector<16x1xf32>
    %76 = vector.broadcast %68 : vector<16x1xf32> to vector<16x128xf32>
    %77 = arith.subf %62, %76 : vector<16x128xf32>
    %cst_30 = arith.constant 9.99999974E-6 : f32
    %78 = vector.broadcast %cst_30 : f32 to vector<16x1xf32>
    %79 = arith.addf %75, %78 : vector<16x1xf32>
    %80 = math.rsqrt %79 : vector<16x1xf32>
    %81 = vector.broadcast %80 : vector<16x1xf32> to vector<16x128xf32>
    %82 = arith.mulf %77, %81 : vector<16x128xf32>
    %83 = vector.broadcast %63 : vector<1x128xf32> to vector<16x128xf32>
    %84 = arith.mulf %82, %83 : vector<16x128xf32>
    %85 = vector.broadcast %64 : vector<1x128xf32> to vector<16x128xf32>
    %86 = arith.addf %84, %85 : vector<16x128xf32>
    %87 = arith.truncf %86 : vector<16x128xf32> to vector<16x128xbf16>
    %c0_31 = arith.constant 0 : index
    %c0_32 = arith.constant 0 : index
    %88 = vector.load %arg9[%c0_31, %c0_32] : memref<128x256xbf16, #tpu.memory_space<vmem>>, vector<128x256xbf16>
    %cst_33 = arith.constant dense<0.000000e+00> : vector<16x256xf32>
    %89 = tpu.matmul %87, %88, %cst_33 {dimension_numbers = #tpu.dot_dimension_numbers<[1], [0], [0], [1], [0, 0, 1, 1], [], []>} : vector<16x128xbf16>, vector<128x256xbf16>, vector<16x256xf32> -> vector<16x256xf32>
    %c0_34 = arith.constant 0 : index
    %c0_35 = arith.constant 0 : index
    %90 = vector.load %arg10[%c0_34, %c0_35] : memref<1x256xf32, #tpu.memory_space<vmem>>, vector<1x256xf32>
    %91 = vector.broadcast %90 : vector<1x256xf32> to vector<16x256xf32>
    %92 = arith.addf %89, %91 : vector<16x256xf32>
    %cst_36 = arith.constant 0.000000e+00 : f32
    %93 = vector.broadcast %cst_36 : f32 to vector<16x256xf32>
    %94 = arith.maximumf %92, %93 : vector<16x256xf32>
    %95 = arith.truncf %94 : vector<16x256xf32> to vector<16x256xbf16>
    %c0_37 = arith.constant 0 : index
    %c0_38 = arith.constant 0 : index
    %96 = vector.load %arg11[%c0_37, %c0_38] : memref<256x128xbf16, #tpu.memory_space<vmem>>, vector<256x128xbf16>
    %cst_39 = arith.constant dense<0.000000e+00> : vector<16x128xf32>
    %97 = tpu.matmul %95, %96, %cst_39 {dimension_numbers = #tpu.dot_dimension_numbers<[1], [0], [0], [1], [0, 0, 1, 1], [], []>} : vector<16x256xbf16>, vector<256x128xbf16>, vector<16x128xf32> -> vector<16x128xf32>
    %c0_40 = arith.constant 0 : index
    %c0_41 = arith.constant 0 : index
    %98 = vector.load %arg12[%c0_40, %c0_41] : memref<1x128xf32, #tpu.memory_space<vmem>>, vector<1x128xf32>
    %99 = vector.broadcast %98 : vector<1x128xf32> to vector<16x128xf32>
    %100 = arith.addf %97, %99 : vector<16x128xf32>
    %101 = arith.addf %62, %100 : vector<16x128xf32>
    %c0_42 = arith.constant 0 : index
    %c0_43 = arith.constant 0 : index
    %c0_44 = arith.constant 0 : index
    %102 = vector.load %arg13[%c0_42, %c0_43, %c0_44] : memref<1x16x128xf32, #tpu.memory_space<vmem>>, vector<1x16x128xf32>
    %103 = vector.shape_cast %102 : vector<1x16x128xf32> to vector<16x128xf32>
    %104 = vector.shape_cast %101 : vector<16x128xf32> to vector<1x16x128xf32>
    tpu.vector_store %arg13[%c0_42, %c0_43, %c0_44], %104 {strides = array<i32>} : memref<1x16x128xf32, #tpu.memory_space<vmem>>, vector<1x16x128xf32>,
    return
  }
  func.func @transform_0(%arg0: i32) -> (i32, i32, i32) {
    %c0_i32 = arith.constant 0 : i32
    %c0_i32_0 = arith.constant 0 : i32
    %c0_i32_1 = arith.constant 0 : i32
    return %arg0, %c0_i32, %c0_i32_0 : i32, i32, i32
  }
  func.func @transform_1(%arg0: i32) -> (i32, i32) {
    %c0_i32 = arith.constant 0 : i32
    %c0_i32_0 = arith.constant 0 : i32
    %c0_i32_1 = arith.constant 0 : i32
    return %c0_i32, %c0_i32_0 : i32, i32
  }
  func.func @transform_2(%arg0: i32) -> (i32, i32) {
    %c0_i32 = arith.constant 0 : i32
    %c0_i32_0 = arith.constant 0 : i32
    %c0_i32_1 = arith.constant 0 : i32
    return %c0_i32, %c0_i32_0 : i32, i32
  }
  func.func @transform_3(%arg0: i32) -> (i32, i32) {
    %c0_i32 = arith.constant 0 : i32
    %c0_i32_0 = arith.constant 0 : i32
    %c0_i32_1 = arith.constant 0 : i32
    return %c0_i32, %c0_i32_0 : i32, i32
  }
  func.func @transform_4(%arg0: i32) -> (i32, i32) {
    %c0_i32 = arith.constant 0 : i32
    %c0_i32_0 = arith.constant 0 : i32
    %c0_i32_1 = arith.constant 0 : i32
    return %c0_i32, %c0_i32_0 : i32, i32
  }
  func.func @transform_5(%arg0: i32) -> (i32, i32) {
    %c0_i32 = arith.constant 0 : i32
    %c0_i32_0 = arith.constant 0 : i32
    %c0_i32_1 = arith.constant 0 : i32
    return %c0_i32, %c0_i32_0 : i32, i32
  }
  func.func @transform_6(%arg0: i32) -> (i32, i32) {
    %c0_i32 = arith.constant 0 : i32
    %c0_i32_0 = arith.constant 0 : i32
    %c0_i32_1 = arith.constant 0 : i32
    return %c0_i32, %c0_i32_0 : i32, i32
  }
  func.func @transform_7(%arg0: i32) -> (i32, i32) {
    %c0_i32 = arith.constant 0 : i32
    %c0_i32_0 = arith.constant 0 : i32
    %c0_i32_1 = arith.constant 0 : i32
    return %c0_i32, %c0_i32_0 : i32, i32
  }
  func.func @transform_8(%arg0: i32) -> (i32, i32) {
    %c0_i32 = arith.constant 0 : i32
    %c0_i32_0 = arith.constant 0 : i32
    %c0_i32_1 = arith.constant 0 : i32
    return %c0_i32, %c0_i32_0 : i32, i32
  }
  func.func @transform_9(%arg0: i32) -> (i32, i32) {
    %c0_i32 = arith.constant 0 : i32
    %c0_i32_0 = arith.constant 0 : i32
    %c0_i32_1 = arith.constant 0 : i32
    return %c0_i32, %c0_i32_0 : i32, i32
  }
  func.func @transform_10(%arg0: i32) -> (i32, i32) {
    %c0_i32 = arith.constant 0 : i32
    %c0_i32_0 = arith.constant 0 : i32
    %c0_i32_1 = arith.constant 0 : i32
    return %c0_i32, %c0_i32_0 : i32, i32
  }
  func.func @transform_11(%arg0: i32) -> (i32, i32) {
    %c0_i32 = arith.constant 0 : i32
    %c0_i32_0 = arith.constant 0 : i32
    %c0_i32_1 = arith.constant 0 : i32
    return %c0_i32, %c0_i32_0 : i32, i32
  }
  func.func @transform_12(%arg0: i32) -> (i32, i32, i32) {
    %c0_i32 = arith.constant 0 : i32
    %c0_i32_0 = arith.constant 0 : i32
    %c0_i32_1 = arith.constant 0 : i32
    return %arg0, %c0_i32, %c0_i32_0 : i32, i32, i32
  }
}

</mosaic_0001>

<llo_original>
// kernel: tpu_custom_call.1
$region0: #{tpu_custom_call.1}
  #allocation0 [shape = 'u32[]', space=smem, size = 0x4, offset = 0x4, fixed_abs, tag = 'smem constant byte address 0x4 - core index']
  #allocation1 [shape = 'u32[72,128]{1,0:T(1,128)}', space=vmem, size = 0x9000, scoped, tag = 'internal scratch']
  %s0 = inlined_call_operand.hbm [shape: f32[8,128], index: 0, kind: input, shape index: {}]
  %s1 = inlined_call_operand.hbm [shape: f32[8,128], index: 1, kind: output, shape index: {}]
  %s2 = sld [smem:[#allocation0]]
  $region41: #{tpu_custom_call.1} parent=0
    _
  %s4 = ssub.s32 1, %s2
  %s5 = scalar_select 0, %s4, %s2
  $region1: #{tpu_custom_call.1} parent=0
    #allocation2 [shape = 'u8[4096]{0}', space=vmem, size = 0x1000, scoped, tag = 'input window, operand 0, single buffered']
    #allocation3 [shape = 's32[2]{0}', space=sflag, size = 0x8, scoped, tag = 'scoped memory for tpu_custom_call.1']
    #allocation4 [shape = 's32[2]{0}', space=sflag, size = 0x8, scoped, tag = 'scoped memory for tpu_custom_call.1']
    #allocation5 [shape = 'u8[4096]{0}', space=vmem, size = 0x1000, scoped, tag = 'output window, operand 0, single buffered']
    %6 = vsyncpa [#allocation3], 0
    %7 = vsyncpa [#allocation4], 0
    loop: start=0, step=1, limit=4
    $region2: #{tpu_custom_call.1} parent=1 // loop_pre_header
      _
    $region3: #{tpu_custom_call.1} parent=1 // loop_header
      %s9 = sphi 0, %s13
      %p10 = scmp.ge.s32.totalorder %s9, 4
      %s17 = sphi 0, %s17
      %s19 = sphi 0, %s17
      %s20 = sphi 0, %s19
      %s34 = sphi 0, %s20
      %s38 = sphi 0, %s38
      %s40 = sphi 0, %s38
      %s41 = sphi 0, %s40
      %s55 = sphi 0, %s41
    $region4: #{tpu_custom_call.1} parent=1 // loop_header_branch
      %12 = sbr.rel (%p10) target = $region8
    $region5: #{tpu_custom_call.1} parent=1 // loop_body
      %s14 = ssub.s32 %s9, 1
      %s15 = ssub.s32 %s9, 2
      %s16 = sadd.s32 %s9, 1
      %s18 = sadd.s32 %s17, 1
      %p21 = scmp.eq.s32.totalorder %s9, 1
      %p22 = scmp.ne.s32.totalorder %s17, %s19
      %p23 = scmp.eq.s32.totalorder %s9, 0
      %p24 = por %p22, %p23
      %p25 = scmp.ne.s32.totalorder %s17, %s19
      %p26 = scmp.eq.s32.totalorder %s14, 1
      %p27 = por %p25, %p26
      %p28 = scmp.ne.s32.totalorder %s19, %s20
      %p29 = scmp.eq.s32.totalorder %s14, 0
      %p30 = por %p28, %p29
      %p31 = scmp.ne.s32.totalorder %s19, %s20
      %p32 = scmp.eq.s32.totalorder %s15, 1
      %p33 = por %p31, %p32
      %p35 = scmp.ne.s32.totalorder %s20, %s34
      %p36 = scmp.eq.s32.totalorder %s15, 0
      %p37 = por %p35, %p36
      %s39 = sadd.s32 %s38, 1
      %p42 = scmp.eq.s32.totalorder %s9, 1
      %p43 = scmp.ne.s32.totalorder %s38, %s40
      %p44 = scmp.eq.s32.totalorder %s9, 0
      %p45 = por %p43, %p44
      %p46 = scmp.ne.s32.totalorder %s38, %s40
      %p47 = scmp.eq.s32.totalorder %s14, 1
      %p48 = por %p46, %p47
      %p49 = scmp.ne.s32.totalorder %s40, %s41
      %p50 = scmp.eq.s32.totalorder %s14, 0
      %p51 = por %p49, %p50
      %p52 = scmp.ne.s32.totalorder %s40, %s41
      %p53 = scmp.eq.s32.totalorder %s15, 1
      %p54 = por %p52, %p53
      %p56 = scmp.ne.s32.totalorder %s41, %s55
      %p57 = scmp.eq.s32.totalorder %s15, 0
      %p58 = por %p56, %p57
      %p59 = scmp.le.s32.totalorder 1, %s9
      %p60 = scmp.lt.s32.totalorder %s9, 3
      %p61 = pnand %p59, %p60
      %p62 = pneg %p61
      // Predicated region
      $region9: #{tpu_custom_call.1} parent=5 // pred_check
        _
      $region10: #{tpu_custom_call.1} parent=5 // pred_check_branch
        %64 = sbr.rel (%p61) target = $region12
      $region11: #{tpu_custom_call.1} parent=5 // pred_region
        %s65 = ssub.s32 %s9, 1
        // Predicated region
        $region13: #{tpu_custom_call.1} parent=11 // pred_check
          %p66 = pneg %p30
        $region14: #{tpu_custom_call.1} parent=11 // pred_check_branch
          %68 = sbr.rel (%p66) target = $region16
        $region15: #{tpu_custom_call.1} parent=11 // pred_region
          %70 = vsyncadd [#allocation3], 0
          %s72 = sshll.u32 %s0, 4
          %s73 = int_to_ptr.hbm [resolvable:$true] %s72
          %s74 = sshll.u32 [#allocation2], 4
          %s75 = int_to_ptr.vmem [resolvable:$true] %s74
          %77 = dma.hbm_to_vmem [thread:$0]  %s73, 128, %s75, [#allocation3]
        $region16: #{tpu_custom_call.1} parent=11 // pred_fallthru
          _
      $region12: #{tpu_custom_call.1} parent=5 // pred_fallthru
        _
      %p78 = scmp.lt.s32.totalorder %s9, 2
      // Predicated region
      $region17: #{tpu_custom_call.1} parent=5 // pred_check
        %p79 = pneg %p78
      $region18: #{tpu_custom_call.1} parent=5 // pred_check_branch
        %81 = sbr.rel (%p79) target = $region20
      $region19: #{tpu_custom_call.1} parent=5 // pred_region
        _
      $region20: #{tpu_custom_call.1} parent=5 // pred_fallthru
        _
      %p82 = scmp.le.s32.totalorder 1, %s9
      %p83 = scmp.lt.s32.totalorder %s9, 3
      %p84 = pnand %p82, %p83
      %p85 = pneg %p84
      // Predicated region
      $region21: #{tpu_custom_call.1} parent=5 // pred_check
        _
      $region22: #{tpu_custom_call.1} parent=5 // pred_check_branch
        %87 = sbr.rel (%p84) target = $region24
      $region23: #{tpu_custom_call.1} parent=5 // pred_region
        %s88 = ssub.s32 %s9, 1
        // Predicated region
        $region25: #{tpu_custom_call.1} parent=23 // pred_check
          %p89 = pneg %p30
        $region26: #{tpu_custom_call.1} parent=23 // pred_check_branch
          %91 = sbr.rel (%p89) target = $region28
        $region27: #{tpu_custom_call.1} parent=23 // pred_region
          %93 = dma.done [#allocation3], 128
        $region28: #{tpu_custom_call.1} parent=23 // pred_fallthru
          _
        %p94 = pneg %p30
        %p95 = pneg %p27
        %p96 = pneg %p51
        %p97 = pneg %p48
        %v98 = vld [vmem:[#allocation2] sm:$0xff]
        %v99 = vadd.f32 %v98, 1.0
        %100 = vst [vmem:[#allocation5] sm:$0xff] %v99
        // Predicated region
        $region29: #{tpu_custom_call.1} parent=23 // pred_check
          %p101 = pneg %p48
        $region30: #{tpu_custom_call.1} parent=23 // pred_check_branch
          %103 = sbr.rel (%p101) target = $region32
        $region31: #{tpu_custom_call.1} parent=23 // pred_region
          %105 = vsyncadd [#allocation4], 0
          %s107 = sshll.u32 [#allocation5], 4
          %s108 = int_to_ptr.vmem [resolvable:$true] %s107
          %s109 = sshll.u32 %s1, 4
          %s110 = int_to_ptr.hbm [resolvable:$true] %s109
          %112 = dma.vmem_to_hbm [thread:$0]  %s108, 128, %s110, [#allocation4]
        $region32: #{tpu_custom_call.1} parent=23 // pred_fallthru
          _
        // Predicated region
        $region33: #{tpu_custom_call.1} parent=23 // pred_check
          %p113 = pneg %p48
        $region34: #{tpu_custom_call.1} parent=23 // pred_check_branch
          %115 = sbr.rel (%p113) target = $region36
        $region35: #{tpu_custom_call.1} parent=23 // pred_region
          %117 = dma.done [#allocation4], 128
        $region36: #{tpu_custom_call.1} parent=23 // pred_fallthru
          _
      $region24: #{tpu_custom_call.1} parent=5 // pred_fallthru
        _
      %p118 = scmp.le.s32.totalorder 2, %s9
      // Predicated region
      $region37: #{tpu_custom_call.1} parent=5 // pred_check
        %p119 = pneg %p118
      $region38: #{tpu_custom_call.1} parent=5 // pred_check_branch
        %121 = sbr.rel (%p119) target = $region40
      $region39: #{tpu_custom_call.1} parent=5 // pred_region
        %s122 = ssub.s32 %s9, 2
      $region40: #{tpu_custom_call.1} parent=5 // pred_fallthru
        _
    $region6: #{tpu_custom_call.1} parent=1 // loop_footer
      %s13 = sadd.s32 1, %s9
    $region7: #{tpu_custom_call.1} parent=1 // loop_footer_branch
      %8 = sbr.rel target = $region3
    $region8: #{tpu_custom_call.1} parent=1 // loop_exit
      _
    %123 = vsyncpa [#allocation3], 1
    %s124 = scalar_lea.sflag [#allocation3], 1
    %125 = vsyncpa %s124, 1
    %126 = vsyncpa [#allocation4], 1
    %s127 = scalar_lea.sflag [#allocation4], 1
    %128 = vsyncpa %s127, 1

// kernel: transformer_forward.2
$region0: #{transformer_forward.2}
  #allocation0 [shape = 'u32[]', space=smem, size = 0x4, offset = 0x4, fixed_abs, tag = 'smem constant byte address 0x4 - core index']
  #allocation1 [shape = 'u32[72,128]{1,0:T(1,128)}', space=vmem, size = 0x9000, scoped, tag = 'internal scratch']
  %s0 = inlined_call_operand.hbm [shape: f32[2,16,128], index: 0, kind: input, shape index: {}]
  %s1 = inlined_call_operand.vmem [shape: f32[1,128], index: 1, kind: input, shape index: {}]
  %s2 = inlined_call_operand.vmem [shape: f32[1,128], index: 2, kind: input, shape index: {}]
  %s3 = inlined_call_operand.hbm [shape: bf16[128,384], index: 3, kind: input, shape index: {}]
  %s4 = inlined_call_operand.hbm [shape: bf16[128,128], index: 4, kind: input, shape index: {}]
  %s5 = inlined_call_operand.hbm [shape: f32[1,128], index: 5, kind: input, shape index: {}]
  %s6 = inlined_call_operand.vmem [shape: f32[1,128], index: 6, kind: input, shape index: {}]
  %s7 = inlined_call_operand.vmem [shape: f32[1,128], index: 7, kind: input, shape index: {}]
  %s8 = inlined_call_operand.hbm [shape: bf16[128,256], index: 8, kind: input, shape index: {}]
  %s9 = inlined_call_operand.hbm [shape: f32[1,256], index: 9, kind: input, shape index: {}]
  %s10 = inlined_call_operand.hbm [shape: bf16[256,128], index: 10, kind: input, shape index: {}]
  %s11 = inlined_call_operand.hbm [shape: f32[1,128], index: 11, kind: input, shape index: {}]
  %s12 = inlined_call_operand.vmem [shape: f32[2,16,128], index: 12, kind: output, shape index: {}]
  %s13 = sld [smem:[#allocation0]]
  $region113: #{transformer_forward.2} parent=0
    _
  %s15 = ssub.s32 1, %s13
  %s16 = scalar_select 0, %s15, %s13
  $region1: #{transformer_forward.2} parent=0
    #allocation2 [shape = 'u8[16384]{0}', space=vmem, size = 0x4000, scoped, tag = 'input window, operand 0']
    #allocation3 [shape = 's32[2]{0}', space=sflag, size = 0x8, scoped, tag = 'scoped memory for transformer_forward.2']
    #allocation4 [shape = 'u8[98304]{0}', space=vmem, size = 0x18000, scoped, tag = 'input window, operand 3, single buffered']
    #allocation5 [shape = 's32[1]{0}', space=sflag, size = 0x4, scoped, tag = 'scoped memory for transformer_forward.2']
    #allocation6 [shape = 'u8[32768]{0}', space=vmem, size = 0x8000, scoped, tag = 'input window, operand 4, single buffered']
    #allocation7 [shape = 'u8[512]{0}', space=vmem, size = 0x400, scoped, tag = 'input window, operand 5, single buffered']
    #allocation8 [shape = 's32[1]{0}', space=sflag, size = 0x4, scoped, tag = 'scoped memory for transformer_forward.2']
    #allocation9 [shape = 'u8[65536]{0}', space=vmem, size = 0x10000, scoped, tag = 'input window, operand 8, single buffered']
    #allocation10 [shape = 'u8[1024]{0}', space=vmem, size = 0x400, scoped, tag = 'input window, operand 9, single buffered']
    #allocation11 [shape = 's32[1]{0}', space=sflag, size = 0x4, scoped, tag = 'scoped memory for transformer_forward.2']
    #allocation12 [shape = 'u8[65536]{0}', space=vmem, size = 0x10000, scoped, tag = 'input window, operand 10, single buffered']
    #allocation13 [shape = 'u8[512]{0}', space=vmem, size = 0x400, scoped, tag = 'input window, operand 11, single buffered']
    #allocation14 [shape = 's32[1]{0}', space=sflag, size = 0x4, scoped, tag = 'scoped memory for transformer_forward.2']
    %17 = vsyncpa [#allocation3], 0
    %s18 = scalar_lea.sflag [#allocation3], 1
    %19 = vsyncpa %s18, 0
    %20 = vsyncpa [#allocation5], 0
    %21 = vsyncpa [#allocation8], 0
    %22 = vsyncpa [#allocation11], 0
    %23 = vsyncpa [#allocation14], 0
    loop: start=0, step=1, limit=4
    $region2: #{transformer_forward.2} parent=1 // loop_pre_header
      _
    $region3: #{transformer_forward.2} parent=1 // loop_header
      %s25 = sphi 0, %s29
      %p26 = scmp.ge.s32.totalorder %s25, 4
      %s35 = sphi 0, %s37
      %s38 = sphi 0, %s35
      %s39 = sphi 0, %s38
      %s55 = sphi 0, %s39
      %s59 = sphi 0, %s59
      %s61 = sphi 0, %s59
      %s62 = sphi 0, %s61
      %s76 = sphi 0, %s62
      %s80 = sphi 0, %s80
      %s82 = sphi 0, %s80
      %s83 = sphi 0, %s82
      %s97 = sphi 0, %s83
      %s101 = sphi 0, %s101
      %s103 = sphi 0, %s101
      %s104 = sphi 0, %s103
      %s118 = sphi 0, %s104
      %s122 = sphi 0, %s122
      %s124 = sphi 0, %s122
      %s125 = sphi 0, %s124
      %s139 = sphi 0, %s125
      %s143 = sphi 0, %s143
      %s145 = sphi 0, %s143
      %s146 = sphi 0, %s145
      %s160 = sphi 0, %s146
      %s164 = sphi 0, %s164
      %s166 = sphi 0, %s164
      %s167 = sphi 0, %s166
      %s181 = sphi 0, %s167
      %s185 = sphi 0, %s185
      %s187 = sphi 0, %s185
      %s188 = sphi 0, %s187
      %s202 = sphi 0, %s188
      %s206 = sphi 0, %s206
      %s208 = sphi 0, %s206
      %s209 = sphi 0, %s208
      %s223 = sphi 0, %s209
      %s227 = sphi 0, %s227
      %s229 = sphi 0, %s227
      %s230 = sphi 0, %s229
      %s244 = sphi 0, %s230
      %s248 = sphi 0, %s248
      %s250 = sphi 0, %s248
      %s251 = sphi 0, %s250
      %s265 = sphi 0, %s251
      %s269 = sphi 0, %s269
      %s271 = sphi 0, %s269
      %s272 = sphi 0, %s271
      %s286 = sphi 0, %s272
      %s292 = sphi 0, %s294
      %s295 = sphi 0, %s292
      %s296 = sphi 0, %s295
      %s312 = sphi 0, %s296
    $region4: #{transformer_forward.2} parent=1 // loop_header_branch
      %28 = sbr.rel (%p26) target = $region8
    $region5: #{transformer_forward.2} parent=1 // loop_body
      %s30 = ssub.s32 %s25, 1
      %s31 = ssub.s32 %s25, 2
      %s32 = sadd.s32 %s25, 1
      %s33 = ssub.s32 %s25, %s32
      %p34 = scmp.eq.s32.totalorder %s33, 0
      %s36 = sadd.s32 %s35, 1
      %s37 = scalar_select %p34, %s35, %s36
      %p40 = pneg %p34
      %p41 = scmp.eq.s32.totalorder %s25, 1
      %p42 = por %p40, %p41
      %p43 = scmp.ne.s32.totalorder %s35, %s38
      %p44 = scmp.eq.s32.totalorder %s25, 0
      %p45 = por %p43, %p44
      %p46 = scmp.ne.s32.totalorder %s35, %s38
      %p47 = scmp.eq.s32.totalorder %s30, 1
      %p48 = por %p46, %p47
      %p49 = scmp.ne.s32.totalorder %s38, %s39
      %p50 = scmp.eq.s32.totalorder %s30, 0
      %p51 = por %p49, %p50
      %p52 = scmp.ne.s32.totalorder %s38, %s39
      %p53 = scmp.eq.s32.totalorder %s31, 1
      %p54 = por %p52, %p53
      %p56 = scmp.ne.s32.totalorder %s39, %s55
      %p57 = scmp.eq.s32.totalorder %s31, 0
      %p58 = por %p56, %p57
      %s60 = sadd.s32 %s59, 1
      %p63 = scmp.eq.s32.totalorder %s25, 1
      %p64 = scmp.ne.s32.totalorder %s59, %s61
      %p65 = scmp.eq.s32.totalorder %s25, 0
      %p66 = por %p64, %p65
      %p67 = scmp.ne.s32.totalorder %s59, %s61
      %p68 = scmp.eq.s32.totalorder %s30, 1
      %p69 = por %p67, %p68
      %p70 = scmp.ne.s32.totalorder %s61, %s62
      %p71 = scmp.eq.s32.totalorder %s30, 0
      %p72 = por %p70, %p71
      %p73 = scmp.ne.s32.totalorder %s61, %s62
      %p74 = scmp.eq.s32.totalorder %s31, 1
      %p75 = por %p73, %p74
      %p77 = scmp.ne.s32.totalorder %s62, %s76
      %p78 = scmp.eq.s32.totalorder %s31, 0
      %p79 = por %p77, %p78
      %s81 = sadd.s32 %s80, 1
      %p84 = scmp.eq.s32.totalorder %s25, 1
      %p85 = scmp.ne.s32.totalorder %s80, %s82
      %p86 = scmp.eq.s32.totalorder %s25, 0
      %p87 = por %p85, %p86
      %p88 = scmp.ne.s32.totalorder %s80, %s82
      %p89 = scmp.eq.s32.totalorder %s30, 1
      %p90 = por %p88, %p89
      %p91 = scmp.ne.s32.totalorder %s82, %s83
      %p92 = scmp.eq.s32.totalorder %s30, 0
      %p93 = por %p91, %p92
      %p94 = scmp.ne.s32.totalorder %s82, %s83
      %p95 = scmp.eq.s32.totalorder %s31, 1
      %p96 = por %p94, %p95
      %p98 = scmp.ne.s32.totalorder %s83, %s97
      %p99 = scmp.eq.s32.totalorder %s31, 0
      %p100 = por %p98, %p99
      %s102 = sadd.s32 %s101, 1
      %p105 = scmp.eq.s32.totalorder %s25, 1
      %p106 = scmp.ne.s32.totalorder %s101, %s103
      %p107 = scmp.eq.s32.totalorder %s25, 0
      %p108 = por %p106, %p107
      %p109 = scmp.ne.s32.totalorder %s101, %s103
      %p110 = scmp.eq.s32.totalorder %s30, 1
      %p111 = por %p109, %p110
      %p112 = scmp.ne.s32.totalorder %s103, %s104
      %p113 = scmp.eq.s32.totalorder %s30, 0
      %p114 = por %p112, %p113
      %p115 = scmp.ne.s32.totalorder %s103, %s104
      %p116 = scmp.eq.s32.totalorder %s31, 1
      %p117 = por %p115, %p116
      %p119 = scmp.ne.s32.totalorder %s104, %s118
      %p120 = scmp.eq.s32.totalorder %s31, 0
      %p121 = por %p119, %p120
      %s123 = sadd.s32 %s122, 1
      %p126 = scmp.eq.s32.totalorder %s25, 1
      %p127 = scmp.ne.s32.totalorder %s122, %s124
      %p128 = scmp.eq.s32.totalorder %s25, 0
      %p129 = por %p127, %p128
      %p130 = scmp.ne.s32.totalorder %s122, %s124
      %p131 = scmp.eq.s32.totalorder %s30, 1
      %p132 = por %p130, %p131
      %p133 = scmp.ne.s32.totalorder %s124, %s125
      %p134 = scmp.eq.s32.totalorder %s30, 0
      %p135 = por %p133, %p134
      %p136 = scmp.ne.s32.totalorder %s124, %s125
      %p137 = scmp.eq.s32.totalorder %s31, 1
      %p138 = por %p136, %p137
      %p140 = scmp.ne.s32.totalorder %s125, %s139
      %p141 = scmp.eq.s32.totalorder %s31, 0
      %p142 = por %p140, %p141
      %s144 = sadd.s32 %s143, 1
      %p147 = scmp.eq.s32.totalorder %s25, 1
      %p148 = scmp.ne.s32.totalorder %s143, %s145
      %p149 = scmp.eq.s32.totalorder %s25, 0
      %p150 = por %p148, %p149
      %p151 = scmp.ne.s32.totalorder %s143, %s145
      %p152 = scmp.eq.s32.totalorder %s30, 1
      %p153 = por %p151, %p152
      %p154 = scmp.ne.s32.totalorder %s145, %s146
      %p155 = scmp.eq.s32.totalorder %s30, 0
      %p156 = por %p154, %p155
      %p157 = scmp.ne.s32.totalorder %s145, %s146
      %p158 = scmp.eq.s32.totalorder %s31, 1
      %p159 = por %p157, %p158
      %p161 = scmp.ne.s32.totalorder %s146, %s160
      %p162 = scmp.eq.s32.totalorder %s31, 0
      %p163 = por %p161, %p162
      %s165 = sadd.s32 %s164, 1
      %p168 = scmp.eq.s32.totalorder %s25, 1
      %p169 = scmp.ne.s32.totalorder %s164, %s166
      %p170 = scmp.eq.s32.totalorder %s25, 0
      %p171 = por %p169, %p170
      %p172 = scmp.ne.s32.totalorder %s164, %s166
      %p173 = scmp.eq.s32.totalorder %s30, 1
      %p174 = por %p172, %p173
      %p175 = scmp.ne.s32.totalorder %s166, %s167
      %p176 = scmp.eq.s32.totalorder %s30, 0
      %p177 = por %p175, %p176
      %p178 = scmp.ne.s32.totalorder %s166, %s167
      %p179 = scmp.eq.s32.totalorder %s31, 1
      %p180 = por %p178, %p179
      %p182 = scmp.ne.s32.totalorder %s167, %s181
      %p183 = scmp.eq.s32.totalorder %s31, 0
      %p184 = por %p182, %p183
      %s186 = sadd.s32 %s185, 1
      %p189 = scmp.eq.s32.totalorder %s25, 1
      %p190 = scmp.ne.s32.totalorder %s185, %s187
      %p191 = scmp.eq.s32.totalorder %s25, 0
      %p192 = por %p190, %p191
      %p193 = scmp.ne.s32.totalorder %s185, %s187
      %p194 = scmp.eq.s32.totalorder %s30, 1
      %p195 = por %p193, %p194
      %p196 = scmp.ne.s32.totalorder %s187, %s188
      %p197 = scmp.eq.s32.totalorder %s30, 0
      %p198 = por %p196, %p197
      %p199 = scmp.ne.s32.totalorder %s187, %s188
      %p200 = scmp.eq.s32.totalorder %s31, 1
      %p201 = por %p199, %p200
      %p203 = scmp.ne.s32.totalorder %s188, %s202
      %p204 = scmp.eq.s32.totalorder %s31, 0
      %p205 = por %p203, %p204
      %s207 = sadd.s32 %s206, 1
      %p210 = scmp.eq.s32.totalorder %s25, 1
      %p211 = scmp.ne.s32.totalorder %s206, %s208
      %p212 = scmp.eq.s32.totalorder %s25, 0
      %p213 = por %p211, %p212
      %p214 = scmp.ne.s32.totalorder %s206, %s208
      %p215 = scmp.eq.s32.totalorder %s30, 1
      %p216 = por %p214, %p215
      %p217 = scmp.ne.s32.totalorder %s208, %s209
      %p218 = scmp.eq.s32.totalorder %s30, 0
      %p219 = por %p217, %p218
      %p220 = scmp.ne.s32.totalorder %s208, %s209
      %p221 = scmp.eq.s32.totalorder %s31, 1
      %p222 = por %p220, %p221
      %p224 = scmp.ne.s32.totalorder %s209, %s223
      %p225 = scmp.eq.s32.totalorder %s31, 0
      %p226 = por %p224, %p225
      %s228 = sadd.s32 %s227, 1
      %p231 = scmp.eq.s32.totalorder %s25, 1
      %p232 = scmp.ne.s32.totalorder %s227, %s229
      %p233 = scmp.eq.s32.totalorder %s25, 0
      %p234 = por %p232, %p233
      %p235 = scmp.ne.s32.totalorder %s227, %s229
      %p236 = scmp.eq.s32.totalorder %s30, 1
      %p237 = por %p235, %p236
      %p238 = scmp.ne.s32.totalorder %s229, %s230
      %p239 = scmp.eq.s32.totalorder %s30, 0
      %p240 = por %p238, %p239
      %p241 = scmp.ne.s32.totalorder %s229, %s230
      %p242 = scmp.eq.s32.totalorder %s31, 1
      %p243 = por %p241, %p242
      %p245 = scmp.ne.s32.totalorder %s230, %s244
      %p246 = scmp.eq.s32.totalorder %s31, 0
      %p247 = por %p245, %p246
      %s249 = sadd.s32 %s248, 1
      %p252 = scmp.eq.s32.totalorder %s25, 1
      %p253 = scmp.ne.s32.totalorder %s248, %s250
      %p254 = scmp.eq.s32.totalorder %s25, 0
      %p255 = por %p253, %p254
      %p256 = scmp.ne.s32.totalorder %s248, %s250
      %p257 = scmp.eq.s32.totalorder %s30, 1
      %p258 = por %p256, %p257
      %p259 = scmp.ne.s32.totalorder %s250, %s251
      %p260 = scmp.eq.s32.totalorder %s30, 0
      %p261 = por %p259, %p260
      %p262 = scmp.ne.s32.totalorder %s250, %s251
      %p263 = scmp.eq.s32.totalorder %s31, 1
      %p264 = por %p262, %p263
      %p266 = scmp.ne.s32.totalorder %s251, %s265
      %p267 = scmp.eq.s32.totalorder %s31, 0
      %p268 = por %p266, %p267
      %s270 = sadd.s32 %s269, 1
      %p273 = scmp.eq.s32.totalorder %s25, 1
      %p274 = scmp.ne.s32.totalorder %s269, %s271
      %p275 = scmp.eq.s32.totalorder %s25, 0
      %p276 = por %p274, %p275
      %p277 = scmp.ne.s32.totalorder %s269, %s271
      %p278 = scmp.eq.s32.totalorder %s30, 1
      %p279 = por %p277, %p278
      %p280 = scmp.ne.s32.totalorder %s271, %s272
      %p281 = scmp.eq.s32.totalorder %s30, 0
      %p282 = por %p280, %p281
      %p283 = scmp.ne.s32.totalorder %s271, %s272
      %p284 = scmp.eq.s32.totalorder %s31, 1
      %p285 = por %p283, %p284
      %p287 = scmp.ne.s32.totalorder %s272, %s286
      %p288 = scmp.eq.s32.totalorder %s31, 0
      %p289 = por %p287, %p288
      %s290 = ssub.s32 %s25, %s32
      %p291 = scmp.eq.s32.totalorder %s290, 0
      %s293 = sadd.s32 %s292, 1
      %s294 = scalar_select %p291, %s292, %s293
      %p297 = pneg %p291
      %p298 = scmp.eq.s32.totalorder %s25, 1
      %p299 = por %p297, %p298
      %p300 = scmp.ne.s32.totalorder %s292, %s295
      %p301 = scmp.eq.s32.totalorder %s25, 0
      %p302 = por %p300, %p301
      %p303 = scmp.ne.s32.totalorder %s292, %s295
      %p304 = scmp.eq.s32.totalorder %s30, 1
      %p305 = por %p303, %p304
      %p306 = scmp.ne.s32.totalorder %s295, %s296
      %p307 = scmp.eq.s32.totalorder %s30, 0
      %p308 = por %p306, %p307
      %p309 = scmp.ne.s32.totalorder %s295, %s296
      %p310 = scmp.eq.s32.totalorder %s31, 1
      %p311 = por %p309, %p310
      %p313 = scmp.ne.s32.totalorder %s296, %s312
      %p314 = scmp.eq.s32.totalorder %s31, 0
      %p315 = por %p313, %p314
      %p316 = scmp.le.s32.totalorder 1, %s25
      %p317 = scmp.lt.s32.totalorder %s25, 3
      %p318 = pnand %p316, %p317
      %p319 = pneg %p318
      // Predicated region
      $region9: #{transformer_forward.2} parent=5 // pred_check
        _
      $region10: #{transformer_forward.2} parent=5 // pred_check_branch
        %321 = sbr.rel (%p318) target = $region12
      $region11: #{transformer_forward.2} parent=5 // pred_region
        %s322 = ssub.s32 %s25, 1
        // Predicated region
        $region13: #{transformer_forward.2} parent=11 // pred_check
          %p323 = pneg %p72
        $region14: #{transformer_forward.2} parent=11 // pred_check_branch
          %325 = sbr.rel (%p323) target = $region16
        $region15: #{transformer_forward.2} parent=11 // pred_region
          _
        $region16: #{transformer_forward.2} parent=11 // pred_fallthru
          _
        // Predicated region
        $region17: #{transformer_forward.2} parent=11 // pred_check
          %p326 = pneg %p93
        $region18: #{transformer_forward.2} parent=11 // pred_check_branch
          %328 = sbr.rel (%p326) target = $region20
        $region19: #{transformer_forward.2} parent=11 // pred_region
          _
        $region20: #{transformer_forward.2} parent=11 // pred_fallthru
          _
        // Predicated region
        $region21: #{transformer_forward.2} parent=11 // pred_check
          %p329 = pneg %p114
        $region22: #{transformer_forward.2} parent=11 // pred_check_branch
          %331 = sbr.rel (%p329) target = $region24
        $region23: #{transformer_forward.2} parent=11 // pred_region
          %333 = vsyncadd [#allocation5], 0
          %s334 = sshll.u32 %s3, 4
          %s335 = int_to_ptr.hbm [resolvable:$true] %s334
          %s336 = sshll.u32 [#allocation4], 4
          %s337 = int_to_ptr.vmem [resolvable:$true] %s336
          %342 = dma.hbm_to_vmem [thread:$0]  %s335, 3072, %s337, [#allocation5], 192, 192, 12
        $region24: #{transformer_forward.2} parent=11 // pred_fallthru
          _
        // Predicated region
        $region25: #{transformer_forward.2} parent=11 // pred_check
          %p343 = pneg %p135
        $region26: #{transformer_forward.2} parent=11 // pred_check_branch
          %345 = sbr.rel (%p343) target = $region28
        $region27: #{transformer_forward.2} parent=11 // pred_region
          %347 = vsyncadd [#allocation5], 0
          %s348 = sshll.u32 %s4, 4
          %s349 = int_to_ptr.hbm [resolvable:$true] %s348
          %s350 = sshll.u32 [#allocation6], 4
          %s351 = int_to_ptr.vmem [resolvable:$true] %s350
          %356 = dma.hbm_to_vmem [thread:$0]  %s349, 1024, %s351, [#allocation5], 64, 64, 4
        $region28: #{transformer_forward.2} parent=11 // pred_fallthru
          _
        // Predicated region
        $region29: #{transformer_forward.2} parent=11 // pred_check
          %p357 = pneg %p156
        $region30: #{transformer_forward.2} parent=11 // pred_check_branch
          %359 = sbr.rel (%p357) target = $region32
        $region31: #{transformer_forward.2} parent=11 // pred_region
          %361 = vsyncadd [#allocation8], 0
          %s363 = sshll.u32 %s5, 4
          %s364 = int_to_ptr.hbm [resolvable:$true] %s363
          %s365 = sshll.u32 [#allocation7], 4
          %s366 = int_to_ptr.vmem [resolvable:$true] %s365
          %368 = dma.hbm_to_vmem [thread:$0]  %s364, 16, %s366, [#allocation8]
        $region32: #{transformer_forward.2} parent=11 // pred_fallthru
          _
        // Predicated region
        $region33: #{transformer_forward.2} parent=11 // pred_check
          %p369 = pneg %p177
        $region34: #{transformer_forward.2} parent=11 // pred_check_branch
          %371 = sbr.rel (%p369) target = $region36
        $region35: #{transformer_forward.2} parent=11 // pred_region
          _
        $region36: #{transformer_forward.2} parent=11 // pred_fallthru
          _
        // Predicated region
        $region37: #{transformer_forward.2} parent=11 // pred_check
          %p372 = pneg %p198
        $region38: #{transformer_forward.2} parent=11 // pred_check_branch
          %374 = sbr.rel (%p372) target = $region40
        $region39: #{transformer_forward.2} parent=11 // pred_region
          _
        $region40: #{transformer_forward.2} parent=11 // pred_fallthru
          _
        // Predicated region
        $region41: #{transformer_forward.2} parent=11 // pred_check
          %p375 = pneg %p219
        $region42: #{transformer_forward.2} parent=11 // pred_check_branch
          %377 = sbr.rel (%p375) target = $region44
        $region43: #{transformer_forward.2} parent=11 // pred_region
          %379 = vsyncadd [#allocation8], 0
          %s380 = sshll.u32 %s8, 4
          %s381 = int_to_ptr.hbm [resolvable:$true] %s380
          %s382 = sshll.u32 [#allocation9], 4
          %s383 = int_to_ptr.vmem [resolvable:$true] %s382
          %388 = dma.hbm_to_vmem [thread:$0]  %s381, 2048, %s383, [#allocation8], 128, 128, 8
        $region44: #{transformer_forward.2} parent=11 // pred_fallthru
          _
        // Predicated region
        $region45: #{transformer_forward.2} parent=11 // pred_check
          %p389 = pneg %p240
        $region46: #{transformer_forward.2} parent=11 // pred_check_branch
          %391 = sbr.rel (%p389) target = $region48
        $region47: #{transformer_forward.2} parent=11 // pred_region
          %393 = vsyncadd [#allocation11], 0
          %s395 = sshll.u32 %s9, 4
          %s396 = int_to_ptr.hbm [resolvable:$true] %s395
          %s397 = sshll.u32 [#allocation10], 4
          %s398 = int_to_ptr.vmem [resolvable:$true] %s397
          %400 = dma.hbm_to_vmem [thread:$0]  %s396, 32, %s398, [#allocation11]
        $region48: #{transformer_forward.2} parent=11 // pred_fallthru
          _
        // Predicated region
        $region49: #{transformer_forward.2} parent=11 // pred_check
          %p401 = pneg %p261
        $region50: #{transformer_forward.2} parent=11 // pred_check_branch
          %403 = sbr.rel (%p401) target = $region52
        $region51: #{transformer_forward.2} parent=11 // pred_region
          %405 = vsyncadd [#allocation11], 0
          %s406 = sshll.u32 %s10, 4
          %s407 = int_to_ptr.hbm [resolvable:$true] %s406
          %s408 = sshll.u32 [#allocation12], 4
          %s409 = int_to_ptr.vmem [resolvable:$true] %s408
          %414 = dma.hbm_to_vmem [thread:$0]  %s407, 2048, %s409, [#allocation11], 64, 64, 4
        $region52: #{transformer_forward.2} parent=11 // pred_fallthru
          _
        // Predicated region
        $region53: #{transformer_forward.2} parent=11 // pred_check
          %p415 = pneg %p282
        $region54: #{transformer_forward.2} parent=11 // pred_check_branch
          %417 = sbr.rel (%p415) target = $region56
        $region55: #{transformer_forward.2} parent=11 // pred_region
          %419 = vsyncadd [#allocation14], 0
          %s421 = sshll.u32 %s11, 4
          %s422 = int_to_ptr.hbm [resolvable:$true] %s421
          %s423 = sshll.u32 [#allocation13], 4
          %s424 = int_to_ptr.vmem [resolvable:$true] %s423
          %426 = dma.hbm_to_vmem [thread:$0]  %s422, 16, %s424, [#allocation14]
        $region56: #{transformer_forward.2} parent=11 // pred_fallthru
          _
      $region12: #{transformer_forward.2} parent=5 // pred_fallthru
        _
      %p427 = scmp.lt.s32.totalorder %s25, 2
      // Predicated region
      $region57: #{transformer_forward.2} parent=5 // pred_check
        %p428 = pneg %p427
      $region58: #{transformer_forward.2} parent=5 // pred_check_branch
        %430 = sbr.rel (%p428) target = $region60
      $region59: #{transformer_forward.2} parent=5 // pred_region
        // Predicated region
        $region61: #{transformer_forward.2} parent=59 // pred_check
          %p431 = pneg %p45
        $region62: #{transformer_forward.2} parent=59 // pred_check_branch
          %433 = sbr.rel (%p431) target = $region64
        $region63: #{transformer_forward.2} parent=59 // pred_region
          %s434 = sand.u32 %s35, 1
          %s435 = scalar_lea.sflag [#allocation3], %s434
          %s436 = sand.u32 %s35, 1
          %s437 = smul.addr %s436, 16
          %s438 = scalar_lea.vmem [#allocation2], %s437
          %440 = vsyncadd %s435, 0
          %s441 = smul.addr %s25, 2
          %s442 = smul.addr %s441, 8
          %s443 = scalar_lea.hbm %s0, %s442
          %s444 = sshll.u32 %s443, 4
          %s445 = int_to_ptr.hbm [resolvable:$true] %s444
          %s446 = sshll.u32 %s438, 4
          %s447 = int_to_ptr.vmem [resolvable:$true] %s446
          %452 = dma.hbm_to_vmem [thread:$0]  %s445, 256, %s447, %s435, 128, 128, 8
        $region64: #{transformer_forward.2} parent=59 // pred_fallthru
          _
      $region60: #{transformer_forward.2} parent=5 // pred_fallthru
        _
      %p453 = scmp.le.s32.totalorder 1, %s25
      %p454 = scmp.lt.s32.totalorder %s25, 3
      %p455 = pnand %p453, %p454
      %p456 = pneg %p455
      // Predicated region
      $region65: #{transformer_forward.2} parent=5 // pred_check
        _
      $region66: #{transformer_forward.2} parent=5 // pred_check_branch
        %458 = sbr.rel (%p455) target = $region68
      $region67: #{transformer_forward.2} parent=5 // pred_region
        %s459 = ssub.s32 %s25, 1
        %s460 = sand.u32 %s38, 1
        %s461 = scalar_lea.sflag [#allocation3], %s460
        %s462 = sand.u32 %s38, 1
        %s463 = smul.addr %s462, 16
        %s464 = scalar_lea.vmem [#allocation2], %s463
        // Predicated region
        $region69: #{transformer_forward.2} parent=67 // pred_check
          %p465 = pneg %p51
        $region70: #{transformer_forward.2} parent=67 // pred_check_branch
          %467 = sbr.rel (%p465) target = $region72
        $region71: #{transformer_forward.2} parent=67 // pred_region
          %469 = dma.done %s461, 256
        $region72: #{transformer_forward.2} parent=67 // pred_fallthru
          _
        // Predicated region
        $region73: #{transformer_forward.2} parent=67 // pred_check
          %p470 = pneg %p114
        $region74: #{transformer_forward.2} parent=67 // pred_check_branch
          %472 = sbr.rel (%p470) target = $region76
        $region75: #{transformer_forward.2} parent=67 // pred_region
          %474 = dma.done [#allocation5], 3072
        $region76: #{transformer_forward.2} parent=67 // pred_fallthru
          _
        // Predicated region
        $region77: #{transformer_forward.2} parent=67 // pred_check
          %p475 = pneg %p135
        $region78: #{transformer_forward.2} parent=67 // pred_check_branch
          %477 = sbr.rel (%p475) target = $region80
        $region79: #{transformer_forward.2} parent=67 // pred_region
          %479 = dma.done [#allocation5], 1024
        $region80: #{transformer_forward.2} parent=67 // pred_fallthru
          _
        // Predicated region
        $region81: #{transformer_forward.2} parent=67 // pred_check
          %p480 = pneg %p156
        $region82: #{transformer_forward.2} parent=67 // pred_check_branch
          %482 = sbr.rel (%p480) target = $region84
        $region83: #{transformer_forward.2} parent=67 // pred_region
          %484 = dma.done [#allocation8], 16
        $region84: #{transformer_forward.2} parent=67 // pred_fallthru
          _
        // Predicated region
        $region85: #{transformer_forward.2} parent=67 // pred_check
          %p485 = pneg %p219
        $region86: #{transformer_forward.2} parent=67 // pred_check_branch
          %487 = sbr.rel (%p485) target = $region88
        $region87: #{transformer_forward.2} parent=67 // pred_region
          %489 = dma.done [#allocation8], 2048
        $region88: #{transformer_forward.2} parent=67 // pred_fallthru
          _
        // Predicated region
        $region89: #{transformer_forward.2} parent=67 // pred_check
          %p490 = pneg %p240
        $region90: #{transformer_forward.2} parent=67 // pred_check_branch
          %492 = sbr.rel (%p490) target = $region92
        $region91: #{transformer_forward.2} parent=67 // pred_region
          %494 = dma.done [#allocation11], 32
        $region92: #{transformer_forward.2} parent=67 // pred_fallthru
          _
        // Predicated region
        $region93: #{transformer_forward.2} parent=67 // pred_check
          %p495 = pneg %p261
        $region94: #{transformer_forward.2} parent=67 // pred_check_branch
          %497 = sbr.rel (%p495) target = $region96
        $region95: #{transformer_forward.2} parent=67 // pred_region
          %499 = dma.done [#allocation11], 2048
        $region96: #{transformer_forward.2} parent=67 // pred_fallthru
          _
        // Predicated region
        $region97: #{transformer_forward.2} parent=67 // pred_check
          %p500 = pneg %p282
        $region98: #{transformer_forward.2} parent=67 // pred_check_branch
          %502 = sbr.rel (%p500) target = $region100
        $region99: #{transformer_forward.2} parent=67 // pred_region
          %504 = dma.done [#allocation14], 16
        $region100: #{transformer_forward.2} parent=67 // pred_fallthru
          _
        %s505 = sand.u32 %s38, 1
        %s506 = scalar_lea.sflag [#allocation3], %s505
        %s507 = sand.u32 %s38, 1
        %s508 = smul.addr %s507, 16
        %s509 = scalar_lea.vmem [#allocation2], %s508
        %p510 = pneg %p51
        %p511 = pneg %p48
        %p512 = pneg %p72
        %p513 = pneg %p69
        %p514 = pneg %p93
        %p515 = pneg %p90
        %p516 = pneg %p114
        %p517 = pneg %p111
        %p518 = pneg %p135
        %p519 = pneg %p132
        %p520 = pneg %p156
        %p521 = pneg %p153
        %p522 = pneg %p177
        %p523 = pneg %p174
        %p524 = pneg %p198
        %p525 = pneg %p195
        %p526 = pneg %p219
        %p527 = pneg %p216
        %p528 = pneg %p240
        %p529 = pneg %p237
        %p530 = pneg %p261
        %p531 = pneg %p258
        %p532 = pneg %p282
        %p533 = pneg %p279
        %p534 = pneg %p308
        %p535 = pneg %p305
        %p536 = scmp.lt.s32.totalorder %s30, 1
        %s537 = scalar_select %p536, %s30, 1
        %s538 = smul.addr %s537, 2
        %s539 = smul.addr %s538, 8
        %s540 = scalar_lea.vmem %s12, %s539
        %p541 = scmp.lt.s32.totalorder %s30, 1
        %s542 = scalar_select %p541, %s30, 1
        %s543 = smul.addr %s542, 2
        %s544 = smul.addr %s543, 8
        %s545 = scalar_lea.vmem %s12, %s544
        %v547 = vld [vmem:[%s464] sm:$0xff]
        %v548 = vld [vmem:[%s464 + $0x8] sm:$0xff]
        %v549 = vld [vmem:[%s1] sm:$0x1]
        %v550 = vld [vmem:[%s2] sm:$0x1]
        %551 = vadd.xlane.f32.xlu0 %v547
        %v552 = vpop.xlane.xlu0 %551
        %553 = vadd.xlane.f32.xlu0 %v548
        %v554 = vpop.xlane.xlu0 %553
        %v555 = vrcp.pop 128.0
        %v556 = vmul.f32 128.0, %v555
        %v557 = vsub.f32 1.0, %v556
        %v558 = vmul.f32 %v555, %v557
        %v559 = vadd.f32 %v555, %v558
        %vm560 = vweird.f32 %v555
        %v561 = vsel %vm560, %v555, %v559
        %v562 = vmul.f32 %v552, %v561
        %v563 = vmul.f32 %v554, %v561
        %v564 = vsub.f32 %v547, %v562
        %v565 = vsub.f32 %v548, %v563
        %v566 = vmul.f32 %v564, %v564
        %v567 = vmul.f32 %v565, %v565
        %568 = vadd.xlane.f32.xlu0 %v566
        %v569 = vpop.xlane.xlu0 %568
        %570 = vadd.xlane.f32.xlu0 %v567
        %v571 = vpop.xlane.xlu0 %570
        %v572 = vmul.f32 %v569, %v561
        %v573 = vmul.f32 %v571, %v561
        %v574 = vadd.f32 %v572, 1e-05
        %v575 = vadd.f32 %v573, 1e-05
        %v576 = vrsqrt.pop %v574
        %v577 = vmul.f32 %v576, %v574
        %v578 = vmul.f32 %v577, %v576
        %v579 = vmul.f32 0.5, %v578
        %v580 = vsub.f32 1.5, %v579
        %v581 = vmul.f32 %v576, %v580
        %vm582 = vweird.f32 %v574
        %vm583 = vweird.f32 %v576
        %vm584 = vmor %vm582, %vm583
        %v585 = vsel %vm584, %v576, %v581
        %v586 = vrsqrt.pop %v575
        %v587 = vmul.f32 %v586, %v575
        %v588 = vmul.f32 %v587, %v586
        %v589 = vmul.f32 0.5, %v588
        %v590 = vsub.f32 1.5, %v589
        %v591 = vmul.f32 %v586, %v590
        %vm592 = vweird.f32 %v575
        %vm593 = vweird.f32 %v586
        %vm594 = vmor %vm592, %vm593
        %v595 = vsel %vm594, %v586, %v591
        %v596 = vmul.f32 %v564, %v585
        %v597 = vmul.f32 %v565, %v595
        %v599 = vperm.slane %v549, 0
        %v601 = vmul.f32 %v596, %v599
        %v602 = vmul.f32 %v597, %v599
        %v604 = vperm.slane %v550, 0
        %v606 = vadd.f32 %v601, %v604
        %v607 = vadd.f32 %v602, %v604
        %v608 = vpack.c.bf16 %v607, %v606
        %v609 = vld [vmem:[#allocation4] sm:$0xff]
        %v610 = vld [vmem:[#allocation4 + $0x8] sm:$0xf]
        %v611 = vld [vmem:[#allocation4 + $0xc] sm:$0xff]
        %v612 = vld [vmem:[#allocation4 + $0x14] sm:$0xf]
        %v613 = vld [vmem:[#allocation4 + $0x18] sm:$0xff]
        %v614 = vld [vmem:[#allocation4 + $0x20] sm:$0xf]
        %v615 = vld [vmem:[#allocation4 + $0x24] sm:$0xff]
        %v616 = vld [vmem:[#allocation4 + $0x2c] sm:$0xf]
        %v617 = vld [vmem:[#allocation4 + $0x30] sm:$0xff]
        %v618 = vld [vmem:[#allocation4 + $0x38] sm:$0xf]
        %v619 = vld [vmem:[#allocation4 + $0x3c] sm:$0xff]
        %v620 = vld [vmem:[#allocation4 + $0x44] sm:$0xf]
        %v621 = vld [vmem:[#allocation4 + $0x48] sm:$0xff]
        %v622 = vld [vmem:[#allocation4 + $0x50] sm:$0xf]
        %v623 = vld [vmem:[#allocation4 + $0x54] sm:$0xff]
        %v624 = vld [vmem:[#allocation4 + $0x5c] sm:$0xf]
        %v625 = vld [vmem:[#allocation4 + $0x60] sm:$0xff]
        %v626 = vld [vmem:[#allocation4 + $0x68] sm:$0xf]
        %v627 = vld [vmem:[#allocation4 + $0x6c] sm:$0xff]
        %v628 = vld [vmem:[#allocation4 + $0x74] sm:$0xf]
        %v629 = vld [vmem:[#allocation4 + $0x78] sm:$0xff]
        %v630 = vld [vmem:[#allocation4 + $0x80] sm:$0xf]
        %v631 = vld [vmem:[#allocation4 + $0x84] sm:$0xff]
        %v632 = vld [vmem:[#allocation4 + $0x8c] sm:$0xf]
        %v633 = vld [vmem:[#allocation4 + $0x90] sm:$0xff]
        %v634 = vld [vmem:[#allocation4 + $0x98] sm:$0xf]
        %v635 = vld [vmem:[#allocation4 + $0x9c] sm:$0xff]
        %v636 = vld [vmem:[#allocation4 + $0xa4] sm:$0xf]
        %v637 = vld [vmem:[#allocation4 + $0xa8] sm:$0xff]
        %v638 = vld [vmem:[#allocation4 + $0xb0] sm:$0xf]
        %v639 = vld [vmem:[#allocation4 + $0xb4] sm:$0xff]
        %v640 = vld [vmem:[#allocation4 + $0xbc] sm:$0xf]
        %v673 = vunpack.c.l.b16 %v609
        %v674 = vunpack.c.h.b16 %v609
        %v675 = vunpack.c.l.b16 %v610
        %v676 = vunpack.c.l.b16 %v611
        %v677 = vunpack.c.h.b16 %v611
        %v678 = vunpack.c.l.b16 %v612
        %v679 = vunpack.c.l.b16 %v613
        %v680 = vunpack.c.h.b16 %v613
        %v681 = vunpack.c.l.b16 %v614
        %v682 = vunpack.c.l.b16 %v615
        %v683 = vunpack.c.h.b16 %v615
        %v684 = vunpack.c.l.b16 %v616
        %v685 = vunpack.c.l.b16 %v617
        %v686 = vunpack.c.h.b16 %v617
        %v687 = vunpack.c.l.b16 %v618
        %v688 = vunpack.c.l.b16 %v619
        %v689 = vunpack.c.h.b16 %v619
        %v690 = vunpack.c.l.b16 %v620
        %v691 = vunpack.c.l.b16 %v621
        %v692 = vunpack.c.h.b16 %v621
        %v693 = vunpack.c.l.b16 %v622
        %v694 = vunpack.c.l.b16 %v623
        %v695 = vunpack.c.h.b16 %v623
        %v696 = vunpack.c.l.b16 %v624
        %v697 = vunpack.c.l.b16 %v625
        %v698 = vunpack.c.h.b16 %v625
        %v699 = vunpack.c.l.b16 %v626
        %v700 = vunpack.c.l.b16 %v627
        %v701 = vunpack.c.h.b16 %v627
        %v702 = vunpack.c.l.b16 %v628
        %v703 = vunpack.c.l.b16 %v629
        %v704 = vunpack.c.h.b16 %v629
        %v705 = vunpack.c.l.b16 %v630
        %v706 = vunpack.c.l.b16 %v631
        %v707 = vunpack.c.h.b16 %v631
        %v708 = vunpack.c.l.b16 %v632
        %v709 = vunpack.c.l.b16 %v633
        %v710 = vunpack.c.h.b16 %v633
        %v711 = vunpack.c.l.b16 %v634
        %v712 = vunpack.c.l.b16 %v635
        %v713 = vunpack.c.h.b16 %v635
        %v714 = vunpack.c.l.b16 %v636
        %v715 = vunpack.c.l.b16 %v637
        %v716 = vunpack.c.h.b16 %v637
        %v717 = vunpack.c.l.b16 %v638
        %v718 = vunpack.c.l.b16 %v639
        %v719 = vunpack.c.h.b16 %v639
        %v720 = vunpack.c.l.b16 %v640
        %v721 = vpack.c.b16 %v676, %v673
        %v722 = vpack.c.b16 %v677, %v674
        %v723 = vpack.c.b16 %v678, %v675
        %v724 = vpack.c.b16 %v682, %v679
        %v725 = vpack.c.b16 %v683, %v680
        %v726 = vpack.c.b16 %v684, %v681
        %v727 = vpack.c.b16 %v688, %v685
        %v728 = vpack.c.b16 %v689, %v686
        %v729 = vpack.c.b16 %v690, %v687
        %v730 = vpack.c.b16 %v694, %v691
        %v731 = vpack.c.b16 %v695, %v692
        %v732 = vpack.c.b16 %v696, %v693
        %v733 = vpack.c.b16 %v700, %v697
        %v734 = vpack.c.b16 %v701, %v698
        %v735 = vpack.c.b16 %v702, %v699
        %v736 = vpack.c.b16 %v706, %v703
        %v737 = vpack.c.b16 %v707, %v704
        %v738 = vpack.c.b16 %v708, %v705
        %v739 = vpack.c.b16 %v712, %v709
        %v740 = vpack.c.b16 %v713, %v710
        %v741 = vpack.c.b16 %v714, %v711
        %v742 = vpack.c.b16 %v718, %v715
        %v743 = vpack.c.b16 %v719, %v716
        %v744 = vpack.c.b16 %v720, %v717
        %769 = vmatpush.bf16.msra.mxu0 %v742
        %770 = vmatpush.bf16.msra.mxu0 %v739
        %771 = vmatpush.bf16.msra.mxu0 %v736
        %772 = vmatpush.bf16.msra.mxu0 %v733
        %773 = vmatpush.bf16.msra.mxu0 %v730
        %774 = vmatpush.bf16.msra.mxu0 %v727
        %775 = vmatpush.bf16.msra.mxu0 %v724
        %776 = vmatpush.bf16.msra.mxu0 %v721
        %777 = vmatmul.bf16.gmra.mxu0 %v608
        %v778 = vpop.f32.mrf.mxu0
        %v779 = vadd.f32 0.0, %v778
        %v780 = vpop.f32.mrf.mxu0
        %v781 = vadd.f32 0.0, %v780
        %782 = vdwg.mxu0
        %783 = vmatpush.bf16.msra.mxu0 %v743
        %784 = vmatpush.bf16.msra.mxu0 %v740
        %785 = vmatpush.bf16.msra.mxu0 %v737
        %786 = vmatpush.bf16.msra.mxu0 %v734
        %787 = vmatpush.bf16.msra.mxu0 %v731
        %788 = vmatpush.bf16.msra.mxu0 %v728
        %789 = vmatpush.bf16.msra.mxu0 %v725
        %790 = vmatpush.bf16.msra.mxu0 %v722
        %791 = vmatmul.bf16.gmra.mxu0 %v608
        %v792 = vpop.f32.mrf.mxu0
        %v793 = vadd.f32 0.0, %v792
        %v794 = vpop.f32.mrf.mxu0
        %v795 = vadd.f32 0.0, %v794
        %796 = vdwg.mxu0
        %797 = vmatpush.bf16.msra.mxu0 %v744
        %798 = vmatpush.bf16.msra.mxu0 %v741
        %799 = vmatpush.bf16.msra.mxu0 %v738
        %800 = vmatpush.bf16.msra.mxu0 %v735
        %801 = vmatpush.bf16.msra.mxu0 %v732
        %802 = vmatpush.bf16.msra.mxu0 %v729
        %803 = vmatpush.bf16.msra.mxu0 %v726
        %804 = vmatpush.bf16.msra.mxu0 %v723
        %805 = vmatmul.bf16.gmra.mxu0 %v608
        %v806 = vpop.f32.mrf.mxu0
        %v807 = vadd.f32 0.0, %v806
        %v808 = vpop.f32.mrf.mxu0
        %v809 = vadd.f32 0.0, %v808
        %810 = vdwg.mxu0
        %813 = vrot.lane.b32.xlu0 %v779, 96
        %v814 = vpop.permute.xlu0 %813
        %815 = vrot.lane.b32.xlu0 %v781, 96
        %v816 = vpop.permute.xlu0 %815
        %819 = vrot.lane.b32.xlu0 %v779, 64
        %v820 = vpop.permute.xlu0 %819
        %821 = vrot.lane.b32.xlu0 %v781, 64
        %v822 = vpop.permute.xlu0 %821
        %825 = vrot.lane.b32.xlu0 %v779, 32
        %v826 = vpop.permute.xlu0 %825
        %827 = vrot.lane.b32.xlu0 %v781, 32
        %v828 = vpop.permute.xlu0 %827
        %v831 = vrot.slane %v820, 4
        %vm832 = vcmask 1047556
        %v833 = vsel %vm832, %v831, %v779
        %v834 = vrot.slane %v779, 4
        %v835 = vsel %vm832, %v820, %v834
        %v837 = vunpack.c.l.s4 1983009808
        %v838 = vunpack.c.0.s8 %v837
        %v839 = vperm.slane %v833, %v838
        %v841 = vunpack.c.l.s4 1983009808
        %v842 = vunpack.c.0.s8 %v841
        %v843 = vperm.slane %v835, %v842
        %v844 = vrot.slane %v826, 4
        %v845 = vsel %vm832, %v844, %v814
        %v846 = vrot.slane %v814, 4
        %v847 = vsel %vm832, %v826, %v846
        %v849 = vunpack.c.l.s4 1983009808
        %v850 = vunpack.c.0.s8 %v849
        %v851 = vperm.slane %v845, %v850
        %v853 = vunpack.c.l.s4 1983009808
        %v854 = vunpack.c.0.s8 %v853
        %v855 = vperm.slane %v847, %v854
        %v856 = vrot.slane %v851, 4
        %v857 = vsel %vm832, %v856, %v839
        %v858 = vrot.slane %v839, 4
        %v859 = vsel %vm832, %v851, %v858
        %v861 = vunpack.c.l.s4 1934713408
        %v862 = vunpack.c.0.s8 %v861
        %v863 = vperm.slane %v857, %v862
        %v865 = vunpack.c.l.s4 1934713408
        %v866 = vunpack.c.0.s8 %v865
        %v867 = vperm.slane %v859, %v866
        %v868 = vrot.slane %v855, 4
        %v869 = vsel %vm832, %v868, %v843
        %v870 = vrot.slane %v843, 4
        %v871 = vsel %vm832, %v855, %v870
        %v873 = vunpack.c.l.s4 1934713408
        %v874 = vunpack.c.0.s8 %v873
        %v875 = vperm.slane %v869, %v874
        %v877 = vunpack.c.l.s4 1934713408
        %v878 = vunpack.c.0.s8 %v877
        %v879 = vperm.slane %v871, %v878
        %v880 = vrot.slane %v863, 4
        %v881 = vsel %vm832, 0.0, %v880
        %v882 = vrot.slane %v867, 4
        %v883 = vsel %vm832, 0.0, %v882
        %v884 = vrot.slane %v875, 4
        %v885 = vsel %vm832, 0.0, %v884
        %v886 = vrot.slane %v879, 4
        %v887 = vsel %vm832, 0.0, %v886
        %v888 = vrot.slane %v822, 4
        %v889 = vsel %vm832, %v888, %v781
        %v890 = vrot.slane %v781, 4
        %v891 = vsel %vm832, %v822, %v890
        %v893 = vunpack.c.l.s4 1983009808
        %v894 = vunpack.c.0.s8 %v893
        %v895 = vperm.slane %v889, %v894
        %v897 = vunpack.c.l.s4 1983009808
        %v898 = vunpack.c.0.s8 %v897
        %v899 = vperm.slane %v891, %v898
        %v900 = vrot.slane %v828, 4
        %v901 = vsel %vm832, %v900, %v816
        %v902 = vrot.slane %v816, 4
        %v903 = vsel %vm832, %v828, %v902
        %v905 = vunpack.c.l.s4 1983009808
        %v906 = vunpack.c.0.s8 %v905
        %v907 = vperm.slane %v901, %v906
        %v909 = vunpack.c.l.s4 1983009808
        %v910 = vunpack.c.0.s8 %v909
        %v911 = vperm.slane %v903, %v910
        %v912 = vrot.slane %v907, 4
        %v913 = vsel %vm832, %v912, %v895
        %v914 = vrot.slane %v895, 4
        %v915 = vsel %vm832, %v907, %v914
        %v917 = vunpack.c.l.s4 1934713408
        %v918 = vunpack.c.0.s8 %v917
        %v919 = vperm.slane %v913, %v918
        %v921 = vunpack.c.l.s4 1934713408
        %v922 = vunpack.c.0.s8 %v921
        %v923 = vperm.slane %v915, %v922
        %v924 = vrot.slane %v911, 4
        %v925 = vsel %vm832, %v924, %v899
        %v926 = vrot.slane %v899, 4
        %v927 = vsel %vm832, %v911, %v926
        %v929 = vunpack.c.l.s4 1934713408
        %v930 = vunpack.c.0.s8 %v929
        %v931 = vperm.slane %v925, %v930
        %v933 = vunpack.c.l.s4 1934713408
        %v934 = vunpack.c.0.s8 %v933
        %v935 = vperm.slane %v927, %v934
        %v936 = vrot.slane %v919, 4
        %v937 = vsel %vm832, 0.0, %v936
        %v938 = vrot.slane %v923, 4
        %v939 = vsel %vm832, 0.0, %v938
        %v940 = vrot.slane %v931, 4
        %v941 = vsel %vm832, 0.0, %v940
        %v942 = vrot.slane %v935, 4
        %v943 = vsel %vm832, 0.0, %v942
        %v944 = vsel %vm832, %v882, %v863
        %v946 = vunpack.c.l.s4 1983009808
        %v947 = vunpack.c.0.s8 %v946
        %v948 = vperm.slane %v944, %v947
        %v949 = vrot.slane %v883, 4
        %v950 = vsel %vm832, %v949, %v881
        %v952 = vunpack.c.l.s4 1983009808
        %v953 = vunpack.c.0.s8 %v952
        %v954 = vperm.slane %v950, %v953
        %v955 = vsel %vm832, %v886, %v875
        %v957 = vunpack.c.l.s4 1983009808
        %v958 = vunpack.c.0.s8 %v957
        %v959 = vperm.slane %v955, %v958
        %v960 = vrot.slane %v887, 4
        %v961 = vsel %vm832, %v960, %v885
        %v963 = vunpack.c.l.s4 1983009808
        %v964 = vunpack.c.0.s8 %v963
        %v965 = vperm.slane %v961, %v964
        %v966 = vrot.slane %v954, 4
        %v967 = vsel %vm832, %v966, %v948
        %v968 = vrot.slane %v948, 4
        %v969 = vsel %vm832, %v954, %v968
        %v971 = vunpack.c.l.s4 1934713408
        %v972 = vunpack.c.0.s8 %v971
        %v973 = vperm.slane %v967, %v972
        %v975 = vunpack.c.l.s4 1934713408
        %v976 = vunpack.c.0.s8 %v975
        %v977 = vperm.slane %v969, %v976
        %v978 = vrot.slane %v965, 4
        %v979 = vsel %vm832, %v978, %v959
        %v980 = vrot.slane %v959, 4
        %v981 = vsel %vm832, %v965, %v980
        %v983 = vunpack.c.l.s4 1934713408
        %v984 = vunpack.c.0.s8 %v983
        %v985 = vperm.slane %v979, %v984
        %v987 = vunpack.c.l.s4 1934713408
        %v988 = vunpack.c.0.s8 %v987
        %v989 = vperm.slane %v981, %v988
        %v990 = vrot.slane %v985, 4
        %v991 = vsel %vm832, %v990, %v973
        %v992 = vrot.slane %v973, 4
        %v993 = vsel %vm832, %v985, %v992
        %v994 = vrot.slane %v989, 4
        %v995 = vsel %vm832, %v994, %v977
        %v996 = vrot.slane %v977, 4
        %v997 = vsel %vm832, %v989, %v996
        %v998 = vsel %vm832, %v938, %v919
        %v1000 = vunpack.c.l.s4 1983009808
        %v1001 = vunpack.c.0.s8 %v1000
        %v1002 = vperm.slane %v998, %v1001
        %v1003 = vrot.slane %v939, 4
        %v1004 = vsel %vm832, %v1003, %v937
        %v1006 = vunpack.c.l.s4 1983009808
        %v1007 = vunpack.c.0.s8 %v1006
        %v1008 = vperm.slane %v1004, %v1007
        %v1009 = vsel %vm832, %v942, %v931
        %v1011 = vunpack.c.l.s4 1983009808
        %v1012 = vunpack.c.0.s8 %v1011
        %v1013 = vperm.slane %v1009, %v1012
        %v1014 = vrot.slane %v943, 4
        %v1015 = vsel %vm832, %v1014, %v941
        %v1017 = vunpack.c.l.s4 1983009808
        %v1018 = vunpack.c.0.s8 %v1017
        %v1019 = vperm.slane %v1015, %v1018
        %v1020 = vrot.slane %v1008, 4
        %v1021 = vsel %vm832, %v1020, %v1002
        %v1022 = vrot.slane %v1002, 4
        %v1023 = vsel %vm832, %v1008, %v1022
        %v1025 = vunpack.c.l.s4 1934713408
        %v1026 = vunpack.c.0.s8 %v1025
        %v1027 = vperm.slane %v1021, %v1026
        %v1029 = vunpack.c.l.s4 1934713408
        %v1030 = vunpack.c.0.s8 %v1029
        %v1031 = vperm.slane %v1023, %v1030
        %v1032 = vrot.slane %v1019, 4
        %v1033 = vsel %vm832, %v1032, %v1013
        %v1034 = vrot.slane %v1013, 4
        %v1035 = vsel %vm832, %v1019, %v1034
        %v1037 = vunpack.c.l.s4 1934713408
        %v1038 = vunpack.c.0.s8 %v1037
        %v1039 = vperm.slane %v1033, %v1038
        %v1041 = vunpack.c.l.s4 1934713408
        %v1042 = vunpack.c.0.s8 %v1041
        %v1043 = vperm.slane %v1035, %v1042
        %v1044 = vrot.slane %v1039, 4
        %v1045 = vsel %vm832, %v1044, %v1027
        %v1046 = vrot.slane %v1027, 4
        %v1047 = vsel %vm832, %v1039, %v1046
        %v1048 = vrot.slane %v1043, 4
        %v1049 = vsel %vm832, %v1048, %v1031
        %v1050 = vrot.slane %v1031, 4
        %v1051 = vsel %vm832, %v1043, %v1050
        %v1052 = vpack.c.bf16 %v991, %v991
        %v1053 = vpack.c.bf16 %v1045, %v1045
        %v1054 = vpack.c.bf16 %v993, %v993
        %v1055 = vpack.c.bf16 %v1047, %v1047
        %v1056 = vpack.c.bf16 %v995, %v995
        %v1057 = vpack.c.bf16 %v1049, %v1049
        %v1058 = vpack.c.bf16 %v997, %v997
        %v1059 = vpack.c.bf16 %v1051, %v1051
        %1062 = vrot.lane.b32.xlu0 %v793, 96
        %v1063 = vpop.permute.xlu0 %1062
        %1064 = vrot.lane.b32.xlu0 %v795, 96
        %v1065 = vpop.permute.xlu0 %1064
        %1068 = vrot.lane.b32.xlu0 %v793, 64
        %v1069 = vpop.permute.xlu0 %1068
        %1070 = vrot.lane.b32.xlu0 %v795, 64
        %v1071 = vpop.permute.xlu0 %1070
        %1074 = vrot.lane.b32.xlu0 %v793, 32
        %v1075 = vpop.permute.xlu0 %1074
        %1076 = vrot.lane.b32.xlu0 %v795, 32
        %v1077 = vpop.permute.xlu0 %1076
        %v1080 = vrot.slane %v1069, 4
        %v1081 = vsel %vm832, %v1080, %v793
        %v1082 = vrot.slane %v793, 4
        %v1083 = vsel %vm832, %v1069, %v1082
        %v1085 = vunpack.c.l.s4 1983009808
        %v1086 = vunpack.c.0.s8 %v1085
        %v1087 = vperm.slane %v1081, %v1086
        %v1089 = vunpack.c.l.s4 1983009808
        %v1090 = vunpack.c.0.s8 %v1089
        %v1091 = vperm.slane %v1083, %v1090
        %v1092 = vrot.slane %v1075, 4
        %v1093 = vsel %vm832, %v1092, %v1063
        %v1094 = vrot.slane %v1063, 4
        %v1095 = vsel %vm832, %v1075, %v1094
        %v1097 = vunpack.c.l.s4 1983009808
        %v1098 = vunpack.c.0.s8 %v1097
        %v1099 = vperm.slane %v1093, %v1098
        %v1101 = vunpack.c.l.s4 1983009808
        %v1102 = vunpack.c.0.s8 %v1101
        %v1103 = vperm.slane %v1095, %v1102
        %v1104 = vrot.slane %v1099, 4
        %v1105 = vsel %vm832, %v1104, %v1087
        %v1106 = vrot.slane %v1087, 4
        %v1107 = vsel %vm832, %v1099, %v1106
        %v1109 = vunpack.c.l.s4 1934713408
        %v1110 = vunpack.c.0.s8 %v1109
        %v1111 = vperm.slane %v1105, %v1110
        %v1113 = vunpack.c.l.s4 1934713408
        %v1114 = vunpack.c.0.s8 %v1113
        %v1115 = vperm.slane %v1107, %v1114
        %v1116 = vrot.slane %v1103, 4
        %v1117 = vsel %vm832, %v1116, %v1091
        %v1118 = vrot.slane %v1091, 4
        %v1119 = vsel %vm832, %v1103, %v1118
        %v1121 = vunpack.c.l.s4 1934713408
        %v1122 = vunpack.c.0.s8 %v1121
        %v1123 = vperm.slane %v1117, %v1122
        %v1125 = vunpack.c.l.s4 1934713408
        %v1126 = vunpack.c.0.s8 %v1125
        %v1127 = vperm.slane %v1119, %v1126
        %v1128 = vrot.slane %v1111, 4
        %v1129 = vsel %vm832, 0.0, %v1128
        %v1130 = vrot.slane %v1115, 4
        %v1131 = vsel %vm832, 0.0, %v1130
        %v1132 = vrot.slane %v1123, 4
        %v1133 = vsel %vm832, 0.0, %v1132
        %v1134 = vrot.slane %v1127, 4
        %v1135 = vsel %vm832, 0.0, %v1134
        %v1136 = vrot.slane %v1071, 4
        %v1137 = vsel %vm832, %v1136, %v795
        %v1138 = vrot.slane %v795, 4
        %v1139 = vsel %vm832, %v1071, %v1138
        %v1141 = vunpack.c.l.s4 1983009808
        %v1142 = vunpack.c.0.s8 %v1141
        %v1143 = vperm.slane %v1137, %v1142
        %v1145 = vunpack.c.l.s4 1983009808
        %v1146 = vunpack.c.0.s8 %v1145
        %v1147 = vperm.slane %v1139, %v1146
        %v1148 = vrot.slane %v1077, 4
        %v1149 = vsel %vm832, %v1148, %v1065
        %v1150 = vrot.slane %v1065, 4
        %v1151 = vsel %vm832, %v1077, %v1150
        %v1153 = vunpack.c.l.s4 1983009808
        %v1154 = vunpack.c.0.s8 %v1153
        %v1155 = vperm.slane %v1149, %v1154
        %v1157 = vunpack.c.l.s4 1983009808
        %v1158 = vunpack.c.0.s8 %v1157
        %v1159 = vperm.slane %v1151, %v1158
        %v1160 = vrot.slane %v1155, 4
        %v1161 = vsel %vm832, %v1160, %v1143
        %v1162 = vrot.slane %v1143, 4
        %v1163 = vsel %vm832, %v1155, %v1162
        %v1165 = vunpack.c.l.s4 1934713408
        %v1166 = vunpack.c.0.s8 %v1165
        %v1167 = vperm.slane %v1161, %v1166
        %v1169 = vunpack.c.l.s4 1934713408
        %v1170 = vunpack.c.0.s8 %v1169
        %v1171 = vperm.slane %v1163, %v1170
        %v1172 = vrot.slane %v1159, 4
        %v1173 = vsel %vm832, %v1172, %v1147
        %v1174 = vrot.slane %v1147, 4
        %v1175 = vsel %vm832, %v1159, %v1174
        %v1177 = vunpack.c.l.s4 1934713408
        %v1178 = vunpack.c.0.s8 %v1177
        %v1179 = vperm.slane %v1173, %v1178
        %v1181 = vunpack.c.l.s4 1934713408
        %v1182 = vunpack.c.0.s8 %v1181
        %v1183 = vperm.slane %v1175, %v1182
        %v1184 = vrot.slane %v1167, 4
        %v1185 = vsel %vm832, 0.0, %v1184
        %v1186 = vrot.slane %v1171, 4
        %v1187 = vsel %vm832, 0.0, %v1186
        %v1188 = vrot.slane %v1179, 4
        %v1189 = vsel %vm832, 0.0, %v1188
        %v1190 = vrot.slane %v1183, 4
        %v1191 = vsel %vm832, 0.0, %v1190
        %v1192 = vsel %vm832, %v1130, %v1111
        %v1194 = vunpack.c.l.s4 1983009808
        %v1195 = vunpack.c.0.s8 %v1194
        %v1196 = vperm.slane %v1192, %v1195
        %v1197 = vrot.slane %v1131, 4
        %v1198 = vsel %vm832, %v1197, %v1129
        %v1200 = vunpack.c.l.s4 1983009808
        %v1201 = vunpack.c.0.s8 %v1200
        %v1202 = vperm.slane %v1198, %v1201
        %v1203 = vsel %vm832, %v1134, %v1123
        %v1205 = vunpack.c.l.s4 1983009808
        %v1206 = vunpack.c.0.s8 %v1205
        %v1207 = vperm.slane %v1203, %v1206
        %v1208 = vrot.slane %v1135, 4
        %v1209 = vsel %vm832, %v1208, %v1133
        %v1211 = vunpack.c.l.s4 1983009808
        %v1212 = vunpack.c.0.s8 %v1211
        %v1213 = vperm.slane %v1209, %v1212
        %v1214 = vrot.slane %v1202, 4
        %v1215 = vsel %vm832, %v1214, %v1196
        %v1216 = vrot.slane %v1196, 4
        %v1217 = vsel %vm832, %v1202, %v1216
        %v1219 = vunpack.c.l.s4 1934713408
        %v1220 = vunpack.c.0.s8 %v1219
        %v1221 = vperm.slane %v1215, %v1220
        %v1223 = vunpack.c.l.s4 1934713408
        %v1224 = vunpack.c.0.s8 %v1223
        %v1225 = vperm.slane %v1217, %v1224
        %v1226 = vrot.slane %v1213, 4
        %v1227 = vsel %vm832, %v1226, %v1207
        %v1228 = vrot.slane %v1207, 4
        %v1229 = vsel %vm832, %v1213, %v1228
        %v1231 = vunpack.c.l.s4 1934713408
        %v1232 = vunpack.c.0.s8 %v1231
        %v1233 = vperm.slane %v1227, %v1232
        %v1235 = vunpack.c.l.s4 1934713408
        %v1236 = vunpack.c.0.s8 %v1235
        %v1237 = vperm.slane %v1229, %v1236
        %v1238 = vrot.slane %v1233, 4
        %v1239 = vsel %vm832, %v1238, %v1221
        %v1240 = vrot.slane %v1221, 4
        %v1241 = vsel %vm832, %v1233, %v1240
        %v1242 = vrot.slane %v1237, 4
        %v1243 = vsel %vm832, %v1242, %v1225
        %v1244 = vrot.slane %v1225, 4
        %v1245 = vsel %vm832, %v1237, %v1244
        %v1246 = vsel %vm832, %v1186, %v1167
        %v1248 = vunpack.c.l.s4 1983009808
        %v1249 = vunpack.c.0.s8 %v1248
        %v1250 = vperm.slane %v1246, %v1249
        %v1251 = vrot.slane %v1187, 4
        %v1252 = vsel %vm832, %v1251, %v1185
        %v1254 = vunpack.c.l.s4 1983009808
        %v1255 = vunpack.c.0.s8 %v1254
        %v1256 = vperm.slane %v1252, %v1255
        %v1257 = vsel %vm832, %v1190, %v1179
        %v1259 = vunpack.c.l.s4 1983009808
        %v1260 = vunpack.c.0.s8 %v1259
        %v1261 = vperm.slane %v1257, %v1260
        %v1262 = vrot.slane %v1191, 4
        %v1263 = vsel %vm832, %v1262, %v1189
        %v1265 = vunpack.c.l.s4 1983009808
        %v1266 = vunpack.c.0.s8 %v1265
        %v1267 = vperm.slane %v1263, %v1266
        %v1268 = vrot.slane %v1256, 4
        %v1269 = vsel %vm832, %v1268, %v1250
        %v1270 = vrot.slane %v1250, 4
        %v1271 = vsel %vm832, %v1256, %v1270
        %v1273 = vunpack.c.l.s4 1934713408
        %v1274 = vunpack.c.0.s8 %v1273
        %v1275 = vperm.slane %v1269, %v1274
        %v1277 = vunpack.c.l.s4 1934713408
        %v1278 = vunpack.c.0.s8 %v1277
        %v1279 = vperm.slane %v1271, %v1278
        %v1280 = vrot.slane %v1267, 4
        %v1281 = vsel %vm832, %v1280, %v1261
        %v1282 = vrot.slane %v1261, 4
        %v1283 = vsel %vm832, %v1267, %v1282
        %v1285 = vunpack.c.l.s4 1934713408
        %v1286 = vunpack.c.0.s8 %v1285
        %v1287 = vperm.slane %v1281, %v1286
        %v1289 = vunpack.c.l.s4 1934713408
        %v1290 = vunpack.c.0.s8 %v1289
        %v1291 = vperm.slane %v1283, %v1290
        %v1292 = vrot.slane %v1287, 4
        %v1293 = vsel %vm832, %v1292, %v1275
        %v1294 = vrot.slane %v1275, 4
        %v1295 = vsel %vm832, %v1287, %v1294
        %v1296 = vrot.slane %v1291, 4
        %v1297 = vsel %vm832, %v1296, %v1279
        %v1298 = vrot.slane %v1279, 4
        %v1299 = vsel %vm832, %v1291, %v1298
        %v1300 = vpack.c.bf16 %v1239, %v1239
        %v1301 = vpack.c.bf16 %v1293, %v1293
        %v1302 = vpack.c.bf16 %v1241, %v1241
        %v1303 = vpack.c.bf16 %v1295, %v1295
        %v1304 = vpack.c.bf16 %v1243, %v1243
        %v1305 = vpack.c.bf16 %v1297, %v1297
        %v1306 = vpack.c.bf16 %v1245, %v1245
        %v1307 = vpack.c.bf16 %v1299, %v1299
        %1310 = vrot.lane.b32.xlu0 %v807, 96
        %v1311 = vpop.permute.xlu0 %1310
        %1312 = vrot.lane.b32.xlu0 %v809, 96
        %v1313 = vpop.permute.xlu0 %1312
        %1316 = vrot.lane.b32.xlu0 %v807, 64
        %v1317 = vpop.permute.xlu0 %1316
        %1318 = vrot.lane.b32.xlu0 %v809, 64
        %v1319 = vpop.permute.xlu0 %1318
        %1322 = vrot.lane.b32.xlu0 %v807, 32
        %v1323 = vpop.permute.xlu0 %1322
        %1324 = vrot.lane.b32.xlu0 %v809, 32
        %v1325 = vpop.permute.xlu0 %1324
        %v1328 = vrot.slane %v1317, 4
        %v1329 = vsel %vm832, %v1328, %v807
        %v1330 = vrot.slane %v807, 4
        %v1331 = vsel %vm832, %v1317, %v1330
        %v1333 = vunpack.c.l.s4 1983009808
        %v1334 = vunpack.c.0.s8 %v1333
        %v1335 = vperm.slane %v1329, %v1334
        %v1337 = vunpack.c.l.s4 1983009808
        %v1338 = vunpack.c.0.s8 %v1337
        %v1339 = vperm.slane %v1331, %v1338
        %v1340 = vrot.slane %v1323, 4
        %v1341 = vsel %vm832, %v1340, %v1311
        %v1342 = vrot.slane %v1311, 4
        %v1343 = vsel %vm832, %v1323, %v1342
        %v1345 = vunpack.c.l.s4 1983009808
        %v1346 = vunpack.c.0.s8 %v1345
        %v1347 = vperm.slane %v1341, %v1346
        %v1349 = vunpack.c.l.s4 1983009808
        %v1350 = vunpack.c.0.s8 %v1349
        %v1351 = vperm.slane %v1343, %v1350
        %v1352 = vrot.slane %v1347, 4
        %v1353 = vsel %vm832, %v1352, %v1335
        %v1354 = vrot.slane %v1335, 4
        %v1355 = vsel %vm832, %v1347, %v1354
        %v1357 = vunpack.c.l.s4 1934713408
        %v1358 = vunpack.c.0.s8 %v1357
        %v1359 = vperm.slane %v1353, %v1358
        %v1361 = vunpack.c.l.s4 1934713408
        %v1362 = vunpack.c.0.s8 %v1361
        %v1363 = vperm.slane %v1355, %v1362
        %v1364 = vrot.slane %v1351, 4
        %v1365 = vsel %vm832, %v1364, %v1339
        %v1366 = vrot.slane %v1339, 4
        %v1367 = vsel %vm832, %v1351, %v1366
        %v1369 = vunpack.c.l.s4 1934713408
        %v1370 = vunpack.c.0.s8 %v1369
        %v1371 = vperm.slane %v1365, %v1370
        %v1373 = vunpack.c.l.s4 1934713408
        %v1374 = vunpack.c.0.s8 %v1373
        %v1375 = vperm.slane %v1367, %v1374
        %v1376 = vrot.slane %v1359, 4
        %v1377 = vsel %vm832, 0.0, %v1376
        %v1378 = vrot.slane %v1363, 4
        %v1379 = vsel %vm832, 0.0, %v1378
        %v1380 = vrot.slane %v1371, 4
        %v1381 = vsel %vm832, 0.0, %v1380
        %v1382 = vrot.slane %v1375, 4
        %v1383 = vsel %vm832, 0.0, %v1382
        %v1384 = vrot.slane %v1319, 4
        %v1385 = vsel %vm832, %v1384, %v809
        %v1386 = vrot.slane %v809, 4
        %v1387 = vsel %vm832, %v1319, %v1386
        %v1389 = vunpack.c.l.s4 1983009808
        %v1390 = vunpack.c.0.s8 %v1389
        %v1391 = vperm.slane %v1385, %v1390
        %v1393 = vunpack.c.l.s4 1983009808
        %v1394 = vunpack.c.0.s8 %v1393
        %v1395 = vperm.slane %v1387, %v1394
        %v1396 = vrot.slane %v1325, 4
        %v1397 = vsel %vm832, %v1396, %v1313
        %v1398 = vrot.slane %v1313, 4
        %v1399 = vsel %vm832, %v1325, %v1398
        %v1401 = vunpack.c.l.s4 1983009808
        %v1402 = vunpack.c.0.s8 %v1401
        %v1403 = vperm.slane %v1397, %v1402
        %v1405 = vunpack.c.l.s4 1983009808
        %v1406 = vunpack.c.0.s8 %v1405
        %v1407 = vperm.slane %v1399, %v1406
        %v1408 = vrot.slane %v1403, 4
        %v1409 = vsel %vm832, %v1408, %v1391
        %v1410 = vrot.slane %v1391, 4
        %v1411 = vsel %vm832, %v1403, %v1410
        %v1413 = vunpack.c.l.s4 1934713408
        %v1414 = vunpack.c.0.s8 %v1413
        %v1415 = vperm.slane %v1409, %v1414
        %v1417 = vunpack.c.l.s4 1934713408
        %v1418 = vunpack.c.0.s8 %v1417
        %v1419 = vperm.slane %v1411, %v1418
        %v1420 = vrot.slane %v1407, 4
        %v1421 = vsel %vm832, %v1420, %v1395
        %v1422 = vrot.slane %v1395, 4
        %v1423 = vsel %vm832, %v1407, %v1422
        %v1425 = vunpack.c.l.s4 1934713408
        %v1426 = vunpack.c.0.s8 %v1425
        %v1427 = vperm.slane %v1421, %v1426
        %v1429 = vunpack.c.l.s4 1934713408
        %v1430 = vunpack.c.0.s8 %v1429
        %v1431 = vperm.slane %v1423, %v1430
        %v1432 = vrot.slane %v1415, 4
        %v1433 = vsel %vm832, 0.0, %v1432
        %v1434 = vrot.slane %v1419, 4
        %v1435 = vsel %vm832, 0.0, %v1434
        %v1436 = vrot.slane %v1427, 4
        %v1437 = vsel %vm832, 0.0, %v1436
        %v1438 = vrot.slane %v1431, 4
        %v1439 = vsel %vm832, 0.0, %v1438
        %v1440 = vsel %vm832, %v1378, %v1359
        %v1442 = vunpack.c.l.s4 1983009808
        %v1443 = vunpack.c.0.s8 %v1442
        %v1444 = vperm.slane %v1440, %v1443
        %v1445 = vrot.slane %v1379, 4
        %v1446 = vsel %vm832, %v1445, %v1377
        %v1448 = vunpack.c.l.s4 1983009808
        %v1449 = vunpack.c.0.s8 %v1448
        %v1450 = vperm.slane %v1446, %v1449
        %v1451 = vsel %vm832, %v1382, %v1371
        %v1453 = vunpack.c.l.s4 1983009808
        %v1454 = vunpack.c.0.s8 %v1453
        %v1455 = vperm.slane %v1451, %v1454
        %v1456 = vrot.slane %v1383, 4
        %v1457 = vsel %vm832, %v1456, %v1381
        %v1459 = vunpack.c.l.s4 1983009808
        %v1460 = vunpack.c.0.s8 %v1459
        %v1461 = vperm.slane %v1457, %v1460
        %v1462 = vrot.slane %v1450, 4
        %v1463 = vsel %vm832, %v1462, %v1444
        %v1464 = vrot.slane %v1444, 4
        %v1465 = vsel %vm832, %v1450, %v1464
        %v1467 = vunpack.c.l.s4 1934713408
        %v1468 = vunpack.c.0.s8 %v1467
        %v1469 = vperm.slane %v1463, %v1468
        %v1471 = vunpack.c.l.s4 1934713408
        %v1472 = vunpack.c.0.s8 %v1471
        %v1473 = vperm.slane %v1465, %v1472
        %v1474 = vrot.slane %v1461, 4
        %v1475 = vsel %vm832, %v1474, %v1455
        %v1476 = vrot.slane %v1455, 4
        %v1477 = vsel %vm832, %v1461, %v1476
        %v1479 = vunpack.c.l.s4 1934713408
        %v1480 = vunpack.c.0.s8 %v1479
        %v1481 = vperm.slane %v1475, %v1480
        %v1483 = vunpack.c.l.s4 1934713408
        %v1484 = vunpack.c.0.s8 %v1483
        %v1485 = vperm.slane %v1477, %v1484
        %v1486 = vrot.slane %v1481, 4
        %v1487 = vsel %vm832, %v1486, %v1469
        %v1488 = vrot.slane %v1469, 4
        %v1489 = vsel %vm832, %v1481, %v1488
        %v1490 = vrot.slane %v1485, 4
        %v1491 = vsel %vm832, %v1490, %v1473
        %v1492 = vrot.slane %v1473, 4
        %v1493 = vsel %vm832, %v1485, %v1492
        %v1494 = vsel %vm832, %v1434, %v1415
        %v1496 = vunpack.c.l.s4 1983009808
        %v1497 = vunpack.c.0.s8 %v1496
        %v1498 = vperm.slane %v1494, %v1497
        %v1499 = vrot.slane %v1435, 4
        %v1500 = vsel %vm832, %v1499, %v1433
        %v1502 = vunpack.c.l.s4 1983009808
        %v1503 = vunpack.c.0.s8 %v1502
        %v1504 = vperm.slane %v1500, %v1503
        %v1505 = vsel %vm832, %v1438, %v1427
        %v1507 = vunpack.c.l.s4 1983009808
        %v1508 = vunpack.c.0.s8 %v1507
        %v1509 = vperm.slane %v1505, %v1508
        %v1510 = vrot.slane %v1439, 4
        %v1511 = vsel %vm832, %v1510, %v1437
        %v1513 = vunpack.c.l.s4 1983009808
        %v1514 = vunpack.c.0.s8 %v1513
        %v1515 = vperm.slane %v1511, %v1514
        %v1516 = vrot.slane %v1504, 4
        %v1517 = vsel %vm832, %v1516, %v1498
        %v1518 = vrot.slane %v1498, 4
        %v1519 = vsel %vm832, %v1504, %v1518
        %v1521 = vunpack.c.l.s4 1934713408
        %v1522 = vunpack.c.0.s8 %v1521
        %v1523 = vperm.slane %v1517, %v1522
        %v1525 = vunpack.c.l.s4 1934713408
        %v1526 = vunpack.c.0.s8 %v1525
        %v1527 = vperm.slane %v1519, %v1526
        %v1528 = vrot.slane %v1515, 4
        %v1529 = vsel %vm832, %v1528, %v1509
        %v1530 = vrot.slane %v1509, 4
        %v1531 = vsel %vm832, %v1515, %v1530
        %v1533 = vunpack.c.l.s4 1934713408
        %v1534 = vunpack.c.0.s8 %v1533
        %v1535 = vperm.slane %v1529, %v1534
        %v1537 = vunpack.c.l.s4 1934713408
        %v1538 = vunpack.c.0.s8 %v1537
        %v1539 = vperm.slane %v1531, %v1538
        %v1540 = vrot.slane %v1535, 4
        %v1541 = vsel %vm832, %v1540, %v1523
        %v1542 = vrot.slane %v1523, 4
        %v1543 = vsel %vm832, %v1535, %v1542
        %v1544 = vrot.slane %v1539, 4
        %v1545 = vsel %vm832, %v1544, %v1527
        %v1546 = vrot.slane %v1527, 4
        %v1547 = vsel %vm832, %v1539, %v1546
        %v1548 = vpack.c.bf16 %v1487, %v1487
        %v1549 = vpack.c.bf16 %v1541, %v1541
        %v1550 = vpack.c.bf16 %v1489, %v1489
        %v1551 = vpack.c.bf16 %v1543, %v1543
        %v1552 = vpack.c.bf16 %v1491, %v1491
        %v1553 = vpack.c.bf16 %v1545, %v1545
        %v1554 = vpack.c.bf16 %v1493, %v1493
        %v1555 = vpack.c.bf16 %v1547, %v1547
        %v1558 = vunpack.c.l.b16 %v1052
        %v1559 = vunpack.c.l.b16 %v1053
        %v1560 = vpack.c.b16 %v1559, %v1558
        %v1563 = vunpack.c.l.b16 %v1300
        %v1564 = vunpack.c.l.b16 %v1301
        %v1565 = vpack.c.b16 %v1564, %v1563
        %vm1566 = vcmask 261120
        %v1568 = vsel %vm1566, %v1560, 0
        %v1571 = vsel %vm1566, %v1565, 0
        %1573 = vmatpush.bf16.xpose.msra.mxu0 0
        %1574 = vmatpush.bf16.xpose.msra.mxu0 0
        %1575 = vmatpush.bf16.xpose.msra.mxu0 0
        %1576 = vmatpush.bf16.xpose.msra.mxu0 0
        %1577 = vmatpush.bf16.xpose.msra.mxu0 0
        %1578 = vmatpush.bf16.xpose.msra.mxu0 0
        %1579 = vmatpush.bf16.xpose.msra.mxu0 0
        %1580 = vmatpush.bf16.xpose.msra.mxu0 %v1571
        %1581 = vmatmul.bf16.gmra.mxu0 %v1568
        %v1582 = vpop.f32.mrf.mxu0
        %v1583 = vadd.f32 0.0, %v1582
        %v1584 = vpop.f32.mrf.mxu0
        %v1585 = vadd.f32 0.0, %v1584
        %1586 = vdwg.mxu0
        %v1589 = vunpack.c.l.b16 %v1054
        %v1590 = vunpack.c.l.b16 %v1055
        %v1591 = vpack.c.b16 %v1590, %v1589
        %v1594 = vunpack.c.l.b16 %v1302
        %v1595 = vunpack.c.l.b16 %v1303
        %v1596 = vpack.c.b16 %v1595, %v1594
        %v1598 = vsel %vm1566, %v1591, 0
        %v1601 = vsel %vm1566, %v1596, 0
        %1603 = vmatpush.bf16.xpose.msra.mxu0 0
        %1604 = vmatpush.bf16.xpose.msra.mxu0 0
        %1605 = vmatpush.bf16.xpose.msra.mxu0 0
        %1606 = vmatpush.bf16.xpose.msra.mxu0 0
        %1607 = vmatpush.bf16.xpose.msra.mxu0 0
        %1608 = vmatpush.bf16.xpose.msra.mxu0 0
        %1609 = vmatpush.bf16.xpose.msra.mxu0 0
        %1610 = vmatpush.bf16.xpose.msra.mxu0 %v1601
        %1611 = vmatmul.bf16.gmra.mxu0 %v1598
        %v1612 = vpop.f32.mrf.mxu0
        %v1613 = vadd.f32 0.0, %v1612
        %v1614 = vpop.f32.mrf.mxu0
        %v1615 = vadd.f32 0.0, %v1614
        %1616 = vdwg.mxu0
        %v1619 = vunpack.c.l.b16 %v1056
        %v1620 = vunpack.c.l.b16 %v1057
        %v1621 = vpack.c.b16 %v1620, %v1619
        %v1624 = vunpack.c.l.b16 %v1304
        %v1625 = vunpack.c.l.b16 %v1305
        %v1626 = vpack.c.b16 %v1625, %v1624
        %v1628 = vsel %vm1566, %v1621, 0
        %v1631 = vsel %vm1566, %v1626, 0
        %1633 = vmatpush.bf16.xpose.msra.mxu0 0
        %1634 = vmatpush.bf16.xpose.msra.mxu0 0
        %1635 = vmatpush.bf16.xpose.msra.mxu0 0
        %1636 = vmatpush.bf16.xpose.msra.mxu0 0
        %1637 = vmatpush.bf16.xpose.msra.mxu0 0
        %1638 = vmatpush.bf16.xpose.msra.mxu0 0
        %1639 = vmatpush.bf16.xpose.msra.mxu0 0
        %1640 = vmatpush.bf16.xpose.msra.mxu0 %v1631
        %1641 = vmatmul.bf16.gmra.mxu0 %v1628
        %v1642 = vpop.f32.mrf.mxu0
        %v1643 = vadd.f32 0.0, %v1642
        %v1644 = vpop.f32.mrf.mxu0
        %v1645 = vadd.f32 0.0, %v1644
        %1646 = vdwg.mxu0
        %v1649 = vunpack.c.l.b16 %v1058
        %v1650 = vunpack.c.l.b16 %v1059
        %v1651 = vpack.c.b16 %v1650, %v1649
        %v1654 = vunpack.c.l.b16 %v1306
        %v1655 = vunpack.c.l.b16 %v1307
        %v1656 = vpack.c.b16 %v1655, %v1654
        %v1658 = vsel %vm1566, %v1651, 0
        %v1661 = vsel %vm1566, %v1656, 0
        %1663 = vmatpush.bf16.xpose.msra.mxu0 0
        %1664 = vmatpush.bf16.xpose.msra.mxu0 0
        %1665 = vmatpush.bf16.xpose.msra.mxu0 0
        %1666 = vmatpush.bf16.xpose.msra.mxu0 0
        %1667 = vmatpush.bf16.xpose.msra.mxu0 0
        %1668 = vmatpush.bf16.xpose.msra.mxu0 0
        %1669 = vmatpush.bf16.xpose.msra.mxu0 0
        %1670 = vmatpush.bf16.xpose.msra.mxu0 %v1661
        %1671 = vmatmul.bf16.gmra.mxu0 %v1658
        %v1672 = vpop.f32.mrf.mxu0
        %v1673 = vadd.f32 0.0, %v1672
        %v1674 = vpop.f32.mrf.mxu0
        %v1675 = vadd.f32 0.0, %v1674
        %1676 = vdwg.mxu0
        %vm1677 = vcmask 130048
        %v1678 = vsel %vm1677, %v1583, -inf
        %1679 = vmax.xlane.f32.xlu0 %v1678
        %v1680 = vpop.xlane.xlu0 %1679
        %v1681 = vsel %vm1677, %v1585, -inf
        %1682 = vmax.xlane.f32.xlu0 %v1681
        %v1683 = vpop.xlane.xlu0 %1682
        %v1684 = vsel %vm1677, %v1613, -inf
        %1685 = vmax.xlane.f32.xlu0 %v1684
        %v1686 = vpop.xlane.xlu0 %1685
        %v1687 = vsel %vm1677, %v1615, -inf
        %1688 = vmax.xlane.f32.xlu0 %v1687
        %v1689 = vpop.xlane.xlu0 %1688
        %v1690 = vsel %vm1677, %v1643, -inf
        %1691 = vmax.xlane.f32.xlu0 %v1690
        %v1692 = vpop.xlane.xlu0 %1691
        %v1693 = vsel %vm1677, %v1645, -inf
        %1694 = vmax.xlane.f32.xlu0 %v1693
        %v1695 = vpop.xlane.xlu0 %1694
        %v1696 = vsel %vm1677, %v1673, -inf
        %1697 = vmax.xlane.f32.xlu0 %v1696
        %v1698 = vpop.xlane.xlu0 %1697
        %v1699 = vsel %vm1677, %v1675, -inf
        %1700 = vmax.xlane.f32.xlu0 %v1699
        %v1701 = vpop.xlane.xlu0 %1700
        %v1702 = vsub.f32 %v1583, %v1680
        %v1703 = vsub.f32 %v1585, %v1683
        %v1704 = vsub.f32 %v1613, %v1686
        %v1705 = vsub.f32 %v1615, %v1689
        %v1706 = vsub.f32 %v1643, %v1692
        %v1707 = vsub.f32 %v1645, %v1695
        %v1708 = vsub.f32 %v1673, %v1698
        %v1709 = vsub.f32 %v1675, %v1701
        %v1710 = vmul.f32 %v1702, 1.442695
        %v1711 = vpow.pop %v1710
        %v1712 = vmul.f32 %v1703, 1.442695
        %v1713 = vpow.pop %v1712
        %v1714 = vmul.f32 %v1704, 1.442695
        %v1715 = vpow.pop %v1714
        %v1716 = vmul.f32 %v1705, 1.442695
        %v1717 = vpow.pop %v1716
        %v1718 = vmul.f32 %v1706, 1.442695
        %v1719 = vpow.pop %v1718
        %v1720 = vmul.f32 %v1707, 1.442695
        %v1721 = vpow.pop %v1720
        %v1722 = vmul.f32 %v1708, 1.442695
        %v1723 = vpow.pop %v1722
        %v1724 = vmul.f32 %v1709, 1.442695
        %v1725 = vpow.pop %v1724
        %v1726 = vsel %vm1677, %v1711, 0.0
        %1727 = vadd.xlane.f32.xlu0 %v1726
        %v1728 = vpop.xlane.xlu0 %1727
        %v1729 = vsel %vm1677, %v1713, 0.0
        %1730 = vadd.xlane.f32.xlu0 %v1729
        %v1731 = vpop.xlane.xlu0 %1730
        %v1732 = vsel %vm1677, %v1715, 0.0
        %1733 = vadd.xlane.f32.xlu0 %v1732
        %v1734 = vpop.xlane.xlu0 %1733
        %v1735 = vsel %vm1677, %v1717, 0.0
        %1736 = vadd.xlane.f32.xlu0 %v1735
        %v1737 = vpop.xlane.xlu0 %1736
        %v1738 = vsel %vm1677, %v1719, 0.0
        %1739 = vadd.xlane.f32.xlu0 %v1738
        %v1740 = vpop.xlane.xlu0 %1739
        %v1741 = vsel %vm1677, %v1721, 0.0
        %1742 = vadd.xlane.f32.xlu0 %v1741
        %v1743 = vpop.xlane.xlu0 %1742
        %v1744 = vsel %vm1677, %v1723, 0.0
        %1745 = vadd.xlane.f32.xlu0 %v1744
        %v1746 = vpop.xlane.xlu0 %1745
        %v1747 = vsel %vm1677, %v1725, 0.0
        %1748 = vadd.xlane.f32.xlu0 %v1747
        %v1749 = vpop.xlane.xlu0 %1748
        %v1750 = vrcp.pop %v1728
        %v1751 = vrcp.pop %v1731
        %v1752 = vrcp.pop %v1734
        %v1753 = vrcp.pop %v1737
        %v1754 = vrcp.pop %v1740
        %v1755 = vrcp.pop %v1743
        %v1756 = vrcp.pop %v1746
        %v1757 = vrcp.pop %v1749
        %v1758 = vmul.f32 %v1711, %v1750
        %v1759 = vmul.f32 %v1713, %v1751
        %v1760 = vmul.f32 %v1715, %v1752
        %v1761 = vmul.f32 %v1717, %v1753
        %v1762 = vmul.f32 %v1719, %v1754
        %v1763 = vmul.f32 %v1721, %v1755
        %v1764 = vmul.f32 %v1723, %v1756
        %v1765 = vmul.f32 %v1725, %v1757
        %v1766 = vpack.c.bf16 %v1758, %v1758
        %v1767 = vpack.c.bf16 %v1759, %v1759
        %v1768 = vpack.c.bf16 %v1760, %v1760
        %v1769 = vpack.c.bf16 %v1761, %v1761
        %v1770 = vpack.c.bf16 %v1762, %v1762
        %v1771 = vpack.c.bf16 %v1763, %v1763
        %v1772 = vpack.c.bf16 %v1764, %v1764
        %v1773 = vpack.c.bf16 %v1765, %v1765
        %v1776 = vunpack.c.l.b16 %v1766
        %v1777 = vunpack.c.l.b16 %v1767
        %v1778 = vpack.c.b16 %v1777, %v1776
        %v1781 = vunpack.c.l.b16 %v1548
        %v1782 = vunpack.c.l.b16 %v1549
        %v1783 = vpack.c.b16 %v1782, %v1781
        %v1786 = vsel %vm1677, %v1778, 0
        %1788 = vmatpush.bf16.msra.mxu0 0
        %1789 = vmatpush.bf16.msra.mxu0 0
        %1790 = vmatpush.bf16.msra.mxu0 0
        %1791 = vmatpush.bf16.msra.mxu0 0
        %1792 = vmatpush.bf16.msra.mxu0 0
        %1793 = vmatpush.bf16.msra.mxu0 0
        %1794 = vmatpush.bf16.msra.mxu0 0
        %1795 = vmatpush.bf16.msra.mxu0 %v1783
        %1796 = vmatmul.bf16.gmra.mxu0 %v1786
        %v1797 = vpop.f32.mrf.mxu0
        %v1798 = vadd.f32 0.0, %v1797
        %v1799 = vpop.f32.mrf.mxu0
        %v1800 = vadd.f32 0.0, %v1799
        %1801 = vdwg.mxu0
        %v1804 = vunpack.c.l.b16 %v1768
        %v1805 = vunpack.c.l.b16 %v1769
        %v1806 = vpack.c.b16 %v1805, %v1804
        %v1809 = vunpack.c.l.b16 %v1550
        %v1810 = vunpack.c.l.b16 %v1551
        %v1811 = vpack.c.b16 %v1810, %v1809
        %v1814 = vsel %vm1677, %v1806, 0
        %1816 = vmatpush.bf16.msra.mxu0 0
        %1817 = vmatpush.bf16.msra.mxu0 0
        %1818 = vmatpush.bf16.msra.mxu0 0
        %1819 = vmatpush.bf16.msra.mxu0 0
        %1820 = vmatpush.bf16.msra.mxu0 0
        %1821 = vmatpush.bf16.msra.mxu0 0
        %1822 = vmatpush.bf16.msra.mxu0 0
        %1823 = vmatpush.bf16.msra.mxu0 %v1811
        %1824 = vmatmul.bf16.gmra.mxu0 %v1814
        %v1825 = vpop.f32.mrf.mxu0
        %v1826 = vadd.f32 0.0, %v1825
        %v1827 = vpop.f32.mrf.mxu0
        %v1828 = vadd.f32 0.0, %v1827
        %1829 = vdwg.mxu0
        %v1832 = vunpack.c.l.b16 %v1770
        %v1833 = vunpack.c.l.b16 %v1771
        %v1834 = vpack.c.b16 %v1833, %v1832
        %v1837 = vunpack.c.l.b16 %v1552
        %v1838 = vunpack.c.l.b16 %v1553
        %v1839 = vpack.c.b16 %v1838, %v1837
        %v1842 = vsel %vm1677, %v1834, 0
        %1844 = vmatpush.bf16.msra.mxu0 0
        %1845 = vmatpush.bf16.msra.mxu0 0
        %1846 = vmatpush.bf16.msra.mxu0 0
        %1847 = vmatpush.bf16.msra.mxu0 0
        %1848 = vmatpush.bf16.msra.mxu0 0
        %1849 = vmatpush.bf16.msra.mxu0 0
        %1850 = vmatpush.bf16.msra.mxu0 0
        %1851 = vmatpush.bf16.msra.mxu0 %v1839
        %1852 = vmatmul.bf16.gmra.mxu0 %v1842
        %v1853 = vpop.f32.mrf.mxu0
        %v1854 = vadd.f32 0.0, %v1853
        %v1855 = vpop.f32.mrf.mxu0
        %v1856 = vadd.f32 0.0, %v1855
        %1857 = vdwg.mxu0
        %v1860 = vunpack.c.l.b16 %v1772
        %v1861 = vunpack.c.l.b16 %v1773
        %v1862 = vpack.c.b16 %v1861, %v1860
        %v1865 = vunpack.c.l.b16 %v1554
        %v1866 = vunpack.c.l.b16 %v1555
        %v1867 = vpack.c.b16 %v1866, %v1865
        %v1870 = vsel %vm1677, %v1862, 0
        %1872 = vmatpush.bf16.msra.mxu0 0
        %1873 = vmatpush.bf16.msra.mxu0 0
        %1874 = vmatpush.bf16.msra.mxu0 0
        %1875 = vmatpush.bf16.msra.mxu0 0
        %1876 = vmatpush.bf16.msra.mxu0 0
        %1877 = vmatpush.bf16.msra.mxu0 0
        %1878 = vmatpush.bf16.msra.mxu0 0
        %1879 = vmatpush.bf16.msra.mxu0 %v1867
        %1880 = vmatmul.bf16.gmra.mxu0 %v1870
        %v1881 = vpop.f32.mrf.mxu0
        %v1882 = vadd.f32 0.0, %v1881
        %v1883 = vpop.f32.mrf.mxu0
        %v1884 = vadd.f32 0.0, %v1883
        %1885 = vdwg.mxu0
        %v1886 = vrot.slane %v1854, 4
        %v1887 = vsel %vm832, %v1886, %v1798
        %v1888 = vrot.slane %v1798, 4
        %v1889 = vsel %vm832, %v1854, %v1888
        %v1891 = vunpack.c.l.s4 1983009808
        %v1892 = vunpack.c.0.s8 %v1891
        %v1893 = vperm.slane %v1887, %v1892
        %v1895 = vunpack.c.l.s4 1983009808
        %v1896 = vunpack.c.0.s8 %v1895
        %v1897 = vperm.slane %v1889, %v1896
        %v1898 = vrot.slane %v1882, 4
        %v1899 = vsel %vm832, %v1898, %v1826
        %v1900 = vrot.slane %v1826, 4
        %v1901 = vsel %vm832, %v1882, %v1900
        %v1903 = vunpack.c.l.s4 1983009808
        %v1904 = vunpack.c.0.s8 %v1903
        %v1905 = vperm.slane %v1899, %v1904
        %v1907 = vunpack.c.l.s4 1983009808
        %v1908 = vunpack.c.0.s8 %v1907
        %v1909 = vperm.slane %v1901, %v1908
        %v1910 = vrot.slane %v1905, 4
        %v1911 = vsel %vm832, %v1910, %v1893
        %v1912 = vrot.slane %v1893, 4
        %v1913 = vsel %vm832, %v1905, %v1912
        %v1915 = vunpack.c.l.s4 1934713408
        %v1916 = vunpack.c.0.s8 %v1915
        %v1917 = vperm.slane %v1911, %v1916
        %v1919 = vunpack.c.l.s4 1934713408
        %v1920 = vunpack.c.0.s8 %v1919
        %v1921 = vperm.slane %v1913, %v1920
        %v1922 = vrot.slane %v1909, 4
        %v1923 = vsel %vm832, %v1922, %v1897
        %v1924 = vrot.slane %v1897, 4
        %v1925 = vsel %vm832, %v1909, %v1924
        %v1927 = vunpack.c.l.s4 1934713408
        %v1928 = vunpack.c.0.s8 %v1927
        %v1929 = vperm.slane %v1923, %v1928
        %v1931 = vunpack.c.l.s4 1934713408
        %v1932 = vunpack.c.0.s8 %v1931
        %v1933 = vperm.slane %v1925, %v1932
        %v1934 = vrot.slane %v1917, 4
        %v1935 = vsel %vm832, 0.0, %v1934
        %v1936 = vrot.slane %v1921, 4
        %v1937 = vsel %vm832, 0.0, %v1936
        %v1938 = vrot.slane %v1929, 4
        %v1939 = vsel %vm832, 0.0, %v1938
        %v1940 = vrot.slane %v1933, 4
        %v1941 = vsel %vm832, 0.0, %v1940
        %v1942 = vrot.slane %v1856, 4
        %v1943 = vsel %vm832, %v1942, %v1800
        %v1944 = vrot.slane %v1800, 4
        %v1945 = vsel %vm832, %v1856, %v1944
        %v1947 = vunpack.c.l.s4 1983009808
        %v1948 = vunpack.c.0.s8 %v1947
        %v1949 = vperm.slane %v1943, %v1948
        %v1951 = vunpack.c.l.s4 1983009808
        %v1952 = vunpack.c.0.s8 %v1951
        %v1953 = vperm.slane %v1945, %v1952
        %v1954 = vrot.slane %v1884, 4
        %v1955 = vsel %vm832, %v1954, %v1828
        %v1956 = vrot.slane %v1828, 4
        %v1957 = vsel %vm832, %v1884, %v1956
        %v1959 = vunpack.c.l.s4 1983009808
        %v1960 = vunpack.c.0.s8 %v1959
        %v1961 = vperm.slane %v1955, %v1960
        %v1963 = vunpack.c.l.s4 1983009808
        %v1964 = vunpack.c.0.s8 %v1963
        %v1965 = vperm.slane %v1957, %v1964
        %v1966 = vrot.slane %v1961, 4
        %v1967 = vsel %vm832, %v1966, %v1949
        %v1968 = vrot.slane %v1949, 4
        %v1969 = vsel %vm832, %v1961, %v1968
        %v1971 = vunpack.c.l.s4 1934713408
        %v1972 = vunpack.c.0.s8 %v1971
        %v1973 = vperm.slane %v1967, %v1972
        %v1975 = vunpack.c.l.s4 1934713408
        %v1976 = vunpack.c.0.s8 %v1975
        %v1977 = vperm.slane %v1969, %v1976
        %v1978 = vrot.slane %v1965, 4
        %v1979 = vsel %vm832, %v1978, %v1953
        %v1980 = vrot.slane %v1953, 4
        %v1981 = vsel %vm832, %v1965, %v1980
        %v1983 = vunpack.c.l.s4 1934713408
        %v1984 = vunpack.c.0.s8 %v1983
        %v1985 = vperm.slane %v1979, %v1984
        %v1987 = vunpack.c.l.s4 1934713408
        %v1988 = vunpack.c.0.s8 %v1987
        %v1989 = vperm.slane %v1981, %v1988
        %v1990 = vrot.slane %v1973, 4
        %v1991 = vsel %vm832, 0.0, %v1990
        %v1992 = vrot.slane %v1977, 4
        %v1993 = vsel %vm832, 0.0, %v1992
        %v1994 = vrot.slane %v1985, 4
        %v1995 = vsel %vm832, 0.0, %v1994
        %v1996 = vrot.slane %v1989, 4
        %v1997 = vsel %vm832, 0.0, %v1996
        %v1998 = vsel %vm832, %v1936, %v1917
        %v2000 = vunpack.c.l.s4 1983009808
        %v2001 = vunpack.c.0.s8 %v2000
        %v2002 = vperm.slane %v1998, %v2001
        %v2003 = vrot.slane %v1937, 4
        %v2004 = vsel %vm832, %v2003, %v1935
        %v2006 = vunpack.c.l.s4 1983009808
        %v2007 = vunpack.c.0.s8 %v2006
        %v2008 = vperm.slane %v2004, %v2007
        %v2009 = vsel %vm832, %v1940, %v1929
        %v2011 = vunpack.c.l.s4 1983009808
        %v2012 = vunpack.c.0.s8 %v2011
        %v2013 = vperm.slane %v2009, %v2012
        %v2014 = vrot.slane %v1941, 4
        %v2015 = vsel %vm832, %v2014, %v1939
        %v2017 = vunpack.c.l.s4 1983009808
        %v2018 = vunpack.c.0.s8 %v2017
        %v2019 = vperm.slane %v2015, %v2018
        %v2020 = vrot.slane %v2008, 4
        %v2021 = vsel %vm832, %v2020, %v2002
        %v2022 = vrot.slane %v2002, 4
        %v2023 = vsel %vm832, %v2008, %v2022
        %v2025 = vunpack.c.l.s4 1934713408
        %v2026 = vunpack.c.0.s8 %v2025
        %v2027 = vperm.slane %v2021, %v2026
        %v2029 = vunpack.c.l.s4 1934713408
        %v2030 = vunpack.c.0.s8 %v2029
        %v2031 = vperm.slane %v2023, %v2030
        %v2032 = vrot.slane %v2019, 4
        %v2033 = vsel %vm832, %v2032, %v2013
        %v2034 = vrot.slane %v2013, 4
        %v2035 = vsel %vm832, %v2019, %v2034
        %v2037 = vunpack.c.l.s4 1934713408
        %v2038 = vunpack.c.0.s8 %v2037
        %v2039 = vperm.slane %v2033, %v2038
        %v2041 = vunpack.c.l.s4 1934713408
        %v2042 = vunpack.c.0.s8 %v2041
        %v2043 = vperm.slane %v2035, %v2042
        %v2044 = vrot.slane %v2039, 4
        %v2045 = vsel %vm832, %v2044, %v2027
        %v2046 = vrot.slane %v2027, 4
        %v2047 = vsel %vm832, %v2039, %v2046
        %v2048 = vrot.slane %v2043, 4
        %v2049 = vsel %vm832, %v2048, %v2031
        %v2050 = vrot.slane %v2031, 4
        %v2051 = vsel %vm832, %v2043, %v2050
        %v2052 = vsel %vm832, %v1992, %v1973
        %v2054 = vunpack.c.l.s4 1983009808
        %v2055 = vunpack.c.0.s8 %v2054
        %v2056 = vperm.slane %v2052, %v2055
        %v2057 = vrot.slane %v1993, 4
        %v2058 = vsel %vm832, %v2057, %v1991
        %v2060 = vunpack.c.l.s4 1983009808
        %v2061 = vunpack.c.0.s8 %v2060
        %v2062 = vperm.slane %v2058, %v2061
        %v2063 = vsel %vm832, %v1996, %v1985
        %v2065 = vunpack.c.l.s4 1983009808
        %v2066 = vunpack.c.0.s8 %v2065
        %v2067 = vperm.slane %v2063, %v2066
        %v2068 = vrot.slane %v1997, 4
        %v2069 = vsel %vm832, %v2068, %v1995
        %v2071 = vunpack.c.l.s4 1983009808
        %v2072 = vunpack.c.0.s8 %v2071
        %v2073 = vperm.slane %v2069, %v2072
        %v2074 = vrot.slane %v2062, 4
        %v2075 = vsel %vm832, %v2074, %v2056
        %v2076 = vrot.slane %v2056, 4
        %v2077 = vsel %vm832, %v2062, %v2076
        %v2079 = vunpack.c.l.s4 1934713408
        %v2080 = vunpack.c.0.s8 %v2079
        %v2081 = vperm.slane %v2075, %v2080
        %v2083 = vunpack.c.l.s4 1934713408
        %v2084 = vunpack.c.0.s8 %v2083
        %v2085 = vperm.slane %v2077, %v2084
        %v2086 = vrot.slane %v2073, 4
        %v2087 = vsel %vm832, %v2086, %v2067
        %v2088 = vrot.slane %v2067, 4
        %v2089 = vsel %vm832, %v2073, %v2088
        %v2091 = vunpack.c.l.s4 1934713408
        %v2092 = vunpack.c.0.s8 %v2091
        %v2093 = vperm.slane %v2087, %v2092
        %v2095 = vunpack.c.l.s4 1934713408
        %v2096 = vunpack.c.0.s8 %v2095
        %v2097 = vperm.slane %v2089, %v2096
        %v2098 = vrot.slane %v2093, 4
        %v2099 = vsel %vm832, %v2098, %v2081
        %v2100 = vrot.slane %v2081, 4
        %v2101 = vsel %vm832, %v2093, %v2100
        %v2102 = vrot.slane %v2097, 4
        %v2103 = vsel %vm832, %v2102, %v2085
        %v2104 = vrot.slane %v2085, 4
        %v2105 = vsel %vm832, %v2097, %v2104
        %2108 = vrot.lane.b32.xlu0 %v2047, 32
        %v2109 = vpop.permute.xlu0 %2108
        %2110 = vrot.lane.b32.xlu0 %v2101, 32
        %v2111 = vpop.permute.xlu0 %2110
        %2116 = vrot.lane.b32.xlu0 %v2049, 64
        %v2117 = vpop.permute.xlu0 %2116
        %2118 = vrot.lane.b32.xlu0 %v2103, 64
        %v2119 = vpop.permute.xlu0 %2118
        %2124 = vrot.lane.b32.xlu0 %v2051, 96
        %v2125 = vpop.permute.xlu0 %2124
        %2126 = vrot.lane.b32.xlu0 %v2105, 96
        %v2127 = vpop.permute.xlu0 %2126
        %v2130 = vsel %vm1566, %v2045, %v2109
        %v2131 = vsel %vm1566, %v2099, %v2111
        %vm2132 = vcmask 523264
        %v2133 = vsel %vm2132, %v2130, %v2117
        %v2134 = vsel %vm2132, %v2131, %v2119
        %vm2135 = vcmask 785408
        %v2136 = vsel %vm2135, %v2133, %v2125
        %v2137 = vsel %vm2135, %v2134, %v2127
        %v2138 = vpack.c.bf16 %v2137, %v2136
        %v2139 = vld [vmem:[#allocation6] sm:$0xf]
        %v2140 = vld [vmem:[#allocation6 + $0x4] sm:$0xf]
        %v2141 = vld [vmem:[#allocation6 + $0x8] sm:$0xf]
        %v2142 = vld [vmem:[#allocation6 + $0xc] sm:$0xf]
        %v2143 = vld [vmem:[#allocation6 + $0x10] sm:$0xf]
        %v2144 = vld [vmem:[#allocation6 + $0x14] sm:$0xf]
        %v2145 = vld [vmem:[#allocation6 + $0x18] sm:$0xf]
        %v2146 = vld [vmem:[#allocation6 + $0x1c] sm:$0xf]
        %v2147 = vld [vmem:[#allocation6 + $0x20] sm:$0xf]
        %v2148 = vld [vmem:[#allocation6 + $0x24] sm:$0xf]
        %v2149 = vld [vmem:[#allocation6 + $0x28] sm:$0xf]
        %v2150 = vld [vmem:[#allocation6 + $0x2c] sm:$0xf]
        %v2151 = vld [vmem:[#allocation6 + $0x30] sm:$0xf]
        %v2152 = vld [vmem:[#allocation6 + $0x34] sm:$0xf]
        %v2153 = vld [vmem:[#allocation6 + $0x38] sm:$0xf]
        %v2154 = vld [vmem:[#allocation6 + $0x3c] sm:$0xf]
        %v2155 = vld [vmem:[#allocation7] sm:$0x1]
        %v2157 = vperm.slane %v2155, 0
        %v2175 = vunpack.c.l.b16 %v2139
        %v2176 = vunpack.c.l.b16 %v2140
        %v2177 = vunpack.c.l.b16 %v2141
        %v2178 = vunpack.c.l.b16 %v2142
        %v2179 = vunpack.c.l.b16 %v2143
        %v2180 = vunpack.c.l.b16 %v2144
        %v2181 = vunpack.c.l.b16 %v2145
        %v2182 = vunpack.c.l.b16 %v2146
        %v2183 = vunpack.c.l.b16 %v2147
        %v2184 = vunpack.c.l.b16 %v2148
        %v2185 = vunpack.c.l.b16 %v2149
        %v2186 = vunpack.c.l.b16 %v2150
        %v2187 = vunpack.c.l.b16 %v2151
        %v2188 = vunpack.c.l.b16 %v2152
        %v2189 = vunpack.c.l.b16 %v2153
        %v2190 = vunpack.c.l.b16 %v2154
        %v2191 = vpack.c.b16 %v2176, %v2175
        %v2192 = vpack.c.b16 %v2178, %v2177
        %v2193 = vpack.c.b16 %v2180, %v2179
        %v2194 = vpack.c.b16 %v2182, %v2181
        %v2195 = vpack.c.b16 %v2184, %v2183
        %v2196 = vpack.c.b16 %v2186, %v2185
        %v2197 = vpack.c.b16 %v2188, %v2187
        %v2198 = vpack.c.b16 %v2190, %v2189
        %2207 = vmatpush.bf16.msra.mxu0 %v2198
        %2208 = vmatpush.bf16.msra.mxu0 %v2197
        %2209 = vmatpush.bf16.msra.mxu0 %v2196
        %2210 = vmatpush.bf16.msra.mxu0 %v2195
        %2211 = vmatpush.bf16.msra.mxu0 %v2194
        %2212 = vmatpush.bf16.msra.mxu0 %v2193
        %2213 = vmatpush.bf16.msra.mxu0 %v2192
        %2214 = vmatpush.bf16.msra.mxu0 %v2191
        %2215 = vmatmul.bf16.gmra.mxu0 %v2138
        %v2216 = vpop.f32.mrf.mxu0
        %v2217 = vadd.f32 %v2157, %v2216
        %v2218 = vpop.f32.mrf.mxu0
        %v2219 = vadd.f32 %v2157, %v2218
        %2220 = vdwg.mxu0
        %v2221 = vadd.f32 %v547, %v2217
        %v2222 = vadd.f32 %v548, %v2219
        %v2223 = vld [vmem:[%s6] sm:$0x1]
        %v2224 = vld [vmem:[%s7] sm:$0x1]
        %2225 = vadd.xlane.f32.xlu0 %v2221
        %v2226 = vpop.xlane.xlu0 %2225
        %2227 = vadd.xlane.f32.xlu0 %v2222
        %v2228 = vpop.xlane.xlu0 %2227
        %v2229 = vmul.f32 %v2226, %v561
        %v2230 = vmul.f32 %v2228, %v561
        %v2231 = vsub.f32 %v2221, %v2229
        %v2232 = vsub.f32 %v2222, %v2230
        %v2233 = vmul.f32 %v2231, %v2231
        %v2234 = vmul.f32 %v2232, %v2232
        %2235 = vadd.xlane.f32.xlu0 %v2233
        %v2236 = vpop.xlane.xlu0 %2235
        %2237 = vadd.xlane.f32.xlu0 %v2234
        %v2238 = vpop.xlane.xlu0 %2237
        %v2239 = vmul.f32 %v2236, %v561
        %v2240 = vmul.f32 %v2238, %v561
        %v2241 = vadd.f32 %v2239, 1e-05
        %v2242 = vadd.f32 %v2240, 1e-05
        %v2243 = vrsqrt.pop %v2241
        %v2244 = vmul.f32 %v2243, %v2241
        %v2245 = vmul.f32 %v2244, %v2243
        %v2246 = vmul.f32 0.5, %v2245
        %v2247 = vsub.f32 1.5, %v2246
        %v2248 = vmul.f32 %v2243, %v2247
        %vm2249 = vweird.f32 %v2241
        %vm2250 = vweird.f32 %v2243
        %vm2251 = vmor %vm2249, %vm2250
        %v2252 = vsel %vm2251, %v2243, %v2248
        %v2253 = vrsqrt.pop %v2242
        %v2254 = vmul.f32 %v2253, %v2242
        %v2255 = vmul.f32 %v2254, %v2253
        %v2256 = vmul.f32 0.5, %v2255
        %v2257 = vsub.f32 1.5, %v2256
        %v2258 = vmul.f32 %v2253, %v2257
        %vm2259 = vweird.f32 %v2242
        %vm2260 = vweird.f32 %v2253
        %vm2261 = vmor %vm2259, %vm2260
        %v2262 = vsel %vm2261, %v2253, %v2258
        %v2263 = vmul.f32 %v2231, %v2252
        %v2264 = vmul.f32 %v2232, %v2262
        %v2266 = vperm.slane %v2223, 0
        %v2268 = vmul.f32 %v2263, %v2266
        %v2269 = vmul.f32 %v2264, %v2266
        %v2271 = vperm.slane %v2224, 0
        %v2273 = vadd.f32 %v2268, %v2271
        %v2274 = vadd.f32 %v2269, %v2271
        %v2275 = vpack.c.bf16 %v2274, %v2273
        %v2276 = vld [vmem:[#allocation9] sm:$0xff]
        %v2277 = vld [vmem:[#allocation9 + $0x8] sm:$0xff]
        %v2278 = vld [vmem:[#allocation9 + $0x10] sm:$0xff]
        %v2279 = vld [vmem:[#allocation9 + $0x18] sm:$0xff]
        %v2280 = vld [vmem:[#allocation9 + $0x20] sm:$0xff]
        %v2281 = vld [vmem:[#allocation9 + $0x28] sm:$0xff]
        %v2282 = vld [vmem:[#allocation9 + $0x30] sm:$0xff]
        %v2283 = vld [vmem:[#allocation9 + $0x38] sm:$0xff]
        %v2284 = vld [vmem:[#allocation9 + $0x40] sm:$0xff]
        %v2285 = vld [vmem:[#allocation9 + $0x48] sm:$0xff]
        %v2286 = vld [vmem:[#allocation9 + $0x50] sm:$0xff]
        %v2287 = vld [vmem:[#allocation9 + $0x58] sm:$0xff]
        %v2288 = vld [vmem:[#allocation9 + $0x60] sm:$0xff]
        %v2289 = vld [vmem:[#allocation9 + $0x68] sm:$0xff]
        %v2290 = vld [vmem:[#allocation9 + $0x70] sm:$0xff]
        %v2291 = vld [vmem:[#allocation9 + $0x78] sm:$0xff]
        %v2292 = vld [vmem:[#allocation10] sm:$0x3]
        %v2294 = vperm.slane %v2292, 0
        %v2295 = vperm.slane %v2292, 1
        %v2314 = vunpack.c.l.b16 %v2276
        %v2315 = vunpack.c.h.b16 %v2276
        %v2316 = vunpack.c.l.b16 %v2277
        %v2317 = vunpack.c.h.b16 %v2277
        %v2318 = vunpack.c.l.b16 %v2278
        %v2319 = vunpack.c.h.b16 %v2278
        %v2320 = vunpack.c.l.b16 %v2279
        %v2321 = vunpack.c.h.b16 %v2279
        %v2322 = vunpack.c.l.b16 %v2280
        %v2323 = vunpack.c.h.b16 %v2280
        %v2324 = vunpack.c.l.b16 %v2281
        %v2325 = vunpack.c.h.b16 %v2281
        %v2326 = vunpack.c.l.b16 %v2282
        %v2327 = vunpack.c.h.b16 %v2282
        %v2328 = vunpack.c.l.b16 %v2283
        %v2329 = vunpack.c.h.b16 %v2283
        %v2330 = vunpack.c.l.b16 %v2284
        %v2331 = vunpack.c.h.b16 %v2284
        %v2332 = vunpack.c.l.b16 %v2285
        %v2333 = vunpack.c.h.b16 %v2285
        %v2334 = vunpack.c.l.b16 %v2286
        %v2335 = vunpack.c.h.b16 %v2286
        %v2336 = vunpack.c.l.b16 %v2287
        %v2337 = vunpack.c.h.b16 %v2287
        %v2338 = vunpack.c.l.b16 %v2288
        %v2339 = vunpack.c.h.b16 %v2288
        %v2340 = vunpack.c.l.b16 %v2289
        %v2341 = vunpack.c.h.b16 %v2289
        %v2342 = vunpack.c.l.b16 %v2290
        %v2343 = vunpack.c.h.b16 %v2290
        %v2344 = vunpack.c.l.b16 %v2291
        %v2345 = vunpack.c.h.b16 %v2291
        %v2346 = vpack.c.b16 %v2316, %v2314
        %v2347 = vpack.c.b16 %v2317, %v2315
        %v2348 = vpack.c.b16 %v2320, %v2318
        %v2349 = vpack.c.b16 %v2321, %v2319
        %v2350 = vpack.c.b16 %v2324, %v2322
        %v2351 = vpack.c.b16 %v2325, %v2323
        %v2352 = vpack.c.b16 %v2328, %v2326
        %v2353 = vpack.c.b16 %v2329, %v2327
        %v2354 = vpack.c.b16 %v2332, %v2330
        %v2355 = vpack.c.b16 %v2333, %v2331
        %v2356 = vpack.c.b16 %v2336, %v2334
        %v2357 = vpack.c.b16 %v2337, %v2335
        %v2358 = vpack.c.b16 %v2340, %v2338
        %v2359 = vpack.c.b16 %v2341, %v2339
        %v2360 = vpack.c.b16 %v2344, %v2342
        %v2361 = vpack.c.b16 %v2345, %v2343
        %2378 = vmatpush.bf16.msra.mxu0 %v2360
        %2379 = vmatpush.bf16.msra.mxu0 %v2358
        %2380 = vmatpush.bf16.msra.mxu0 %v2356
        %2381 = vmatpush.bf16.msra.mxu0 %v2354
        %2382 = vmatpush.bf16.msra.mxu0 %v2352
        %2383 = vmatpush.bf16.msra.mxu0 %v2350
        %2384 = vmatpush.bf16.msra.mxu0 %v2348
        %2385 = vmatpush.bf16.msra.mxu0 %v2346
        %2386 = vmatmul.bf16.gmra.mxu0 %v2275
        %v2387 = vpop.f32.mrf.mxu0
        %v2388 = vadd.f32 %v2294, %v2387
        %v2389 = vpop.f32.mrf.mxu0
        %v2390 = vadd.f32 %v2294, %v2389
        %2391 = vdwg.mxu0
        %2392 = vmatpush.bf16.msra.mxu0 %v2361
        %2393 = vmatpush.bf16.msra.mxu0 %v2359
        %2394 = vmatpush.bf16.msra.mxu0 %v2357
        %2395 = vmatpush.bf16.msra.mxu0 %v2355
        %2396 = vmatpush.bf16.msra.mxu0 %v2353
        %2397 = vmatpush.bf16.msra.mxu0 %v2351
        %2398 = vmatpush.bf16.msra.mxu0 %v2349
        %2399 = vmatpush.bf16.msra.mxu0 %v2347
        %2400 = vmatmul.bf16.gmra.mxu0 %v2275
        %v2401 = vpop.f32.mrf.mxu0
        %v2402 = vadd.f32 %v2295, %v2401
        %v2403 = vpop.f32.mrf.mxu0
        %v2404 = vadd.f32 %v2295, %v2403
        %2405 = vdwg.mxu0
        %v2406 = vmax.f32 %v2388, 0.0
        %v2407 = vmax.f32 %v2402, 0.0
        %v2408 = vmax.f32 %v2390, 0.0
        %v2409 = vmax.f32 %v2404, 0.0
        %v2410 = vpack.c.bf16 %v2408, %v2406
        %v2411 = vpack.c.bf16 %v2409, %v2407
        %v2412 = vld [vmem:[#allocation12] sm:$0xf]
        %v2413 = vld [vmem:[#allocation12 + $0x4] sm:$0xf]
        %v2414 = vld [vmem:[#allocation12 + $0x8] sm:$0xf]
        %v2415 = vld [vmem:[#allocation12 + $0xc] sm:$0xf]
        %v2416 = vld [vmem:[#allocation12 + $0x10] sm:$0xf]
        %v2417 = vld [vmem:[#allocation12 + $0x14] sm:$0xf]
        %v2418 = vld [vmem:[#allocation12 + $0x18] sm:$0xf]
        %v2419 = vld [vmem:[#allocation12 + $0x1c] sm:$0xf]
        %v2420 = vld [vmem:[#allocation12 + $0x20] sm:$0xf]
        %v2421 = vld [vmem:[#allocation12 + $0x24] sm:$0xf]
        %v2422 = vld [vmem:[#allocation12 + $0x28] sm:$0xf]
        %v2423 = vld [vmem:[#allocation12 + $0x2c] sm:$0xf]
        %v2424 = vld [vmem:[#allocation12 + $0x30] sm:$0xf]
        %v2425 = vld [vmem:[#allocation12 + $0x34] sm:$0xf]
        %v2426 = vld [vmem:[#allocation12 + $0x38] sm:$0xf]
        %v2427 = vld [vmem:[#allocation12 + $0x3c] sm:$0xf]
        %v2428 = vld [vmem:[#allocation12 + $0x40] sm:$0xf]
        %v2429 = vld [vmem:[#allocation12 + $0x44] sm:$0xf]
        %v2430 = vld [vmem:[#allocation12 + $0x48] sm:$0xf]
        %v2431 = vld [vmem:[#allocation12 + $0x4c] sm:$0xf]
        %v2432 = vld [vmem:[#allocation12 + $0x50] sm:$0xf]
        %v2433 = vld [vmem:[#allocation12 + $0x54] sm:$0xf]
        %v2434 = vld [vmem:[#allocation12 + $0x58] sm:$0xf]
        %v2435 = vld [vmem:[#allocation12 + $0x5c] sm:$0xf]
        %v2436 = vld [vmem:[#allocation12 + $0x60] sm:$0xf]
        %v2437 = vld [vmem:[#allocation12 + $0x64] sm:$0xf]
        %v2438 = vld [vmem:[#allocation12 + $0x68] sm:$0xf]
        %v2439 = vld [vmem:[#allocation12 + $0x6c] sm:$0xf]
        %v2440 = vld [vmem:[#allocation12 + $0x70] sm:$0xf]
        %v2441 = vld [vmem:[#allocation12 + $0x74] sm:$0xf]
        %v2442 = vld [vmem:[#allocation12 + $0x78] sm:$0xf]
        %v2443 = vld [vmem:[#allocation12 + $0x7c] sm:$0xf]
        %v2444 = vld [vmem:[#allocation13] sm:$0x1]
        %v2446 = vperm.slane %v2444, 0
        %v2480 = vunpack.c.l.b16 %v2412
        %v2481 = vunpack.c.l.b16 %v2413
        %v2482 = vunpack.c.l.b16 %v2414
        %v2483 = vunpack.c.l.b16 %v2415
        %v2484 = vunpack.c.l.b16 %v2416
        %v2485 = vunpack.c.l.b16 %v2417
        %v2486 = vunpack.c.l.b16 %v2418
        %v2487 = vunpack.c.l.b16 %v2419
        %v2488 = vunpack.c.l.b16 %v2420
        %v2489 = vunpack.c.l.b16 %v2421
        %v2490 = vunpack.c.l.b16 %v2422
        %v2491 = vunpack.c.l.b16 %v2423
        %v2492 = vunpack.c.l.b16 %v2424
        %v2493 = vunpack.c.l.b16 %v2425
        %v2494 = vunpack.c.l.b16 %v2426
        %v2495 = vunpack.c.l.b16 %v2427
        %v2496 = vunpack.c.l.b16 %v2428
        %v2497 = vunpack.c.l.b16 %v2429
        %v2498 = vunpack.c.l.b16 %v2430
        %v2499 = vunpack.c.l.b16 %v2431
        %v2500 = vunpack.c.l.b16 %v2432
        %v2501 = vunpack.c.l.b16 %v2433
        %v2502 = vunpack.c.l.b16 %v2434
        %v2503 = vunpack.c.l.b16 %v2435
        %v2504 = vunpack.c.l.b16 %v2436
        %v2505 = vunpack.c.l.b16 %v2437
        %v2506 = vunpack.c.l.b16 %v2438
        %v2507 = vunpack.c.l.b16 %v2439
        %v2508 = vunpack.c.l.b16 %v2440
        %v2509 = vunpack.c.l.b16 %v2441
        %v2510 = vunpack.c.l.b16 %v2442
        %v2511 = vunpack.c.l.b16 %v2443
        %v2512 = vpack.c.b16 %v2481, %v2480
        %v2513 = vpack.c.b16 %v2483, %v2482
        %v2514 = vpack.c.b16 %v2485, %v2484
        %v2515 = vpack.c.b16 %v2487, %v2486
        %v2516 = vpack.c.b16 %v2489, %v2488
        %v2517 = vpack.c.b16 %v2491, %v2490
        %v2518 = vpack.c.b16 %v2493, %v2492
        %v2519 = vpack.c.b16 %v2495, %v2494
        %v2520 = vpack.c.b16 %v2497, %v2496
        %v2521 = vpack.c.b16 %v2499, %v2498
        %v2522 = vpack.c.b16 %v2501, %v2500
        %v2523 = vpack.c.b16 %v2503, %v2502
        %v2524 = vpack.c.b16 %v2505, %v2504
        %v2525 = vpack.c.b16 %v2507, %v2506
        %v2526 = vpack.c.b16 %v2509, %v2508
        %v2527 = vpack.c.b16 %v2511, %v2510
        %2544 = vmatpush.bf16.msra.mxu0 %v2519
        %2545 = vmatpush.bf16.msra.mxu0 %v2518
        %2546 = vmatpush.bf16.msra.mxu0 %v2517
        %2547 = vmatpush.bf16.msra.mxu0 %v2516
        %2548 = vmatpush.bf16.msra.mxu0 %v2515
        %2549 = vmatpush.bf16.msra.mxu0 %v2514
        %2550 = vmatpush.bf16.msra.mxu0 %v2513
        %2551 = vmatpush.bf16.msra.mxu0 %v2512
        %2552 = vmatmul.bf16.gmra.mxu0 %v2410
        %v2553 = vpop.f32.mrf.mxu0
        %v2554 = vadd.f32 %v2446, %v2553
        %v2555 = vpop.f32.mrf.mxu0
        %v2556 = vadd.f32 %v2446, %v2555
        %2557 = vdwg.mxu0
        %2558 = vmatpush.bf16.msra.mxu0 %v2527
        %2559 = vmatpush.bf16.msra.mxu0 %v2526
        %2560 = vmatpush.bf16.msra.mxu0 %v2525
        %2561 = vmatpush.bf16.msra.mxu0 %v2524
        %2562 = vmatpush.bf16.msra.mxu0 %v2523
        %2563 = vmatpush.bf16.msra.mxu0 %v2522
        %2564 = vmatpush.bf16.msra.mxu0 %v2521
        %2565 = vmatpush.bf16.msra.mxu0 %v2520
        %2566 = vmatmul.bf16.gmra.mxu0 %v2411
        %v2567 = vpop.f32.mrf.mxu0
        %v2568 = vadd.f32 %v2554, %v2567
        %v2569 = vpop.f32.mrf.mxu0
        %v2570 = vadd.f32 %v2556, %v2569
        %2571 = vdwg.mxu0
        %v2572 = vadd.f32 %v2221, %v2568
        %v2573 = vadd.f32 %v2222, %v2570
        %2574 = vst [vmem:[%s545] sm:$0xff] %v2572
        %2575 = vst [vmem:[%s545 + $0x8] sm:$0xff] %v2573
        %p2576 = scmp.lt.s32.totalorder %s30, 1
        %s2577 = scalar_select %p2576, %s30, 1
        %s2578 = smul.addr %s2577, 2
        %s2579 = smul.addr %s2578, 8
        %s2580 = scalar_lea.vmem %s12, %s2579
        // Predicated region
        $region101: #{transformer_forward.2} parent=67 // pred_check
          %p2581 = pneg %p305
        $region102: #{transformer_forward.2} parent=67 // pred_check_branch
          %2583 = sbr.rel (%p2581) target = $region104
        $region103: #{transformer_forward.2} parent=67 // pred_region
          _
        $region104: #{transformer_forward.2} parent=67 // pred_fallthru
          _
      $region68: #{transformer_forward.2} parent=5 // pred_fallthru
        _
      %p2584 = scmp.le.s32.totalorder 2, %s25
      // Predicated region
      $region105: #{transformer_forward.2} parent=5 // pred_check
        %p2585 = pneg %p2584
      $region106: #{transformer_forward.2} parent=5 // pred_check_branch
        %2587 = sbr.rel (%p2585) target = $region108
      $region107: #{transformer_forward.2} parent=5 // pred_region
        %s2588 = ssub.s32 %s25, 2
        // Predicated region
        $region109: #{transformer_forward.2} parent=107 // pred_check
          %p2589 = pneg %p311
        $region110: #{transformer_forward.2} parent=107 // pred_check_branch
          %2591 = sbr.rel (%p2589) target = $region112
        $region111: #{transformer_forward.2} parent=107 // pred_region
          %p2592 = scmp.lt.s32.totalorder %s31, 1
          %s2593 = scalar_select %p2592, %s31, 1
          %s2594 = smul.addr %s2593, 2
          %s2595 = smul.addr %s2594, 8
          %s2596 = scalar_lea.vmem %s12, %s2595
        $region112: #{transformer_forward.2} parent=107 // pred_fallthru
          _
      $region108: #{transformer_forward.2} parent=5 // pred_fallthru
        _
    $region6: #{transformer_forward.2} parent=1 // loop_footer
      %s29 = sadd.s32 1, %s25
    $region7: #{transformer_forward.2} parent=1 // loop_footer_branch
      %24 = sbr.rel target = $region3
    $region8: #{transformer_forward.2} parent=1 // loop_exit
      _
    %2597 = vsyncpa [#allocation3], 1
    %s2598 = scalar_lea.sflag [#allocation3], 1
    %2599 = vsyncpa %s2598, 1
    %2600 = vsyncpa [#allocation5], 1
    %2601 = vsyncpa [#allocation8], 1
    %2602 = vsyncpa [#allocation11], 1
    %2603 = vsyncpa [#allocation14], 1

// kernel: transformer_forward.3
$region0: #{transformer_forward.3}
  #allocation0 [shape = 'u32[]', space=smem, size = 0x4, offset = 0x4, fixed_abs, tag = 'smem constant byte address 0x4 - core index']
  #allocation1 [shape = 'u32[72,128]{1,0:T(1,128)}', space=vmem, size = 0x9000, scoped, tag = 'internal scratch']
  %s0 = inlined_call_operand.vmem [shape: f32[2,16,128], index: 0, kind: input, shape index: {}]
  %s1 = inlined_call_operand.vmem [shape: f32[1,128], index: 1, kind: input, shape index: {}]
  %s2 = inlined_call_operand.vmem [shape: f32[1,128], index: 2, kind: input, shape index: {}]
  %s3 = inlined_call_operand.hbm [shape: bf16[128,384], index: 3, kind: input, shape index: {}]
  %s4 = inlined_call_operand.hbm [shape: bf16[128,128], index: 4, kind: input, shape index: {}]
  %s5 = inlined_call_operand.vmem [shape: f32[1,128], index: 5, kind: input, shape index: {}]
  %s6 = inlined_call_operand.vmem [shape: f32[1,128], index: 6, kind: input, shape index: {}]
  %s7 = inlined_call_operand.vmem [shape: f32[1,128], index: 7, kind: input, shape index: {}]
  %s8 = inlined_call_operand.hbm [shape: bf16[128,256], index: 8, kind: input, shape index: {}]
  %s9 = inlined_call_operand.vmem [shape: f32[1,256], index: 9, kind: input, shape index: {}]
  %s10 = inlined_call_operand.hbm [shape: bf16[256,128], index: 10, kind: input, shape index: {}]
  %s11 = inlined_call_operand.vmem [shape: f32[1,128], index: 11, kind: input, shape index: {}]
  %s12 = inlined_call_operand.hbm [shape: f32[2,16,128], index: 12, kind: output, shape index: {}]
  %s13 = sld [smem:[#allocation0]]
  $region97: #{transformer_forward.3} parent=0
    _
  %s15 = ssub.s32 1, %s13
  %s16 = scalar_select 0, %s15, %s13
  $region1: #{transformer_forward.3} parent=0
    #allocation2 [shape = 'u8[98304]{0}', space=vmem, size = 0x18000, scoped, tag = 'input window, operand 3, single buffered']
    #allocation3 [shape = 's32[2]{0}', space=sflag, size = 0x8, scoped, tag = 'scoped memory for transformer_forward.3']
    #allocation4 [shape = 's32[2]{0}', space=sflag, size = 0x8, scoped, tag = 'scoped memory for transformer_forward.3']
    #allocation5 [shape = 'u8[32768]{0}', space=vmem, size = 0x8000, scoped, tag = 'input window, operand 4, single buffered']
    #allocation6 [shape = 's32[1]{0}', space=sflag, size = 0x4, scoped, tag = 'scoped memory for transformer_forward.3']
    #allocation7 [shape = 'u8[65536]{0}', space=vmem, size = 0x10000, scoped, tag = 'input window, operand 8, single buffered']
    #allocation8 [shape = 'u8[65536]{0}', space=vmem, size = 0x10000, scoped, tag = 'input window, operand 10, single buffered']
    #allocation9 [shape = 's32[1]{0}', space=sflag, size = 0x4, scoped, tag = 'scoped memory for transformer_forward.3']
    #allocation10 [shape = 'u8[16384]{0}', space=vmem, size = 0x4000, scoped, tag = 'output window, operand 0']
    %17 = vsyncpa [#allocation3], 0
    %18 = vsyncpa [#allocation6], 0
    %19 = vsyncpa [#allocation9], 0
    %20 = vsyncpa [#allocation4], 0
    %s21 = scalar_lea.sflag [#allocation4], 1
    %22 = vsyncpa %s21, 0
    loop: start=0, step=1, limit=4
    $region2: #{transformer_forward.3} parent=1 // loop_pre_header
      _
    $region3: #{transformer_forward.3} parent=1 // loop_header
      %s24 = sphi 0, %s28
      %p25 = scmp.ge.s32.totalorder %s24, 4
      %s34 = sphi 0, %s36
      %s37 = sphi 0, %s34
      %s38 = sphi 0, %s37
      %s54 = sphi 0, %s38
      %s58 = sphi 0, %s58
      %s60 = sphi 0, %s58
      %s61 = sphi 0, %s60
      %s75 = sphi 0, %s61
      %s79 = sphi 0, %s79
      %s81 = sphi 0, %s79
      %s82 = sphi 0, %s81
      %s96 = sphi 0, %s82
      %s100 = sphi 0, %s100
      %s102 = sphi 0, %s100
      %s103 = sphi 0, %s102
      %s117 = sphi 0, %s103
      %s121 = sphi 0, %s121
      %s123 = sphi 0, %s121
      %s124 = sphi 0, %s123
      %s138 = sphi 0, %s124
      %s142 = sphi 0, %s142
      %s144 = sphi 0, %s142
      %s145 = sphi 0, %s144
      %s159 = sphi 0, %s145
      %s163 = sphi 0, %s163
      %s165 = sphi 0, %s163
      %s166 = sphi 0, %s165
      %s180 = sphi 0, %s166
      %s184 = sphi 0, %s184
      %s186 = sphi 0, %s184
      %s187 = sphi 0, %s186
      %s201 = sphi 0, %s187
      %s205 = sphi 0, %s205
      %s207 = sphi 0, %s205
      %s208 = sphi 0, %s207
      %s222 = sphi 0, %s208
      %s226 = sphi 0, %s226
      %s228 = sphi 0, %s226
      %s229 = sphi 0, %s228
      %s243 = sphi 0, %s229
      %s247 = sphi 0, %s247
      %s249 = sphi 0, %s247
      %s250 = sphi 0, %s249
      %s264 = sphi 0, %s250
      %s268 = sphi 0, %s268
      %s270 = sphi 0, %s268
      %s271 = sphi 0, %s270
      %s285 = sphi 0, %s271
      %s291 = sphi 0, %s293
      %s294 = sphi 0, %s291
      %s295 = sphi 0, %s294
      %s311 = sphi 0, %s295
    $region4: #{transformer_forward.3} parent=1 // loop_header_branch
      %27 = sbr.rel (%p25) target = $region8
    $region5: #{transformer_forward.3} parent=1 // loop_body
      %s29 = ssub.s32 %s24, 1
      %s30 = ssub.s32 %s24, 2
      %s31 = sadd.s32 %s24, 1
      %s32 = ssub.s32 %s24, %s31
      %p33 = scmp.eq.s32.totalorder %s32, 0
      %s35 = sadd.s32 %s34, 1
      %s36 = scalar_select %p33, %s34, %s35
      %p39 = pneg %p33
      %p40 = scmp.eq.s32.totalorder %s24, 1
      %p41 = por %p39, %p40
      %p42 = scmp.ne.s32.totalorder %s34, %s37
      %p43 = scmp.eq.s32.totalorder %s24, 0
      %p44 = por %p42, %p43
      %p45 = scmp.ne.s32.totalorder %s34, %s37
      %p46 = scmp.eq.s32.totalorder %s29, 1
      %p47 = por %p45, %p46
      %p48 = scmp.ne.s32.totalorder %s37, %s38
      %p49 = scmp.eq.s32.totalorder %s29, 0
      %p50 = por %p48, %p49
      %p51 = scmp.ne.s32.totalorder %s37, %s38
      %p52 = scmp.eq.s32.totalorder %s30, 1
      %p53 = por %p51, %p52
      %p55 = scmp.ne.s32.totalorder %s38, %s54
      %p56 = scmp.eq.s32.totalorder %s30, 0
      %p57 = por %p55, %p56
      %s59 = sadd.s32 %s58, 1
      %p62 = scmp.eq.s32.totalorder %s24, 1
      %p63 = scmp.ne.s32.totalorder %s58, %s60
      %p64 = scmp.eq.s32.totalorder %s24, 0
      %p65 = por %p63, %p64
      %p66 = scmp.ne.s32.totalorder %s58, %s60
      %p67 = scmp.eq.s32.totalorder %s29, 1
      %p68 = por %p66, %p67
      %p69 = scmp.ne.s32.totalorder %s60, %s61
      %p70 = scmp.eq.s32.totalorder %s29, 0
      %p71 = por %p69, %p70
      %p72 = scmp.ne.s32.totalorder %s60, %s61
      %p73 = scmp.eq.s32.totalorder %s30, 1
      %p74 = por %p72, %p73
      %p76 = scmp.ne.s32.totalorder %s61, %s75
      %p77 = scmp.eq.s32.totalorder %s30, 0
      %p78 = por %p76, %p77
      %s80 = sadd.s32 %s79, 1
      %p83 = scmp.eq.s32.totalorder %s24, 1
      %p84 = scmp.ne.s32.totalorder %s79, %s81
      %p85 = scmp.eq.s32.totalorder %s24, 0
      %p86 = por %p84, %p85
      %p87 = scmp.ne.s32.totalorder %s79, %s81
      %p88 = scmp.eq.s32.totalorder %s29, 1
      %p89 = por %p87, %p88
      %p90 = scmp.ne.s32.totalorder %s81, %s82
      %p91 = scmp.eq.s32.totalorder %s29, 0
      %p92 = por %p90, %p91
      %p93 = scmp.ne.s32.totalorder %s81, %s82
      %p94 = scmp.eq.s32.totalorder %s30, 1
      %p95 = por %p93, %p94
      %p97 = scmp.ne.s32.totalorder %s82, %s96
      %p98 = scmp.eq.s32.totalorder %s30, 0
      %p99 = por %p97, %p98
      %s101 = sadd.s32 %s100, 1
      %p104 = scmp.eq.s32.totalorder %s24, 1
      %p105 = scmp.ne.s32.totalorder %s100, %s102
      %p106 = scmp.eq.s32.totalorder %s24, 0
      %p107 = por %p105, %p106
      %p108 = scmp.ne.s32.totalorder %s100, %s102
      %p109 = scmp.eq.s32.totalorder %s29, 1
      %p110 = por %p108, %p109
      %p111 = scmp.ne.s32.totalorder %s102, %s103
      %p112 = scmp.eq.s32.totalorder %s29, 0
      %p113 = por %p111, %p112
      %p114 = scmp.ne.s32.totalorder %s102, %s103
      %p115 = scmp.eq.s32.totalorder %s30, 1
      %p116 = por %p114, %p115
      %p118 = scmp.ne.s32.totalorder %s103, %s117
      %p119 = scmp.eq.s32.totalorder %s30, 0
      %p120 = por %p118, %p119
      %s122 = sadd.s32 %s121, 1
      %p125 = scmp.eq.s32.totalorder %s24, 1
      %p126 = scmp.ne.s32.totalorder %s121, %s123
      %p127 = scmp.eq.s32.totalorder %s24, 0
      %p128 = por %p126, %p127
      %p129 = scmp.ne.s32.totalorder %s121, %s123
      %p130 = scmp.eq.s32.totalorder %s29, 1
      %p131 = por %p129, %p130
      %p132 = scmp.ne.s32.totalorder %s123, %s124
      %p133 = scmp.eq.s32.totalorder %s29, 0
      %p134 = por %p132, %p133
      %p135 = scmp.ne.s32.totalorder %s123, %s124
      %p136 = scmp.eq.s32.totalorder %s30, 1
      %p137 = por %p135, %p136
      %p139 = scmp.ne.s32.totalorder %s124, %s138
      %p140 = scmp.eq.s32.totalorder %s30, 0
      %p141 = por %p139, %p140
      %s143 = sadd.s32 %s142, 1
      %p146 = scmp.eq.s32.totalorder %s24, 1
      %p147 = scmp.ne.s32.totalorder %s142, %s144
      %p148 = scmp.eq.s32.totalorder %s24, 0
      %p149 = por %p147, %p148
      %p150 = scmp.ne.s32.totalorder %s142, %s144
      %p151 = scmp.eq.s32.totalorder %s29, 1
      %p152 = por %p150, %p151
      %p153 = scmp.ne.s32.totalorder %s144, %s145
      %p154 = scmp.eq.s32.totalorder %s29, 0
      %p155 = por %p153, %p154
      %p156 = scmp.ne.s32.totalorder %s144, %s145
      %p157 = scmp.eq.s32.totalorder %s30, 1
      %p158 = por %p156, %p157
      %p160 = scmp.ne.s32.totalorder %s145, %s159
      %p161 = scmp.eq.s32.totalorder %s30, 0
      %p162 = por %p160, %p161
      %s164 = sadd.s32 %s163, 1
      %p167 = scmp.eq.s32.totalorder %s24, 1
      %p168 = scmp.ne.s32.totalorder %s163, %s165
      %p169 = scmp.eq.s32.totalorder %s24, 0
      %p170 = por %p168, %p169
      %p171 = scmp.ne.s32.totalorder %s163, %s165
      %p172 = scmp.eq.s32.totalorder %s29, 1
      %p173 = por %p171, %p172
      %p174 = scmp.ne.s32.totalorder %s165, %s166
      %p175 = scmp.eq.s32.totalorder %s29, 0
      %p176 = por %p174, %p175
      %p177 = scmp.ne.s32.totalorder %s165, %s166
      %p178 = scmp.eq.s32.totalorder %s30, 1
      %p179 = por %p177, %p178
      %p181 = scmp.ne.s32.totalorder %s166, %s180
      %p182 = scmp.eq.s32.totalorder %s30, 0
      %p183 = por %p181, %p182
      %s185 = sadd.s32 %s184, 1
      %p188 = scmp.eq.s32.totalorder %s24, 1
      %p189 = scmp.ne.s32.totalorder %s184, %s186
      %p190 = scmp.eq.s32.totalorder %s24, 0
      %p191 = por %p189, %p190
      %p192 = scmp.ne.s32.totalorder %s184, %s186
      %p193 = scmp.eq.s32.totalorder %s29, 1
      %p194 = por %p192, %p193
      %p195 = scmp.ne.s32.totalorder %s186, %s187
      %p196 = scmp.eq.s32.totalorder %s29, 0
      %p197 = por %p195, %p196
      %p198 = scmp.ne.s32.totalorder %s186, %s187
      %p199 = scmp.eq.s32.totalorder %s30, 1
      %p200 = por %p198, %p199
      %p202 = scmp.ne.s32.totalorder %s187, %s201
      %p203 = scmp.eq.s32.totalorder %s30, 0
      %p204 = por %p202, %p203
      %s206 = sadd.s32 %s205, 1
      %p209 = scmp.eq.s32.totalorder %s24, 1
      %p210 = scmp.ne.s32.totalorder %s205, %s207
      %p211 = scmp.eq.s32.totalorder %s24, 0
      %p212 = por %p210, %p211
      %p213 = scmp.ne.s32.totalorder %s205, %s207
      %p214 = scmp.eq.s32.totalorder %s29, 1
      %p215 = por %p213, %p214
      %p216 = scmp.ne.s32.totalorder %s207, %s208
      %p217 = scmp.eq.s32.totalorder %s29, 0
      %p218 = por %p216, %p217
      %p219 = scmp.ne.s32.totalorder %s207, %s208
      %p220 = scmp.eq.s32.totalorder %s30, 1
      %p221 = por %p219, %p220
      %p223 = scmp.ne.s32.totalorder %s208, %s222
      %p224 = scmp.eq.s32.totalorder %s30, 0
      %p225 = por %p223, %p224
      %s227 = sadd.s32 %s226, 1
      %p230 = scmp.eq.s32.totalorder %s24, 1
      %p231 = scmp.ne.s32.totalorder %s226, %s228
      %p232 = scmp.eq.s32.totalorder %s24, 0
      %p233 = por %p231, %p232
      %p234 = scmp.ne.s32.totalorder %s226, %s228
      %p235 = scmp.eq.s32.totalorder %s29, 1
      %p236 = por %p234, %p235
      %p237 = scmp.ne.s32.totalorder %s228, %s229
      %p238 = scmp.eq.s32.totalorder %s29, 0
      %p239 = por %p237, %p238
      %p240 = scmp.ne.s32.totalorder %s228, %s229
      %p241 = scmp.eq.s32.totalorder %s30, 1
      %p242 = por %p240, %p241
      %p244 = scmp.ne.s32.totalorder %s229, %s243
      %p245 = scmp.eq.s32.totalorder %s30, 0
      %p246 = por %p244, %p245
      %s248 = sadd.s32 %s247, 1
      %p251 = scmp.eq.s32.totalorder %s24, 1
      %p252 = scmp.ne.s32.totalorder %s247, %s249
      %p253 = scmp.eq.s32.totalorder %s24, 0
      %p254 = por %p252, %p253
      %p255 = scmp.ne.s32.totalorder %s247, %s249
      %p256 = scmp.eq.s32.totalorder %s29, 1
      %p257 = por %p255, %p256
      %p258 = scmp.ne.s32.totalorder %s249, %s250
      %p259 = scmp.eq.s32.totalorder %s29, 0
      %p260 = por %p258, %p259
      %p261 = scmp.ne.s32.totalorder %s249, %s250
      %p262 = scmp.eq.s32.totalorder %s30, 1
      %p263 = por %p261, %p262
      %p265 = scmp.ne.s32.totalorder %s250, %s264
      %p266 = scmp.eq.s32.totalorder %s30, 0
      %p267 = por %p265, %p266
      %s269 = sadd.s32 %s268, 1
      %p272 = scmp.eq.s32.totalorder %s24, 1
      %p273 = scmp.ne.s32.totalorder %s268, %s270
      %p274 = scmp.eq.s32.totalorder %s24, 0
      %p275 = por %p273, %p274
      %p276 = scmp.ne.s32.totalorder %s268, %s270
      %p277 = scmp.eq.s32.totalorder %s29, 1
      %p278 = por %p276, %p277
      %p279 = scmp.ne.s32.totalorder %s270, %s271
      %p280 = scmp.eq.s32.totalorder %s29, 0
      %p281 = por %p279, %p280
      %p282 = scmp.ne.s32.totalorder %s270, %s271
      %p283 = scmp.eq.s32.totalorder %s30, 1
      %p284 = por %p282, %p283
      %p286 = scmp.ne.s32.totalorder %s271, %s285
      %p287 = scmp.eq.s32.totalorder %s30, 0
      %p288 = por %p286, %p287
      %s289 = ssub.s32 %s24, %s31
      %p290 = scmp.eq.s32.totalorder %s289, 0
      %s292 = sadd.s32 %s291, 1
      %s293 = scalar_select %p290, %s291, %s292
      %p296 = pneg %p290
      %p297 = scmp.eq.s32.totalorder %s24, 1
      %p298 = por %p296, %p297
      %p299 = scmp.ne.s32.totalorder %s291, %s294
      %p300 = scmp.eq.s32.totalorder %s24, 0
      %p301 = por %p299, %p300
      %p302 = scmp.ne.s32.totalorder %s291, %s294
      %p303 = scmp.eq.s32.totalorder %s29, 1
      %p304 = por %p302, %p303
      %p305 = scmp.ne.s32.totalorder %s294, %s295
      %p306 = scmp.eq.s32.totalorder %s29, 0
      %p307 = por %p305, %p306
      %p308 = scmp.ne.s32.totalorder %s294, %s295
      %p309 = scmp.eq.s32.totalorder %s30, 1
      %p310 = por %p308, %p309
      %p312 = scmp.ne.s32.totalorder %s295, %s311
      %p313 = scmp.eq.s32.totalorder %s30, 0
      %p314 = por %p312, %p313
      %p315 = scmp.le.s32.totalorder 1, %s24
      %p316 = scmp.lt.s32.totalorder %s24, 3
      %p317 = pnand %p315, %p316
      %p318 = pneg %p317
      // Predicated region
      $region9: #{transformer_forward.3} parent=5 // pred_check
        _
      $region10: #{transformer_forward.3} parent=5 // pred_check_branch
        %320 = sbr.rel (%p317) target = $region12
      $region11: #{transformer_forward.3} parent=5 // pred_region
        %s321 = ssub.s32 %s24, 1
        // Predicated region
        $region13: #{transformer_forward.3} parent=11 // pred_check
          %p322 = pneg %p71
        $region14: #{transformer_forward.3} parent=11 // pred_check_branch
          %324 = sbr.rel (%p322) target = $region16
        $region15: #{transformer_forward.3} parent=11 // pred_region
          _
        $region16: #{transformer_forward.3} parent=11 // pred_fallthru
          _
        // Predicated region
        $region17: #{transformer_forward.3} parent=11 // pred_check
          %p325 = pneg %p92
        $region18: #{transformer_forward.3} parent=11 // pred_check_branch
          %327 = sbr.rel (%p325) target = $region20
        $region19: #{transformer_forward.3} parent=11 // pred_region
          _
        $region20: #{transformer_forward.3} parent=11 // pred_fallthru
          _
        // Predicated region
        $region21: #{transformer_forward.3} parent=11 // pred_check
          %p328 = pneg %p113
        $region22: #{transformer_forward.3} parent=11 // pred_check_branch
          %330 = sbr.rel (%p328) target = $region24
        $region23: #{transformer_forward.3} parent=11 // pred_region
          %332 = vsyncadd [#allocation3], 0
          %s333 = sshll.u32 %s3, 4
          %s334 = int_to_ptr.hbm [resolvable:$true] %s333
          %s335 = sshll.u32 [#allocation2], 4
          %s336 = int_to_ptr.vmem [resolvable:$true] %s335
          %341 = dma.hbm_to_vmem [thread:$0]  %s334, 3072, %s336, [#allocation3], 192, 192, 12
        $region24: #{transformer_forward.3} parent=11 // pred_fallthru
          _
        // Predicated region
        $region25: #{transformer_forward.3} parent=11 // pred_check
          %p342 = pneg %p134
        $region26: #{transformer_forward.3} parent=11 // pred_check_branch
          %344 = sbr.rel (%p342) target = $region28
        $region27: #{transformer_forward.3} parent=11 // pred_region
          %346 = vsyncadd [#allocation6], 0
          %s347 = sshll.u32 %s4, 4
          %s348 = int_to_ptr.hbm [resolvable:$true] %s347
          %s349 = sshll.u32 [#allocation5], 4
          %s350 = int_to_ptr.vmem [resolvable:$true] %s349
          %355 = dma.hbm_to_vmem [thread:$0]  %s348, 1024, %s350, [#allocation6], 64, 64, 4
        $region28: #{transformer_forward.3} parent=11 // pred_fallthru
          _
        // Predicated region
        $region29: #{transformer_forward.3} parent=11 // pred_check
          %p356 = pneg %p155
        $region30: #{transformer_forward.3} parent=11 // pred_check_branch
          %358 = sbr.rel (%p356) target = $region32
        $region31: #{transformer_forward.3} parent=11 // pred_region
          _
        $region32: #{transformer_forward.3} parent=11 // pred_fallthru
          _
        // Predicated region
        $region33: #{transformer_forward.3} parent=11 // pred_check
          %p359 = pneg %p176
        $region34: #{transformer_forward.3} parent=11 // pred_check_branch
          %361 = sbr.rel (%p359) target = $region36
        $region35: #{transformer_forward.3} parent=11 // pred_region
          _
        $region36: #{transformer_forward.3} parent=11 // pred_fallthru
          _
        // Predicated region
        $region37: #{transformer_forward.3} parent=11 // pred_check
          %p362 = pneg %p197
        $region38: #{transformer_forward.3} parent=11 // pred_check_branch
          %364 = sbr.rel (%p362) target = $region40
        $region39: #{transformer_forward.3} parent=11 // pred_region
          _
        $region40: #{transformer_forward.3} parent=11 // pred_fallthru
          _
        // Predicated region
        $region41: #{transformer_forward.3} parent=11 // pred_check
          %p365 = pneg %p218
        $region42: #{transformer_forward.3} parent=11 // pred_check_branch
          %367 = sbr.rel (%p365) target = $region44
        $region43: #{transformer_forward.3} parent=11 // pred_region
          %369 = vsyncadd [#allocation6], 0
          %s370 = sshll.u32 %s8, 4
          %s371 = int_to_ptr.hbm [resolvable:$true] %s370
          %s372 = sshll.u32 [#allocation7], 4
          %s373 = int_to_ptr.vmem [resolvable:$true] %s372
          %378 = dma.hbm_to_vmem [thread:$0]  %s371, 2048, %s373, [#allocation6], 128, 128, 8
        $region44: #{transformer_forward.3} parent=11 // pred_fallthru
          _
        // Predicated region
        $region45: #{transformer_forward.3} parent=11 // pred_check
          %p379 = pneg %p239
        $region46: #{transformer_forward.3} parent=11 // pred_check_branch
          %381 = sbr.rel (%p379) target = $region48
        $region47: #{transformer_forward.3} parent=11 // pred_region
          _
        $region48: #{transformer_forward.3} parent=11 // pred_fallthru
          _
        // Predicated region
        $region49: #{transformer_forward.3} parent=11 // pred_check
          %p382 = pneg %p260
        $region50: #{transformer_forward.3} parent=11 // pred_check_branch
          %384 = sbr.rel (%p382) target = $region52
        $region51: #{transformer_forward.3} parent=11 // pred_region
          %386 = vsyncadd [#allocation9], 0
          %s387 = sshll.u32 %s10, 4
          %s388 = int_to_ptr.hbm [resolvable:$true] %s387
          %s389 = sshll.u32 [#allocation8], 4
          %s390 = int_to_ptr.vmem [resolvable:$true] %s389
          %395 = dma.hbm_to_vmem [thread:$0]  %s388, 2048, %s390, [#allocation9], 64, 64, 4
        $region52: #{transformer_forward.3} parent=11 // pred_fallthru
          _
        // Predicated region
        $region53: #{transformer_forward.3} parent=11 // pred_check
          %p396 = pneg %p281
        $region54: #{transformer_forward.3} parent=11 // pred_check_branch
          %398 = sbr.rel (%p396) target = $region56
        $region55: #{transformer_forward.3} parent=11 // pred_region
          _
        $region56: #{transformer_forward.3} parent=11 // pred_fallthru
          _
      $region12: #{transformer_forward.3} parent=5 // pred_fallthru
        _
      %p399 = scmp.lt.s32.totalorder %s24, 2
      // Predicated region
      $region57: #{transformer_forward.3} parent=5 // pred_check
        %p400 = pneg %p399
      $region58: #{transformer_forward.3} parent=5 // pred_check_branch
        %402 = sbr.rel (%p400) target = $region60
      $region59: #{transformer_forward.3} parent=5 // pred_region
        // Predicated region
        $region61: #{transformer_forward.3} parent=59 // pred_check
          %p403 = pneg %p44
        $region62: #{transformer_forward.3} parent=59 // pred_check_branch
          %405 = sbr.rel (%p403) target = $region64
        $region63: #{transformer_forward.3} parent=59 // pred_region
          %p406 = scmp.lt.s32.totalorder %s24, 1
          %s407 = scalar_select %p406, %s24, 1
          %s408 = smul.addr %s407, 2
          %s409 = smul.addr %s408, 8
          %s410 = scalar_lea.vmem %s0, %s409
        $region64: #{transformer_forward.3} parent=59 // pred_fallthru
          _
      $region60: #{transformer_forward.3} parent=5 // pred_fallthru
        _
      %p411 = scmp.le.s32.totalorder 1, %s24
      %p412 = scmp.lt.s32.totalorder %s24, 3
      %p413 = pnand %p411, %p412
      %p414 = pneg %p413
      // Predicated region
      $region65: #{transformer_forward.3} parent=5 // pred_check
        _
      $region66: #{transformer_forward.3} parent=5 // pred_check_branch
        %416 = sbr.rel (%p413) target = $region68
      $region67: #{transformer_forward.3} parent=5 // pred_region
        %s417 = ssub.s32 %s24, 1
        // Predicated region
        $region69: #{transformer_forward.3} parent=67 // pred_check
          %p418 = pneg %p113
        $region70: #{transformer_forward.3} parent=67 // pred_check_branch
          %420 = sbr.rel (%p418) target = $region72
        $region71: #{transformer_forward.3} parent=67 // pred_region
          %422 = dma.done [#allocation3], 3072
        $region72: #{transformer_forward.3} parent=67 // pred_fallthru
          _
        // Predicated region
        $region73: #{transformer_forward.3} parent=67 // pred_check
          %p423 = pneg %p134
        $region74: #{transformer_forward.3} parent=67 // pred_check_branch
          %425 = sbr.rel (%p423) target = $region76
        $region75: #{transformer_forward.3} parent=67 // pred_region
          %427 = dma.done [#allocation6], 1024
        $region76: #{transformer_forward.3} parent=67 // pred_fallthru
          _
        // Predicated region
        $region77: #{transformer_forward.3} parent=67 // pred_check
          %p428 = pneg %p218
        $region78: #{transformer_forward.3} parent=67 // pred_check_branch
          %430 = sbr.rel (%p428) target = $region80
        $region79: #{transformer_forward.3} parent=67 // pred_region
          %432 = dma.done [#allocation6], 2048
        $region80: #{transformer_forward.3} parent=67 // pred_fallthru
          _
        // Predicated region
        $region81: #{transformer_forward.3} parent=67 // pred_check
          %p433 = pneg %p260
        $region82: #{transformer_forward.3} parent=67 // pred_check_branch
          %435 = sbr.rel (%p433) target = $region84
        $region83: #{transformer_forward.3} parent=67 // pred_region
          %437 = dma.done [#allocation9], 2048
        $region84: #{transformer_forward.3} parent=67 // pred_fallthru
          _
        %p438 = scmp.lt.s32.totalorder %s29, 1
        %s439 = scalar_select %p438, %s29, 1
        %s440 = smul.addr %s439, 2
        %s441 = smul.addr %s440, 8
        %s442 = scalar_lea.vmem %s0, %s441
        %p443 = pneg %p50
        %p444 = pneg %p47
        %p445 = pneg %p71
        %p446 = pneg %p68
        %p447 = pneg %p92
        %p448 = pneg %p89
        %p449 = pneg %p113
        %p450 = pneg %p110
        %p451 = pneg %p134
        %p452 = pneg %p131
        %p453 = pneg %p155
        %p454 = pneg %p152
        %p455 = pneg %p176
        %p456 = pneg %p173
        %p457 = pneg %p197
        %p458 = pneg %p194
        %p459 = pneg %p218
        %p460 = pneg %p215
        %p461 = pneg %p239
        %p462 = pneg %p236
        %p463 = pneg %p260
        %p464 = pneg %p257
        %p465 = pneg %p281
        %p466 = pneg %p278
        %p467 = pneg %p307
        %p468 = pneg %p304
        %s469 = sand.u32 %s294, 1
        %s470 = scalar_lea.sflag [#allocation4], %s469
        %s471 = sand.u32 %s294, 1
        %s472 = smul.addr %s471, 16
        %s473 = scalar_lea.vmem [#allocation10], %s472
        %p474 = scmp.lt.s32.totalorder %s29, 1
        %s475 = scalar_select %p474, %s29, 1
        %s476 = smul.addr %s475, 2
        %s477 = smul.addr %s476, 8
        %s478 = scalar_lea.vmem %s0, %s477
        %v480 = vld [vmem:[%s478] sm:$0xff]
        %v481 = vld [vmem:[%s478 + $0x8] sm:$0xff]
        %v482 = vld [vmem:[%s1] sm:$0x1]
        %v483 = vld [vmem:[%s2] sm:$0x1]
        %484 = vadd.xlane.f32.xlu0 %v480
        %v485 = vpop.xlane.xlu0 %484
        %486 = vadd.xlane.f32.xlu0 %v481
        %v487 = vpop.xlane.xlu0 %486
        %v488 = vrcp.pop 128.0
        %v489 = vmul.f32 128.0, %v488
        %v490 = vsub.f32 1.0, %v489
        %v491 = vmul.f32 %v488, %v490
        %v492 = vadd.f32 %v488, %v491
        %vm493 = vweird.f32 %v488
        %v494 = vsel %vm493, %v488, %v492
        %v495 = vmul.f32 %v485, %v494
        %v496 = vmul.f32 %v487, %v494
        %v497 = vsub.f32 %v480, %v495
        %v498 = vsub.f32 %v481, %v496
        %v499 = vmul.f32 %v497, %v497
        %v500 = vmul.f32 %v498, %v498
        %501 = vadd.xlane.f32.xlu0 %v499
        %v502 = vpop.xlane.xlu0 %501
        %503 = vadd.xlane.f32.xlu0 %v500
        %v504 = vpop.xlane.xlu0 %503
        %v505 = vmul.f32 %v502, %v494
        %v506 = vmul.f32 %v504, %v494
        %v507 = vadd.f32 %v505, 1e-05
        %v508 = vadd.f32 %v506, 1e-05
        %v509 = vrsqrt.pop %v507
        %v510 = vmul.f32 %v509, %v507
        %v511 = vmul.f32 %v510, %v509
        %v512 = vmul.f32 0.5, %v511
        %v513 = vsub.f32 1.5, %v512
        %v514 = vmul.f32 %v509, %v513
        %vm515 = vweird.f32 %v507
        %vm516 = vweird.f32 %v509
        %vm517 = vmor %vm515, %vm516
        %v518 = vsel %vm517, %v509, %v514
        %v519 = vrsqrt.pop %v508
        %v520 = vmul.f32 %v519, %v508
        %v521 = vmul.f32 %v520, %v519
        %v522 = vmul.f32 0.5, %v521
        %v523 = vsub.f32 1.5, %v522
        %v524 = vmul.f32 %v519, %v523
        %vm525 = vweird.f32 %v508
        %vm526 = vweird.f32 %v519
        %vm527 = vmor %vm525, %vm526
        %v528 = vsel %vm527, %v519, %v524
        %v529 = vmul.f32 %v497, %v518
        %v530 = vmul.f32 %v498, %v528
        %v532 = vperm.slane %v482, 0
        %v534 = vmul.f32 %v529, %v532
        %v535 = vmul.f32 %v530, %v532
        %v537 = vperm.slane %v483, 0
        %v539 = vadd.f32 %v534, %v537
        %v540 = vadd.f32 %v535, %v537
        %v541 = vpack.c.bf16 %v540, %v539
        %v542 = vld [vmem:[#allocation2] sm:$0xff]
        %v543 = vld [vmem:[#allocation2 + $0x8] sm:$0xf]
        %v544 = vld [vmem:[#allocation2 + $0xc] sm:$0xff]
        %v545 = vld [vmem:[#allocation2 + $0x14] sm:$0xf]
        %v546 = vld [vmem:[#allocation2 + $0x18] sm:$0xff]
        %v547 = vld [vmem:[#allocation2 + $0x20] sm:$0xf]
        %v548 = vld [vmem:[#allocation2 + $0x24] sm:$0xff]
        %v549 = vld [vmem:[#allocation2 + $0x2c] sm:$0xf]
        %v550 = vld [vmem:[#allocation2 + $0x30] sm:$0xff]
        %v551 = vld [vmem:[#allocation2 + $0x38] sm:$0xf]
        %v552 = vld [vmem:[#allocation2 + $0x3c] sm:$0xff]
        %v553 = vld [vmem:[#allocation2 + $0x44] sm:$0xf]
        %v554 = vld [vmem:[#allocation2 + $0x48] sm:$0xff]
        %v555 = vld [vmem:[#allocation2 + $0x50] sm:$0xf]
        %v556 = vld [vmem:[#allocation2 + $0x54] sm:$0xff]
        %v557 = vld [vmem:[#allocation2 + $0x5c] sm:$0xf]
        %v558 = vld [vmem:[#allocation2 + $0x60] sm:$0xff]
        %v559 = vld [vmem:[#allocation2 + $0x68] sm:$0xf]
        %v560 = vld [vmem:[#allocation2 + $0x6c] sm:$0xff]
        %v561 = vld [vmem:[#allocation2 + $0x74] sm:$0xf]
        %v562 = vld [vmem:[#allocation2 + $0x78] sm:$0xff]
        %v563 = vld [vmem:[#allocation2 + $0x80] sm:$0xf]
        %v564 = vld [vmem:[#allocation2 + $0x84] sm:$0xff]
        %v565 = vld [vmem:[#allocation2 + $0x8c] sm:$0xf]
        %v566 = vld [vmem:[#allocation2 + $0x90] sm:$0xff]
        %v567 = vld [vmem:[#allocation2 + $0x98] sm:$0xf]
        %v568 = vld [vmem:[#allocation2 + $0x9c] sm:$0xff]
        %v569 = vld [vmem:[#allocation2 + $0xa4] sm:$0xf]
        %v570 = vld [vmem:[#allocation2 + $0xa8] sm:$0xff]
        %v571 = vld [vmem:[#allocation2 + $0xb0] sm:$0xf]
        %v572 = vld [vmem:[#allocation2 + $0xb4] sm:$0xff]
        %v573 = vld [vmem:[#allocation2 + $0xbc] sm:$0xf]
        %v606 = vunpack.c.l.b16 %v542
        %v607 = vunpack.c.h.b16 %v542
        %v608 = vunpack.c.l.b16 %v543
        %v609 = vunpack.c.l.b16 %v544
        %v610 = vunpack.c.h.b16 %v544
        %v611 = vunpack.c.l.b16 %v545
        %v612 = vunpack.c.l.b16 %v546
        %v613 = vunpack.c.h.b16 %v546
        %v614 = vunpack.c.l.b16 %v547
        %v615 = vunpack.c.l.b16 %v548
        %v616 = vunpack.c.h.b16 %v548
        %v617 = vunpack.c.l.b16 %v549
        %v618 = vunpack.c.l.b16 %v550
        %v619 = vunpack.c.h.b16 %v550
        %v620 = vunpack.c.l.b16 %v551
        %v621 = vunpack.c.l.b16 %v552
        %v622 = vunpack.c.h.b16 %v552
        %v623 = vunpack.c.l.b16 %v553
        %v624 = vunpack.c.l.b16 %v554
        %v625 = vunpack.c.h.b16 %v554
        %v626 = vunpack.c.l.b16 %v555
        %v627 = vunpack.c.l.b16 %v556
        %v628 = vunpack.c.h.b16 %v556
        %v629 = vunpack.c.l.b16 %v557
        %v630 = vunpack.c.l.b16 %v558
        %v631 = vunpack.c.h.b16 %v558
        %v632 = vunpack.c.l.b16 %v559
        %v633 = vunpack.c.l.b16 %v560
        %v634 = vunpack.c.h.b16 %v560
        %v635 = vunpack.c.l.b16 %v561
        %v636 = vunpack.c.l.b16 %v562
        %v637 = vunpack.c.h.b16 %v562
        %v638 = vunpack.c.l.b16 %v563
        %v639 = vunpack.c.l.b16 %v564
        %v640 = vunpack.c.h.b16 %v564
        %v641 = vunpack.c.l.b16 %v565
        %v642 = vunpack.c.l.b16 %v566
        %v643 = vunpack.c.h.b16 %v566
        %v644 = vunpack.c.l.b16 %v567
        %v645 = vunpack.c.l.b16 %v568
        %v646 = vunpack.c.h.b16 %v568
        %v647 = vunpack.c.l.b16 %v569
        %v648 = vunpack.c.l.b16 %v570
        %v649 = vunpack.c.h.b16 %v570
        %v650 = vunpack.c.l.b16 %v571
        %v651 = vunpack.c.l.b16 %v572
        %v652 = vunpack.c.h.b16 %v572
        %v653 = vunpack.c.l.b16 %v573
        %v654 = vpack.c.b16 %v609, %v606
        %v655 = vpack.c.b16 %v610, %v607
        %v656 = vpack.c.b16 %v611, %v608
        %v657 = vpack.c.b16 %v615, %v612
        %v658 = vpack.c.b16 %v616, %v613
        %v659 = vpack.c.b16 %v617, %v614
        %v660 = vpack.c.b16 %v621, %v618
        %v661 = vpack.c.b16 %v622, %v619
        %v662 = vpack.c.b16 %v623, %v620
        %v663 = vpack.c.b16 %v627, %v624
        %v664 = vpack.c.b16 %v628, %v625
        %v665 = vpack.c.b16 %v629, %v626
        %v666 = vpack.c.b16 %v633, %v630
        %v667 = vpack.c.b16 %v634, %v631
        %v668 = vpack.c.b16 %v635, %v632
        %v669 = vpack.c.b16 %v639, %v636
        %v670 = vpack.c.b16 %v640, %v637
        %v671 = vpack.c.b16 %v641, %v638
        %v672 = vpack.c.b16 %v645, %v642
        %v673 = vpack.c.b16 %v646, %v643
        %v674 = vpack.c.b16 %v647, %v644
        %v675 = vpack.c.b16 %v651, %v648
        %v676 = vpack.c.b16 %v652, %v649
        %v677 = vpack.c.b16 %v653, %v650
        %702 = vmatpush.bf16.msra.mxu0 %v675
        %703 = vmatpush.bf16.msra.mxu0 %v672
        %704 = vmatpush.bf16.msra.mxu0 %v669
        %705 = vmatpush.bf16.msra.mxu0 %v666
        %706 = vmatpush.bf16.msra.mxu0 %v663
        %707 = vmatpush.bf16.msra.mxu0 %v660
        %708 = vmatpush.bf16.msra.mxu0 %v657
        %709 = vmatpush.bf16.msra.mxu0 %v654
        %710 = vmatmul.bf16.gmra.mxu0 %v541
        %v711 = vpop.f32.mrf.mxu0
        %v712 = vadd.f32 0.0, %v711
        %v713 = vpop.f32.mrf.mxu0
        %v714 = vadd.f32 0.0, %v713
        %715 = vdwg.mxu0
        %716 = vmatpush.bf16.msra.mxu0 %v676
        %717 = vmatpush.bf16.msra.mxu0 %v673
        %718 = vmatpush.bf16.msra.mxu0 %v670
        %719 = vmatpush.bf16.msra.mxu0 %v667
        %720 = vmatpush.bf16.msra.mxu0 %v664
        %721 = vmatpush.bf16.msra.mxu0 %v661
        %722 = vmatpush.bf16.msra.mxu0 %v658
        %723 = vmatpush.bf16.msra.mxu0 %v655
        %724 = vmatmul.bf16.gmra.mxu0 %v541
        %v725 = vpop.f32.mrf.mxu0
        %v726 = vadd.f32 0.0, %v725
        %v727 = vpop.f32.mrf.mxu0
        %v728 = vadd.f32 0.0, %v727
        %729 = vdwg.mxu0
        %730 = vmatpush.bf16.msra.mxu0 %v677
        %731 = vmatpush.bf16.msra.mxu0 %v674
        %732 = vmatpush.bf16.msra.mxu0 %v671
        %733 = vmatpush.bf16.msra.mxu0 %v668
        %734 = vmatpush.bf16.msra.mxu0 %v665
        %735 = vmatpush.bf16.msra.mxu0 %v662
        %736 = vmatpush.bf16.msra.mxu0 %v659
        %737 = vmatpush.bf16.msra.mxu0 %v656
        %738 = vmatmul.bf16.gmra.mxu0 %v541
        %v739 = vpop.f32.mrf.mxu0
        %v740 = vadd.f32 0.0, %v739
        %v741 = vpop.f32.mrf.mxu0
        %v742 = vadd.f32 0.0, %v741
        %743 = vdwg.mxu0
        %746 = vrot.lane.b32.xlu0 %v712, 96
        %v747 = vpop.permute.xlu0 %746
        %748 = vrot.lane.b32.xlu0 %v714, 96
        %v749 = vpop.permute.xlu0 %748
        %752 = vrot.lane.b32.xlu0 %v712, 64
        %v753 = vpop.permute.xlu0 %752
        %754 = vrot.lane.b32.xlu0 %v714, 64
        %v755 = vpop.permute.xlu0 %754
        %758 = vrot.lane.b32.xlu0 %v712, 32
        %v759 = vpop.permute.xlu0 %758
        %760 = vrot.lane.b32.xlu0 %v714, 32
        %v761 = vpop.permute.xlu0 %760
        %v764 = vrot.slane %v753, 4
        %vm765 = vcmask 1047556
        %v766 = vsel %vm765, %v764, %v712
        %v767 = vrot.slane %v712, 4
        %v768 = vsel %vm765, %v753, %v767
        %v770 = vunpack.c.l.s4 1983009808
        %v771 = vunpack.c.0.s8 %v770
        %v772 = vperm.slane %v766, %v771
        %v774 = vunpack.c.l.s4 1983009808
        %v775 = vunpack.c.0.s8 %v774
        %v776 = vperm.slane %v768, %v775
        %v777 = vrot.slane %v759, 4
        %v778 = vsel %vm765, %v777, %v747
        %v779 = vrot.slane %v747, 4
        %v780 = vsel %vm765, %v759, %v779
        %v782 = vunpack.c.l.s4 1983009808
        %v783 = vunpack.c.0.s8 %v782
        %v784 = vperm.slane %v778, %v783
        %v786 = vunpack.c.l.s4 1983009808
        %v787 = vunpack.c.0.s8 %v786
        %v788 = vperm.slane %v780, %v787
        %v789 = vrot.slane %v784, 4
        %v790 = vsel %vm765, %v789, %v772
        %v791 = vrot.slane %v772, 4
        %v792 = vsel %vm765, %v784, %v791
        %v794 = vunpack.c.l.s4 1934713408
        %v795 = vunpack.c.0.s8 %v794
        %v796 = vperm.slane %v790, %v795
        %v798 = vunpack.c.l.s4 1934713408
        %v799 = vunpack.c.0.s8 %v798
        %v800 = vperm.slane %v792, %v799
        %v801 = vrot.slane %v788, 4
        %v802 = vsel %vm765, %v801, %v776
        %v803 = vrot.slane %v776, 4
        %v804 = vsel %vm765, %v788, %v803
        %v806 = vunpack.c.l.s4 1934713408
        %v807 = vunpack.c.0.s8 %v806
        %v808 = vperm.slane %v802, %v807
        %v810 = vunpack.c.l.s4 1934713408
        %v811 = vunpack.c.0.s8 %v810
        %v812 = vperm.slane %v804, %v811
        %v813 = vrot.slane %v796, 4
        %v814 = vsel %vm765, 0.0, %v813
        %v815 = vrot.slane %v800, 4
        %v816 = vsel %vm765, 0.0, %v815
        %v817 = vrot.slane %v808, 4
        %v818 = vsel %vm765, 0.0, %v817
        %v819 = vrot.slane %v812, 4
        %v820 = vsel %vm765, 0.0, %v819
        %v821 = vrot.slane %v755, 4
        %v822 = vsel %vm765, %v821, %v714
        %v823 = vrot.slane %v714, 4
        %v824 = vsel %vm765, %v755, %v823
        %v826 = vunpack.c.l.s4 1983009808
        %v827 = vunpack.c.0.s8 %v826
        %v828 = vperm.slane %v822, %v827
        %v830 = vunpack.c.l.s4 1983009808
        %v831 = vunpack.c.0.s8 %v830
        %v832 = vperm.slane %v824, %v831
        %v833 = vrot.slane %v761, 4
        %v834 = vsel %vm765, %v833, %v749
        %v835 = vrot.slane %v749, 4
        %v836 = vsel %vm765, %v761, %v835
        %v838 = vunpack.c.l.s4 1983009808
        %v839 = vunpack.c.0.s8 %v838
        %v840 = vperm.slane %v834, %v839
        %v842 = vunpack.c.l.s4 1983009808
        %v843 = vunpack.c.0.s8 %v842
        %v844 = vperm.slane %v836, %v843
        %v845 = vrot.slane %v840, 4
        %v846 = vsel %vm765, %v845, %v828
        %v847 = vrot.slane %v828, 4
        %v848 = vsel %vm765, %v840, %v847
        %v850 = vunpack.c.l.s4 1934713408
        %v851 = vunpack.c.0.s8 %v850
        %v852 = vperm.slane %v846, %v851
        %v854 = vunpack.c.l.s4 1934713408
        %v855 = vunpack.c.0.s8 %v854
        %v856 = vperm.slane %v848, %v855
        %v857 = vrot.slane %v844, 4
        %v858 = vsel %vm765, %v857, %v832
        %v859 = vrot.slane %v832, 4
        %v860 = vsel %vm765, %v844, %v859
        %v862 = vunpack.c.l.s4 1934713408
        %v863 = vunpack.c.0.s8 %v862
        %v864 = vperm.slane %v858, %v863
        %v866 = vunpack.c.l.s4 1934713408
        %v867 = vunpack.c.0.s8 %v866
        %v868 = vperm.slane %v860, %v867
        %v869 = vrot.slane %v852, 4
        %v870 = vsel %vm765, 0.0, %v869
        %v871 = vrot.slane %v856, 4
        %v872 = vsel %vm765, 0.0, %v871
        %v873 = vrot.slane %v864, 4
        %v874 = vsel %vm765, 0.0, %v873
        %v875 = vrot.slane %v868, 4
        %v876 = vsel %vm765, 0.0, %v875
        %v877 = vsel %vm765, %v815, %v796
        %v879 = vunpack.c.l.s4 1983009808
        %v880 = vunpack.c.0.s8 %v879
        %v881 = vperm.slane %v877, %v880
        %v882 = vrot.slane %v816, 4
        %v883 = vsel %vm765, %v882, %v814
        %v885 = vunpack.c.l.s4 1983009808
        %v886 = vunpack.c.0.s8 %v885
        %v887 = vperm.slane %v883, %v886
        %v888 = vsel %vm765, %v819, %v808
        %v890 = vunpack.c.l.s4 1983009808
        %v891 = vunpack.c.0.s8 %v890
        %v892 = vperm.slane %v888, %v891
        %v893 = vrot.slane %v820, 4
        %v894 = vsel %vm765, %v893, %v818
        %v896 = vunpack.c.l.s4 1983009808
        %v897 = vunpack.c.0.s8 %v896
        %v898 = vperm.slane %v894, %v897
        %v899 = vrot.slane %v887, 4
        %v900 = vsel %vm765, %v899, %v881
        %v901 = vrot.slane %v881, 4
        %v902 = vsel %vm765, %v887, %v901
        %v904 = vunpack.c.l.s4 1934713408
        %v905 = vunpack.c.0.s8 %v904
        %v906 = vperm.slane %v900, %v905
        %v908 = vunpack.c.l.s4 1934713408
        %v909 = vunpack.c.0.s8 %v908
        %v910 = vperm.slane %v902, %v909
        %v911 = vrot.slane %v898, 4
        %v912 = vsel %vm765, %v911, %v892
        %v913 = vrot.slane %v892, 4
        %v914 = vsel %vm765, %v898, %v913
        %v916 = vunpack.c.l.s4 1934713408
        %v917 = vunpack.c.0.s8 %v916
        %v918 = vperm.slane %v912, %v917
        %v920 = vunpack.c.l.s4 1934713408
        %v921 = vunpack.c.0.s8 %v920
        %v922 = vperm.slane %v914, %v921
        %v923 = vrot.slane %v918, 4
        %v924 = vsel %vm765, %v923, %v906
        %v925 = vrot.slane %v906, 4
        %v926 = vsel %vm765, %v918, %v925
        %v927 = vrot.slane %v922, 4
        %v928 = vsel %vm765, %v927, %v910
        %v929 = vrot.slane %v910, 4
        %v930 = vsel %vm765, %v922, %v929
        %v931 = vsel %vm765, %v871, %v852
        %v933 = vunpack.c.l.s4 1983009808
        %v934 = vunpack.c.0.s8 %v933
        %v935 = vperm.slane %v931, %v934
        %v936 = vrot.slane %v872, 4
        %v937 = vsel %vm765, %v936, %v870
        %v939 = vunpack.c.l.s4 1983009808
        %v940 = vunpack.c.0.s8 %v939
        %v941 = vperm.slane %v937, %v940
        %v942 = vsel %vm765, %v875, %v864
        %v944 = vunpack.c.l.s4 1983009808
        %v945 = vunpack.c.0.s8 %v944
        %v946 = vperm.slane %v942, %v945
        %v947 = vrot.slane %v876, 4
        %v948 = vsel %vm765, %v947, %v874
        %v950 = vunpack.c.l.s4 1983009808
        %v951 = vunpack.c.0.s8 %v950
        %v952 = vperm.slane %v948, %v951
        %v953 = vrot.slane %v941, 4
        %v954 = vsel %vm765, %v953, %v935
        %v955 = vrot.slane %v935, 4
        %v956 = vsel %vm765, %v941, %v955
        %v958 = vunpack.c.l.s4 1934713408
        %v959 = vunpack.c.0.s8 %v958
        %v960 = vperm.slane %v954, %v959
        %v962 = vunpack.c.l.s4 1934713408
        %v963 = vunpack.c.0.s8 %v962
        %v964 = vperm.slane %v956, %v963
        %v965 = vrot.slane %v952, 4
        %v966 = vsel %vm765, %v965, %v946
        %v967 = vrot.slane %v946, 4
        %v968 = vsel %vm765, %v952, %v967
        %v970 = vunpack.c.l.s4 1934713408
        %v971 = vunpack.c.0.s8 %v970
        %v972 = vperm.slane %v966, %v971
        %v974 = vunpack.c.l.s4 1934713408
        %v975 = vunpack.c.0.s8 %v974
        %v976 = vperm.slane %v968, %v975
        %v977 = vrot.slane %v972, 4
        %v978 = vsel %vm765, %v977, %v960
        %v979 = vrot.slane %v960, 4
        %v980 = vsel %vm765, %v972, %v979
        %v981 = vrot.slane %v976, 4
        %v982 = vsel %vm765, %v981, %v964
        %v983 = vrot.slane %v964, 4
        %v984 = vsel %vm765, %v976, %v983
        %v985 = vpack.c.bf16 %v924, %v924
        %v986 = vpack.c.bf16 %v978, %v978
        %v987 = vpack.c.bf16 %v926, %v926
        %v988 = vpack.c.bf16 %v980, %v980
        %v989 = vpack.c.bf16 %v928, %v928
        %v990 = vpack.c.bf16 %v982, %v982
        %v991 = vpack.c.bf16 %v930, %v930
        %v992 = vpack.c.bf16 %v984, %v984
        %995 = vrot.lane.b32.xlu0 %v726, 96
        %v996 = vpop.permute.xlu0 %995
        %997 = vrot.lane.b32.xlu0 %v728, 96
        %v998 = vpop.permute.xlu0 %997
        %1001 = vrot.lane.b32.xlu0 %v726, 64
        %v1002 = vpop.permute.xlu0 %1001
        %1003 = vrot.lane.b32.xlu0 %v728, 64
        %v1004 = vpop.permute.xlu0 %1003
        %1007 = vrot.lane.b32.xlu0 %v726, 32
        %v1008 = vpop.permute.xlu0 %1007
        %1009 = vrot.lane.b32.xlu0 %v728, 32
        %v1010 = vpop.permute.xlu0 %1009
        %v1013 = vrot.slane %v1002, 4
        %v1014 = vsel %vm765, %v1013, %v726
        %v1015 = vrot.slane %v726, 4
        %v1016 = vsel %vm765, %v1002, %v1015
        %v1018 = vunpack.c.l.s4 1983009808
        %v1019 = vunpack.c.0.s8 %v1018
        %v1020 = vperm.slane %v1014, %v1019
        %v1022 = vunpack.c.l.s4 1983009808
        %v1023 = vunpack.c.0.s8 %v1022
        %v1024 = vperm.slane %v1016, %v1023
        %v1025 = vrot.slane %v1008, 4
        %v1026 = vsel %vm765, %v1025, %v996
        %v1027 = vrot.slane %v996, 4
        %v1028 = vsel %vm765, %v1008, %v1027
        %v1030 = vunpack.c.l.s4 1983009808
        %v1031 = vunpack.c.0.s8 %v1030
        %v1032 = vperm.slane %v1026, %v1031
        %v1034 = vunpack.c.l.s4 1983009808
        %v1035 = vunpack.c.0.s8 %v1034
        %v1036 = vperm.slane %v1028, %v1035
        %v1037 = vrot.slane %v1032, 4
        %v1038 = vsel %vm765, %v1037, %v1020
        %v1039 = vrot.slane %v1020, 4
        %v1040 = vsel %vm765, %v1032, %v1039
        %v1042 = vunpack.c.l.s4 1934713408
        %v1043 = vunpack.c.0.s8 %v1042
        %v1044 = vperm.slane %v1038, %v1043
        %v1046 = vunpack.c.l.s4 1934713408
        %v1047 = vunpack.c.0.s8 %v1046
        %v1048 = vperm.slane %v1040, %v1047
        %v1049 = vrot.slane %v1036, 4
        %v1050 = vsel %vm765, %v1049, %v1024
        %v1051 = vrot.slane %v1024, 4
        %v1052 = vsel %vm765, %v1036, %v1051
        %v1054 = vunpack.c.l.s4 1934713408
        %v1055 = vunpack.c.0.s8 %v1054
        %v1056 = vperm.slane %v1050, %v1055
        %v1058 = vunpack.c.l.s4 1934713408
        %v1059 = vunpack.c.0.s8 %v1058
        %v1060 = vperm.slane %v1052, %v1059
        %v1061 = vrot.slane %v1044, 4
        %v1062 = vsel %vm765, 0.0, %v1061
        %v1063 = vrot.slane %v1048, 4
        %v1064 = vsel %vm765, 0.0, %v1063
        %v1065 = vrot.slane %v1056, 4
        %v1066 = vsel %vm765, 0.0, %v1065
        %v1067 = vrot.slane %v1060, 4
        %v1068 = vsel %vm765, 0.0, %v1067
        %v1069 = vrot.slane %v1004, 4
        %v1070 = vsel %vm765, %v1069, %v728
        %v1071 = vrot.slane %v728, 4
        %v1072 = vsel %vm765, %v1004, %v1071
        %v1074 = vunpack.c.l.s4 1983009808
        %v1075 = vunpack.c.0.s8 %v1074
        %v1076 = vperm.slane %v1070, %v1075
        %v1078 = vunpack.c.l.s4 1983009808
        %v1079 = vunpack.c.0.s8 %v1078
        %v1080 = vperm.slane %v1072, %v1079
        %v1081 = vrot.slane %v1010, 4
        %v1082 = vsel %vm765, %v1081, %v998
        %v1083 = vrot.slane %v998, 4
        %v1084 = vsel %vm765, %v1010, %v1083
        %v1086 = vunpack.c.l.s4 1983009808
        %v1087 = vunpack.c.0.s8 %v1086
        %v1088 = vperm.slane %v1082, %v1087
        %v1090 = vunpack.c.l.s4 1983009808
        %v1091 = vunpack.c.0.s8 %v1090
        %v1092 = vperm.slane %v1084, %v1091
        %v1093 = vrot.slane %v1088, 4
        %v1094 = vsel %vm765, %v1093, %v1076
        %v1095 = vrot.slane %v1076, 4
        %v1096 = vsel %vm765, %v1088, %v1095
        %v1098 = vunpack.c.l.s4 1934713408
        %v1099 = vunpack.c.0.s8 %v1098
        %v1100 = vperm.slane %v1094, %v1099
        %v1102 = vunpack.c.l.s4 1934713408
        %v1103 = vunpack.c.0.s8 %v1102
        %v1104 = vperm.slane %v1096, %v1103
        %v1105 = vrot.slane %v1092, 4
        %v1106 = vsel %vm765, %v1105, %v1080
        %v1107 = vrot.slane %v1080, 4
        %v1108 = vsel %vm765, %v1092, %v1107
        %v1110 = vunpack.c.l.s4 1934713408
        %v1111 = vunpack.c.0.s8 %v1110
        %v1112 = vperm.slane %v1106, %v1111
        %v1114 = vunpack.c.l.s4 1934713408
        %v1115 = vunpack.c.0.s8 %v1114
        %v1116 = vperm.slane %v1108, %v1115
        %v1117 = vrot.slane %v1100, 4
        %v1118 = vsel %vm765, 0.0, %v1117
        %v1119 = vrot.slane %v1104, 4
        %v1120 = vsel %vm765, 0.0, %v1119
        %v1121 = vrot.slane %v1112, 4
        %v1122 = vsel %vm765, 0.0, %v1121
        %v1123 = vrot.slane %v1116, 4
        %v1124 = vsel %vm765, 0.0, %v1123
        %v1125 = vsel %vm765, %v1063, %v1044
        %v1127 = vunpack.c.l.s4 1983009808
        %v1128 = vunpack.c.0.s8 %v1127
        %v1129 = vperm.slane %v1125, %v1128
        %v1130 = vrot.slane %v1064, 4
        %v1131 = vsel %vm765, %v1130, %v1062
        %v1133 = vunpack.c.l.s4 1983009808
        %v1134 = vunpack.c.0.s8 %v1133
        %v1135 = vperm.slane %v1131, %v1134
        %v1136 = vsel %vm765, %v1067, %v1056
        %v1138 = vunpack.c.l.s4 1983009808
        %v1139 = vunpack.c.0.s8 %v1138
        %v1140 = vperm.slane %v1136, %v1139
        %v1141 = vrot.slane %v1068, 4
        %v1142 = vsel %vm765, %v1141, %v1066
        %v1144 = vunpack.c.l.s4 1983009808
        %v1145 = vunpack.c.0.s8 %v1144
        %v1146 = vperm.slane %v1142, %v1145
        %v1147 = vrot.slane %v1135, 4
        %v1148 = vsel %vm765, %v1147, %v1129
        %v1149 = vrot.slane %v1129, 4
        %v1150 = vsel %vm765, %v1135, %v1149
        %v1152 = vunpack.c.l.s4 1934713408
        %v1153 = vunpack.c.0.s8 %v1152
        %v1154 = vperm.slane %v1148, %v1153
        %v1156 = vunpack.c.l.s4 1934713408
        %v1157 = vunpack.c.0.s8 %v1156
        %v1158 = vperm.slane %v1150, %v1157
        %v1159 = vrot.slane %v1146, 4
        %v1160 = vsel %vm765, %v1159, %v1140
        %v1161 = vrot.slane %v1140, 4
        %v1162 = vsel %vm765, %v1146, %v1161
        %v1164 = vunpack.c.l.s4 1934713408
        %v1165 = vunpack.c.0.s8 %v1164
        %v1166 = vperm.slane %v1160, %v1165
        %v1168 = vunpack.c.l.s4 1934713408
        %v1169 = vunpack.c.0.s8 %v1168
        %v1170 = vperm.slane %v1162, %v1169
        %v1171 = vrot.slane %v1166, 4
        %v1172 = vsel %vm765, %v1171, %v1154
        %v1173 = vrot.slane %v1154, 4
        %v1174 = vsel %vm765, %v1166, %v1173
        %v1175 = vrot.slane %v1170, 4
        %v1176 = vsel %vm765, %v1175, %v1158
        %v1177 = vrot.slane %v1158, 4
        %v1178 = vsel %vm765, %v1170, %v1177
        %v1179 = vsel %vm765, %v1119, %v1100
        %v1181 = vunpack.c.l.s4 1983009808
        %v1182 = vunpack.c.0.s8 %v1181
        %v1183 = vperm.slane %v1179, %v1182
        %v1184 = vrot.slane %v1120, 4
        %v1185 = vsel %vm765, %v1184, %v1118
        %v1187 = vunpack.c.l.s4 1983009808
        %v1188 = vunpack.c.0.s8 %v1187
        %v1189 = vperm.slane %v1185, %v1188
        %v1190 = vsel %vm765, %v1123, %v1112
        %v1192 = vunpack.c.l.s4 1983009808
        %v1193 = vunpack.c.0.s8 %v1192
        %v1194 = vperm.slane %v1190, %v1193
        %v1195 = vrot.slane %v1124, 4
        %v1196 = vsel %vm765, %v1195, %v1122
        %v1198 = vunpack.c.l.s4 1983009808
        %v1199 = vunpack.c.0.s8 %v1198
        %v1200 = vperm.slane %v1196, %v1199
        %v1201 = vrot.slane %v1189, 4
        %v1202 = vsel %vm765, %v1201, %v1183
        %v1203 = vrot.slane %v1183, 4
        %v1204 = vsel %vm765, %v1189, %v1203
        %v1206 = vunpack.c.l.s4 1934713408
        %v1207 = vunpack.c.0.s8 %v1206
        %v1208 = vperm.slane %v1202, %v1207
        %v1210 = vunpack.c.l.s4 1934713408
        %v1211 = vunpack.c.0.s8 %v1210
        %v1212 = vperm.slane %v1204, %v1211
        %v1213 = vrot.slane %v1200, 4
        %v1214 = vsel %vm765, %v1213, %v1194
        %v1215 = vrot.slane %v1194, 4
        %v1216 = vsel %vm765, %v1200, %v1215
        %v1218 = vunpack.c.l.s4 1934713408
        %v1219 = vunpack.c.0.s8 %v1218
        %v1220 = vperm.slane %v1214, %v1219
        %v1222 = vunpack.c.l.s4 1934713408
        %v1223 = vunpack.c.0.s8 %v1222
        %v1224 = vperm.slane %v1216, %v1223
        %v1225 = vrot.slane %v1220, 4
        %v1226 = vsel %vm765, %v1225, %v1208
        %v1227 = vrot.slane %v1208, 4
        %v1228 = vsel %vm765, %v1220, %v1227
        %v1229 = vrot.slane %v1224, 4
        %v1230 = vsel %vm765, %v1229, %v1212
        %v1231 = vrot.slane %v1212, 4
        %v1232 = vsel %vm765, %v1224, %v1231
        %v1233 = vpack.c.bf16 %v1172, %v1172
        %v1234 = vpack.c.bf16 %v1226, %v1226
        %v1235 = vpack.c.bf16 %v1174, %v1174
        %v1236 = vpack.c.bf16 %v1228, %v1228
        %v1237 = vpack.c.bf16 %v1176, %v1176
        %v1238 = vpack.c.bf16 %v1230, %v1230
        %v1239 = vpack.c.bf16 %v1178, %v1178
        %v1240 = vpack.c.bf16 %v1232, %v1232
        %1243 = vrot.lane.b32.xlu0 %v740, 96
        %v1244 = vpop.permute.xlu0 %1243
        %1245 = vrot.lane.b32.xlu0 %v742, 96
        %v1246 = vpop.permute.xlu0 %1245
        %1249 = vrot.lane.b32.xlu0 %v740, 64
        %v1250 = vpop.permute.xlu0 %1249
        %1251 = vrot.lane.b32.xlu0 %v742, 64
        %v1252 = vpop.permute.xlu0 %1251
        %1255 = vrot.lane.b32.xlu0 %v740, 32
        %v1256 = vpop.permute.xlu0 %1255
        %1257 = vrot.lane.b32.xlu0 %v742, 32
        %v1258 = vpop.permute.xlu0 %1257
        %v1261 = vrot.slane %v1250, 4
        %v1262 = vsel %vm765, %v1261, %v740
        %v1263 = vrot.slane %v740, 4
        %v1264 = vsel %vm765, %v1250, %v1263
        %v1266 = vunpack.c.l.s4 1983009808
        %v1267 = vunpack.c.0.s8 %v1266
        %v1268 = vperm.slane %v1262, %v1267
        %v1270 = vunpack.c.l.s4 1983009808
        %v1271 = vunpack.c.0.s8 %v1270
        %v1272 = vperm.slane %v1264, %v1271
        %v1273 = vrot.slane %v1256, 4
        %v1274 = vsel %vm765, %v1273, %v1244
        %v1275 = vrot.slane %v1244, 4
        %v1276 = vsel %vm765, %v1256, %v1275
        %v1278 = vunpack.c.l.s4 1983009808
        %v1279 = vunpack.c.0.s8 %v1278
        %v1280 = vperm.slane %v1274, %v1279
        %v1282 = vunpack.c.l.s4 1983009808
        %v1283 = vunpack.c.0.s8 %v1282
        %v1284 = vperm.slane %v1276, %v1283
        %v1285 = vrot.slane %v1280, 4
        %v1286 = vsel %vm765, %v1285, %v1268
        %v1287 = vrot.slane %v1268, 4
        %v1288 = vsel %vm765, %v1280, %v1287
        %v1290 = vunpack.c.l.s4 1934713408
        %v1291 = vunpack.c.0.s8 %v1290
        %v1292 = vperm.slane %v1286, %v1291
        %v1294 = vunpack.c.l.s4 1934713408
        %v1295 = vunpack.c.0.s8 %v1294
        %v1296 = vperm.slane %v1288, %v1295
        %v1297 = vrot.slane %v1284, 4
        %v1298 = vsel %vm765, %v1297, %v1272
        %v1299 = vrot.slane %v1272, 4
        %v1300 = vsel %vm765, %v1284, %v1299
        %v1302 = vunpack.c.l.s4 1934713408
        %v1303 = vunpack.c.0.s8 %v1302
        %v1304 = vperm.slane %v1298, %v1303
        %v1306 = vunpack.c.l.s4 1934713408
        %v1307 = vunpack.c.0.s8 %v1306
        %v1308 = vperm.slane %v1300, %v1307
        %v1309 = vrot.slane %v1292, 4
        %v1310 = vsel %vm765, 0.0, %v1309
        %v1311 = vrot.slane %v1296, 4
        %v1312 = vsel %vm765, 0.0, %v1311
        %v1313 = vrot.slane %v1304, 4
        %v1314 = vsel %vm765, 0.0, %v1313
        %v1315 = vrot.slane %v1308, 4
        %v1316 = vsel %vm765, 0.0, %v1315
        %v1317 = vrot.slane %v1252, 4
        %v1318 = vsel %vm765, %v1317, %v742
        %v1319 = vrot.slane %v742, 4
        %v1320 = vsel %vm765, %v1252, %v1319
        %v1322 = vunpack.c.l.s4 1983009808
        %v1323 = vunpack.c.0.s8 %v1322
        %v1324 = vperm.slane %v1318, %v1323
        %v1326 = vunpack.c.l.s4 1983009808
        %v1327 = vunpack.c.0.s8 %v1326
        %v1328 = vperm.slane %v1320, %v1327
        %v1329 = vrot.slane %v1258, 4
        %v1330 = vsel %vm765, %v1329, %v1246
        %v1331 = vrot.slane %v1246, 4
        %v1332 = vsel %vm765, %v1258, %v1331
        %v1334 = vunpack.c.l.s4 1983009808
        %v1335 = vunpack.c.0.s8 %v1334
        %v1336 = vperm.slane %v1330, %v1335
        %v1338 = vunpack.c.l.s4 1983009808
        %v1339 = vunpack.c.0.s8 %v1338
        %v1340 = vperm.slane %v1332, %v1339
        %v1341 = vrot.slane %v1336, 4
        %v1342 = vsel %vm765, %v1341, %v1324
        %v1343 = vrot.slane %v1324, 4
        %v1344 = vsel %vm765, %v1336, %v1343
        %v1346 = vunpack.c.l.s4 1934713408
        %v1347 = vunpack.c.0.s8 %v1346
        %v1348 = vperm.slane %v1342, %v1347
        %v1350 = vunpack.c.l.s4 1934713408
        %v1351 = vunpack.c.0.s8 %v1350
        %v1352 = vperm.slane %v1344, %v1351
        %v1353 = vrot.slane %v1340, 4
        %v1354 = vsel %vm765, %v1353, %v1328
        %v1355 = vrot.slane %v1328, 4
        %v1356 = vsel %vm765, %v1340, %v1355
        %v1358 = vunpack.c.l.s4 1934713408
        %v1359 = vunpack.c.0.s8 %v1358
        %v1360 = vperm.slane %v1354, %v1359
        %v1362 = vunpack.c.l.s4 1934713408
        %v1363 = vunpack.c.0.s8 %v1362
        %v1364 = vperm.slane %v1356, %v1363
        %v1365 = vrot.slane %v1348, 4
        %v1366 = vsel %vm765, 0.0, %v1365
        %v1367 = vrot.slane %v1352, 4
        %v1368 = vsel %vm765, 0.0, %v1367
        %v1369 = vrot.slane %v1360, 4
        %v1370 = vsel %vm765, 0.0, %v1369
        %v1371 = vrot.slane %v1364, 4
        %v1372 = vsel %vm765, 0.0, %v1371
        %v1373 = vsel %vm765, %v1311, %v1292
        %v1375 = vunpack.c.l.s4 1983009808
        %v1376 = vunpack.c.0.s8 %v1375
        %v1377 = vperm.slane %v1373, %v1376
        %v1378 = vrot.slane %v1312, 4
        %v1379 = vsel %vm765, %v1378, %v1310
        %v1381 = vunpack.c.l.s4 1983009808
        %v1382 = vunpack.c.0.s8 %v1381
        %v1383 = vperm.slane %v1379, %v1382
        %v1384 = vsel %vm765, %v1315, %v1304
        %v1386 = vunpack.c.l.s4 1983009808
        %v1387 = vunpack.c.0.s8 %v1386
        %v1388 = vperm.slane %v1384, %v1387
        %v1389 = vrot.slane %v1316, 4
        %v1390 = vsel %vm765, %v1389, %v1314
        %v1392 = vunpack.c.l.s4 1983009808
        %v1393 = vunpack.c.0.s8 %v1392
        %v1394 = vperm.slane %v1390, %v1393
        %v1395 = vrot.slane %v1383, 4
        %v1396 = vsel %vm765, %v1395, %v1377
        %v1397 = vrot.slane %v1377, 4
        %v1398 = vsel %vm765, %v1383, %v1397
        %v1400 = vunpack.c.l.s4 1934713408
        %v1401 = vunpack.c.0.s8 %v1400
        %v1402 = vperm.slane %v1396, %v1401
        %v1404 = vunpack.c.l.s4 1934713408
        %v1405 = vunpack.c.0.s8 %v1404
        %v1406 = vperm.slane %v1398, %v1405
        %v1407 = vrot.slane %v1394, 4
        %v1408 = vsel %vm765, %v1407, %v1388
        %v1409 = vrot.slane %v1388, 4
        %v1410 = vsel %vm765, %v1394, %v1409
        %v1412 = vunpack.c.l.s4 1934713408
        %v1413 = vunpack.c.0.s8 %v1412
        %v1414 = vperm.slane %v1408, %v1413
        %v1416 = vunpack.c.l.s4 1934713408
        %v1417 = vunpack.c.0.s8 %v1416
        %v1418 = vperm.slane %v1410, %v1417
        %v1419 = vrot.slane %v1414, 4
        %v1420 = vsel %vm765, %v1419, %v1402
        %v1421 = vrot.slane %v1402, 4
        %v1422 = vsel %vm765, %v1414, %v1421
        %v1423 = vrot.slane %v1418, 4
        %v1424 = vsel %vm765, %v1423, %v1406
        %v1425 = vrot.slane %v1406, 4
        %v1426 = vsel %vm765, %v1418, %v1425
        %v1427 = vsel %vm765, %v1367, %v1348
        %v1429 = vunpack.c.l.s4 1983009808
        %v1430 = vunpack.c.0.s8 %v1429
        %v1431 = vperm.slane %v1427, %v1430
        %v1432 = vrot.slane %v1368, 4
        %v1433 = vsel %vm765, %v1432, %v1366
        %v1435 = vunpack.c.l.s4 1983009808
        %v1436 = vunpack.c.0.s8 %v1435
        %v1437 = vperm.slane %v1433, %v1436
        %v1438 = vsel %vm765, %v1371, %v1360
        %v1440 = vunpack.c.l.s4 1983009808
        %v1441 = vunpack.c.0.s8 %v1440
        %v1442 = vperm.slane %v1438, %v1441
        %v1443 = vrot.slane %v1372, 4
        %v1444 = vsel %vm765, %v1443, %v1370
        %v1446 = vunpack.c.l.s4 1983009808
        %v1447 = vunpack.c.0.s8 %v1446
        %v1448 = vperm.slane %v1444, %v1447
        %v1449 = vrot.slane %v1437, 4
        %v1450 = vsel %vm765, %v1449, %v1431
        %v1451 = vrot.slane %v1431, 4
        %v1452 = vsel %vm765, %v1437, %v1451
        %v1454 = vunpack.c.l.s4 1934713408
        %v1455 = vunpack.c.0.s8 %v1454
        %v1456 = vperm.slane %v1450, %v1455
        %v1458 = vunpack.c.l.s4 1934713408
        %v1459 = vunpack.c.0.s8 %v1458
        %v1460 = vperm.slane %v1452, %v1459
        %v1461 = vrot.slane %v1448, 4
        %v1462 = vsel %vm765, %v1461, %v1442
        %v1463 = vrot.slane %v1442, 4
        %v1464 = vsel %vm765, %v1448, %v1463
        %v1466 = vunpack.c.l.s4 1934713408
        %v1467 = vunpack.c.0.s8 %v1466
        %v1468 = vperm.slane %v1462, %v1467
        %v1470 = vunpack.c.l.s4 1934713408
        %v1471 = vunpack.c.0.s8 %v1470
        %v1472 = vperm.slane %v1464, %v1471
        %v1473 = vrot.slane %v1468, 4
        %v1474 = vsel %vm765, %v1473, %v1456
        %v1475 = vrot.slane %v1456, 4
        %v1476 = vsel %vm765, %v1468, %v1475
        %v1477 = vrot.slane %v1472, 4
        %v1478 = vsel %vm765, %v1477, %v1460
        %v1479 = vrot.slane %v1460, 4
        %v1480 = vsel %vm765, %v1472, %v1479
        %v1481 = vpack.c.bf16 %v1420, %v1420
        %v1482 = vpack.c.bf16 %v1474, %v1474
        %v1483 = vpack.c.bf16 %v1422, %v1422
        %v1484 = vpack.c.bf16 %v1476, %v1476
        %v1485 = vpack.c.bf16 %v1424, %v1424
        %v1486 = vpack.c.bf16 %v1478, %v1478
        %v1487 = vpack.c.bf16 %v1426, %v1426
        %v1488 = vpack.c.bf16 %v1480, %v1480
        %v1491 = vunpack.c.l.b16 %v985
        %v1492 = vunpack.c.l.b16 %v986
        %v1493 = vpack.c.b16 %v1492, %v1491
        %v1496 = vunpack.c.l.b16 %v1233
        %v1497 = vunpack.c.l.b16 %v1234
        %v1498 = vpack.c.b16 %v1497, %v1496
        %vm1499 = vcmask 261120
        %v1501 = vsel %vm1499, %v1493, 0
        %v1504 = vsel %vm1499, %v1498, 0
        %1506 = vmatpush.bf16.xpose.msra.mxu0 0
        %1507 = vmatpush.bf16.xpose.msra.mxu0 0
        %1508 = vmatpush.bf16.xpose.msra.mxu0 0
        %1509 = vmatpush.bf16.xpose.msra.mxu0 0
        %1510 = vmatpush.bf16.xpose.msra.mxu0 0
        %1511 = vmatpush.bf16.xpose.msra.mxu0 0
        %1512 = vmatpush.bf16.xpose.msra.mxu0 0
        %1513 = vmatpush.bf16.xpose.msra.mxu0 %v1504
        %1514 = vmatmul.bf16.gmra.mxu0 %v1501
        %v1515 = vpop.f32.mrf.mxu0
        %v1516 = vadd.f32 0.0, %v1515
        %v1517 = vpop.f32.mrf.mxu0
        %v1518 = vadd.f32 0.0, %v1517
        %1519 = vdwg.mxu0
        %v1522 = vunpack.c.l.b16 %v987
        %v1523 = vunpack.c.l.b16 %v988
        %v1524 = vpack.c.b16 %v1523, %v1522
        %v1527 = vunpack.c.l.b16 %v1235
        %v1528 = vunpack.c.l.b16 %v1236
        %v1529 = vpack.c.b16 %v1528, %v1527
        %v1531 = vsel %vm1499, %v1524, 0
        %v1534 = vsel %vm1499, %v1529, 0
        %1536 = vmatpush.bf16.xpose.msra.mxu0 0
        %1537 = vmatpush.bf16.xpose.msra.mxu0 0
        %1538 = vmatpush.bf16.xpose.msra.mxu0 0
        %1539 = vmatpush.bf16.xpose.msra.mxu0 0
        %1540 = vmatpush.bf16.xpose.msra.mxu0 0
        %1541 = vmatpush.bf16.xpose.msra.mxu0 0
        %1542 = vmatpush.bf16.xpose.msra.mxu0 0
        %1543 = vmatpush.bf16.xpose.msra.mxu0 %v1534
        %1544 = vmatmul.bf16.gmra.mxu0 %v1531
        %v1545 = vpop.f32.mrf.mxu0
        %v1546 = vadd.f32 0.0, %v1545
        %v1547 = vpop.f32.mrf.mxu0
        %v1548 = vadd.f32 0.0, %v1547
        %1549 = vdwg.mxu0
        %v1552 = vunpack.c.l.b16 %v989
        %v1553 = vunpack.c.l.b16 %v990
        %v1554 = vpack.c.b16 %v1553, %v1552
        %v1557 = vunpack.c.l.b16 %v1237
        %v1558 = vunpack.c.l.b16 %v1238
        %v1559 = vpack.c.b16 %v1558, %v1557
        %v1561 = vsel %vm1499, %v1554, 0
        %v1564 = vsel %vm1499, %v1559, 0
        %1566 = vmatpush.bf16.xpose.msra.mxu0 0
        %1567 = vmatpush.bf16.xpose.msra.mxu0 0
        %1568 = vmatpush.bf16.xpose.msra.mxu0 0
        %1569 = vmatpush.bf16.xpose.msra.mxu0 0
        %1570 = vmatpush.bf16.xpose.msra.mxu0 0
        %1571 = vmatpush.bf16.xpose.msra.mxu0 0
        %1572 = vmatpush.bf16.xpose.msra.mxu0 0
        %1573 = vmatpush.bf16.xpose.msra.mxu0 %v1564
        %1574 = vmatmul.bf16.gmra.mxu0 %v1561
        %v1575 = vpop.f32.mrf.mxu0
        %v1576 = vadd.f32 0.0, %v1575
        %v1577 = vpop.f32.mrf.mxu0
        %v1578 = vadd.f32 0.0, %v1577
        %1579 = vdwg.mxu0
        %v1582 = vunpack.c.l.b16 %v991
        %v1583 = vunpack.c.l.b16 %v992
        %v1584 = vpack.c.b16 %v1583, %v1582
        %v1587 = vunpack.c.l.b16 %v1239
        %v1588 = vunpack.c.l.b16 %v1240
        %v1589 = vpack.c.b16 %v1588, %v1587
        %v1591 = vsel %vm1499, %v1584, 0
        %v1594 = vsel %vm1499, %v1589, 0
        %1596 = vmatpush.bf16.xpose.msra.mxu0 0
        %1597 = vmatpush.bf16.xpose.msra.mxu0 0
        %1598 = vmatpush.bf16.xpose.msra.mxu0 0
        %1599 = vmatpush.bf16.xpose.msra.mxu0 0
        %1600 = vmatpush.bf16.xpose.msra.mxu0 0
        %1601 = vmatpush.bf16.xpose.msra.mxu0 0
        %1602 = vmatpush.bf16.xpose.msra.mxu0 0
        %1603 = vmatpush.bf16.xpose.msra.mxu0 %v1594
        %1604 = vmatmul.bf16.gmra.mxu0 %v1591
        %v1605 = vpop.f32.mrf.mxu0
        %v1606 = vadd.f32 0.0, %v1605
        %v1607 = vpop.f32.mrf.mxu0
        %v1608 = vadd.f32 0.0, %v1607
        %1609 = vdwg.mxu0
        %vm1610 = vcmask 130048
        %v1611 = vsel %vm1610, %v1516, -inf
        %1612 = vmax.xlane.f32.xlu0 %v1611
        %v1613 = vpop.xlane.xlu0 %1612
        %v1614 = vsel %vm1610, %v1518, -inf
        %1615 = vmax.xlane.f32.xlu0 %v1614
        %v1616 = vpop.xlane.xlu0 %1615
        %v1617 = vsel %vm1610, %v1546, -inf
        %1618 = vmax.xlane.f32.xlu0 %v1617
        %v1619 = vpop.xlane.xlu0 %1618
        %v1620 = vsel %vm1610, %v1548, -inf
        %1621 = vmax.xlane.f32.xlu0 %v1620
        %v1622 = vpop.xlane.xlu0 %1621
        %v1623 = vsel %vm1610, %v1576, -inf
        %1624 = vmax.xlane.f32.xlu0 %v1623
        %v1625 = vpop.xlane.xlu0 %1624
        %v1626 = vsel %vm1610, %v1578, -inf
        %1627 = vmax.xlane.f32.xlu0 %v1626
        %v1628 = vpop.xlane.xlu0 %1627
        %v1629 = vsel %vm1610, %v1606, -inf
        %1630 = vmax.xlane.f32.xlu0 %v1629
        %v1631 = vpop.xlane.xlu0 %1630
        %v1632 = vsel %vm1610, %v1608, -inf
        %1633 = vmax.xlane.f32.xlu0 %v1632
        %v1634 = vpop.xlane.xlu0 %1633
        %v1635 = vsub.f32 %v1516, %v1613
        %v1636 = vsub.f32 %v1518, %v1616
        %v1637 = vsub.f32 %v1546, %v1619
        %v1638 = vsub.f32 %v1548, %v1622
        %v1639 = vsub.f32 %v1576, %v1625
        %v1640 = vsub.f32 %v1578, %v1628
        %v1641 = vsub.f32 %v1606, %v1631
        %v1642 = vsub.f32 %v1608, %v1634
        %v1643 = vmul.f32 %v1635, 1.442695
        %v1644 = vpow.pop %v1643
        %v1645 = vmul.f32 %v1636, 1.442695
        %v1646 = vpow.pop %v1645
        %v1647 = vmul.f32 %v1637, 1.442695
        %v1648 = vpow.pop %v1647
        %v1649 = vmul.f32 %v1638, 1.442695
        %v1650 = vpow.pop %v1649
        %v1651 = vmul.f32 %v1639, 1.442695
        %v1652 = vpow.pop %v1651
        %v1653 = vmul.f32 %v1640, 1.442695
        %v1654 = vpow.pop %v1653
        %v1655 = vmul.f32 %v1641, 1.442695
        %v1656 = vpow.pop %v1655
        %v1657 = vmul.f32 %v1642, 1.442695
        %v1658 = vpow.pop %v1657
        %v1659 = vsel %vm1610, %v1644, 0.0
        %1660 = vadd.xlane.f32.xlu0 %v1659
        %v1661 = vpop.xlane.xlu0 %1660
        %v1662 = vsel %vm1610, %v1646, 0.0
        %1663 = vadd.xlane.f32.xlu0 %v1662
        %v1664 = vpop.xlane.xlu0 %1663
        %v1665 = vsel %vm1610, %v1648, 0.0
        %1666 = vadd.xlane.f32.xlu0 %v1665
        %v1667 = vpop.xlane.xlu0 %1666
        %v1668 = vsel %vm1610, %v1650, 0.0
        %1669 = vadd.xlane.f32.xlu0 %v1668
        %v1670 = vpop.xlane.xlu0 %1669
        %v1671 = vsel %vm1610, %v1652, 0.0
        %1672 = vadd.xlane.f32.xlu0 %v1671
        %v1673 = vpop.xlane.xlu0 %1672
        %v1674 = vsel %vm1610, %v1654, 0.0
        %1675 = vadd.xlane.f32.xlu0 %v1674
        %v1676 = vpop.xlane.xlu0 %1675
        %v1677 = vsel %vm1610, %v1656, 0.0
        %1678 = vadd.xlane.f32.xlu0 %v1677
        %v1679 = vpop.xlane.xlu0 %1678
        %v1680 = vsel %vm1610, %v1658, 0.0
        %1681 = vadd.xlane.f32.xlu0 %v1680
        %v1682 = vpop.xlane.xlu0 %1681
        %v1683 = vrcp.pop %v1661
        %v1684 = vrcp.pop %v1664
        %v1685 = vrcp.pop %v1667
        %v1686 = vrcp.pop %v1670
        %v1687 = vrcp.pop %v1673
        %v1688 = vrcp.pop %v1676
        %v1689 = vrcp.pop %v1679
        %v1690 = vrcp.pop %v1682
        %v1691 = vmul.f32 %v1644, %v1683
        %v1692 = vmul.f32 %v1646, %v1684
        %v1693 = vmul.f32 %v1648, %v1685
        %v1694 = vmul.f32 %v1650, %v1686
        %v1695 = vmul.f32 %v1652, %v1687
        %v1696 = vmul.f32 %v1654, %v1688
        %v1697 = vmul.f32 %v1656, %v1689
        %v1698 = vmul.f32 %v1658, %v1690
        %v1699 = vpack.c.bf16 %v1691, %v1691
        %v1700 = vpack.c.bf16 %v1692, %v1692
        %v1701 = vpack.c.bf16 %v1693, %v1693
        %v1702 = vpack.c.bf16 %v1694, %v1694
        %v1703 = vpack.c.bf16 %v1695, %v1695
        %v1704 = vpack.c.bf16 %v1696, %v1696
        %v1705 = vpack.c.bf16 %v1697, %v1697
        %v1706 = vpack.c.bf16 %v1698, %v1698
        %v1709 = vunpack.c.l.b16 %v1699
        %v1710 = vunpack.c.l.b16 %v1700
        %v1711 = vpack.c.b16 %v1710, %v1709
        %v1714 = vunpack.c.l.b16 %v1481
        %v1715 = vunpack.c.l.b16 %v1482
        %v1716 = vpack.c.b16 %v1715, %v1714
        %v1719 = vsel %vm1610, %v1711, 0
        %1721 = vmatpush.bf16.msra.mxu0 0
        %1722 = vmatpush.bf16.msra.mxu0 0
        %1723 = vmatpush.bf16.msra.mxu0 0
        %1724 = vmatpush.bf16.msra.mxu0 0
        %1725 = vmatpush.bf16.msra.mxu0 0
        %1726 = vmatpush.bf16.msra.mxu0 0
        %1727 = vmatpush.bf16.msra.mxu0 0
        %1728 = vmatpush.bf16.msra.mxu0 %v1716
        %1729 = vmatmul.bf16.gmra.mxu0 %v1719
        %v1730 = vpop.f32.mrf.mxu0
        %v1731 = vadd.f32 0.0, %v1730
        %v1732 = vpop.f32.mrf.mxu0
        %v1733 = vadd.f32 0.0, %v1732
        %1734 = vdwg.mxu0
        %v1737 = vunpack.c.l.b16 %v1701
        %v1738 = vunpack.c.l.b16 %v1702
        %v1739 = vpack.c.b16 %v1738, %v1737
        %v1742 = vunpack.c.l.b16 %v1483
        %v1743 = vunpack.c.l.b16 %v1484
        %v1744 = vpack.c.b16 %v1743, %v1742
        %v1747 = vsel %vm1610, %v1739, 0
        %1749 = vmatpush.bf16.msra.mxu0 0
        %1750 = vmatpush.bf16.msra.mxu0 0
        %1751 = vmatpush.bf16.msra.mxu0 0
        %1752 = vmatpush.bf16.msra.mxu0 0
        %1753 = vmatpush.bf16.msra.mxu0 0
        %1754 = vmatpush.bf16.msra.mxu0 0
        %1755 = vmatpush.bf16.msra.mxu0 0
        %1756 = vmatpush.bf16.msra.mxu0 %v1744
        %1757 = vmatmul.bf16.gmra.mxu0 %v1747
        %v1758 = vpop.f32.mrf.mxu0
        %v1759 = vadd.f32 0.0, %v1758
        %v1760 = vpop.f32.mrf.mxu0
        %v1761 = vadd.f32 0.0, %v1760
        %1762 = vdwg.mxu0
        %v1765 = vunpack.c.l.b16 %v1703
        %v1766 = vunpack.c.l.b16 %v1704
        %v1767 = vpack.c.b16 %v1766, %v1765
        %v1770 = vunpack.c.l.b16 %v1485
        %v1771 = vunpack.c.l.b16 %v1486
        %v1772 = vpack.c.b16 %v1771, %v1770
        %v1775 = vsel %vm1610, %v1767, 0
        %1777 = vmatpush.bf16.msra.mxu0 0
        %1778 = vmatpush.bf16.msra.mxu0 0
        %1779 = vmatpush.bf16.msra.mxu0 0
        %1780 = vmatpush.bf16.msra.mxu0 0
        %1781 = vmatpush.bf16.msra.mxu0 0
        %1782 = vmatpush.bf16.msra.mxu0 0
        %1783 = vmatpush.bf16.msra.mxu0 0
        %1784 = vmatpush.bf16.msra.mxu0 %v1772
        %1785 = vmatmul.bf16.gmra.mxu0 %v1775
        %v1786 = vpop.f32.mrf.mxu0
        %v1787 = vadd.f32 0.0, %v1786
        %v1788 = vpop.f32.mrf.mxu0
        %v1789 = vadd.f32 0.0, %v1788
        %1790 = vdwg.mxu0
        %v1793 = vunpack.c.l.b16 %v1705
        %v1794 = vunpack.c.l.b16 %v1706
        %v1795 = vpack.c.b16 %v1794, %v1793
        %v1798 = vunpack.c.l.b16 %v1487
        %v1799 = vunpack.c.l.b16 %v1488
        %v1800 = vpack.c.b16 %v1799, %v1798
        %v1803 = vsel %vm1610, %v1795, 0
        %1805 = vmatpush.bf16.msra.mxu0 0
        %1806 = vmatpush.bf16.msra.mxu0 0
        %1807 = vmatpush.bf16.msra.mxu0 0
        %1808 = vmatpush.bf16.msra.mxu0 0
        %1809 = vmatpush.bf16.msra.mxu0 0
        %1810 = vmatpush.bf16.msra.mxu0 0
        %1811 = vmatpush.bf16.msra.mxu0 0
        %1812 = vmatpush.bf16.msra.mxu0 %v1800
        %1813 = vmatmul.bf16.gmra.mxu0 %v1803
        %v1814 = vpop.f32.mrf.mxu0
        %v1815 = vadd.f32 0.0, %v1814
        %v1816 = vpop.f32.mrf.mxu0
        %v1817 = vadd.f32 0.0, %v1816
        %1818 = vdwg.mxu0
        %v1819 = vrot.slane %v1787, 4
        %v1820 = vsel %vm765, %v1819, %v1731
        %v1821 = vrot.slane %v1731, 4
        %v1822 = vsel %vm765, %v1787, %v1821
        %v1824 = vunpack.c.l.s4 1983009808
        %v1825 = vunpack.c.0.s8 %v1824
        %v1826 = vperm.slane %v1820, %v1825
        %v1828 = vunpack.c.l.s4 1983009808
        %v1829 = vunpack.c.0.s8 %v1828
        %v1830 = vperm.slane %v1822, %v1829
        %v1831 = vrot.slane %v1815, 4
        %v1832 = vsel %vm765, %v1831, %v1759
        %v1833 = vrot.slane %v1759, 4
        %v1834 = vsel %vm765, %v1815, %v1833
        %v1836 = vunpack.c.l.s4 1983009808
        %v1837 = vunpack.c.0.s8 %v1836
        %v1838 = vperm.slane %v1832, %v1837
        %v1840 = vunpack.c.l.s4 1983009808
        %v1841 = vunpack.c.0.s8 %v1840
        %v1842 = vperm.slane %v1834, %v1841
        %v1843 = vrot.slane %v1838, 4
        %v1844 = vsel %vm765, %v1843, %v1826
        %v1845 = vrot.slane %v1826, 4
        %v1846 = vsel %vm765, %v1838, %v1845
        %v1848 = vunpack.c.l.s4 1934713408
        %v1849 = vunpack.c.0.s8 %v1848
        %v1850 = vperm.slane %v1844, %v1849
        %v1852 = vunpack.c.l.s4 1934713408
        %v1853 = vunpack.c.0.s8 %v1852
        %v1854 = vperm.slane %v1846, %v1853
        %v1855 = vrot.slane %v1842, 4
        %v1856 = vsel %vm765, %v1855, %v1830
        %v1857 = vrot.slane %v1830, 4
        %v1858 = vsel %vm765, %v1842, %v1857
        %v1860 = vunpack.c.l.s4 1934713408
        %v1861 = vunpack.c.0.s8 %v1860
        %v1862 = vperm.slane %v1856, %v1861
        %v1864 = vunpack.c.l.s4 1934713408
        %v1865 = vunpack.c.0.s8 %v1864
        %v1866 = vperm.slane %v1858, %v1865
        %v1867 = vrot.slane %v1850, 4
        %v1868 = vsel %vm765, 0.0, %v1867
        %v1869 = vrot.slane %v1854, 4
        %v1870 = vsel %vm765, 0.0, %v1869
        %v1871 = vrot.slane %v1862, 4
        %v1872 = vsel %vm765, 0.0, %v1871
        %v1873 = vrot.slane %v1866, 4
        %v1874 = vsel %vm765, 0.0, %v1873
        %v1875 = vrot.slane %v1789, 4
        %v1876 = vsel %vm765, %v1875, %v1733
        %v1877 = vrot.slane %v1733, 4
        %v1878 = vsel %vm765, %v1789, %v1877
        %v1880 = vunpack.c.l.s4 1983009808
        %v1881 = vunpack.c.0.s8 %v1880
        %v1882 = vperm.slane %v1876, %v1881
        %v1884 = vunpack.c.l.s4 1983009808
        %v1885 = vunpack.c.0.s8 %v1884
        %v1886 = vperm.slane %v1878, %v1885
        %v1887 = vrot.slane %v1817, 4
        %v1888 = vsel %vm765, %v1887, %v1761
        %v1889 = vrot.slane %v1761, 4
        %v1890 = vsel %vm765, %v1817, %v1889
        %v1892 = vunpack.c.l.s4 1983009808
        %v1893 = vunpack.c.0.s8 %v1892
        %v1894 = vperm.slane %v1888, %v1893
        %v1896 = vunpack.c.l.s4 1983009808
        %v1897 = vunpack.c.0.s8 %v1896
        %v1898 = vperm.slane %v1890, %v1897
        %v1899 = vrot.slane %v1894, 4
        %v1900 = vsel %vm765, %v1899, %v1882
        %v1901 = vrot.slane %v1882, 4
        %v1902 = vsel %vm765, %v1894, %v1901
        %v1904 = vunpack.c.l.s4 1934713408
        %v1905 = vunpack.c.0.s8 %v1904
        %v1906 = vperm.slane %v1900, %v1905
        %v1908 = vunpack.c.l.s4 1934713408
        %v1909 = vunpack.c.0.s8 %v1908
        %v1910 = vperm.slane %v1902, %v1909
        %v1911 = vrot.slane %v1898, 4
        %v1912 = vsel %vm765, %v1911, %v1886
        %v1913 = vrot.slane %v1886, 4
        %v1914 = vsel %vm765, %v1898, %v1913
        %v1916 = vunpack.c.l.s4 1934713408
        %v1917 = vunpack.c.0.s8 %v1916
        %v1918 = vperm.slane %v1912, %v1917
        %v1920 = vunpack.c.l.s4 1934713408
        %v1921 = vunpack.c.0.s8 %v1920
        %v1922 = vperm.slane %v1914, %v1921
        %v1923 = vrot.slane %v1906, 4
        %v1924 = vsel %vm765, 0.0, %v1923
        %v1925 = vrot.slane %v1910, 4
        %v1926 = vsel %vm765, 0.0, %v1925
        %v1927 = vrot.slane %v1918, 4
        %v1928 = vsel %vm765, 0.0, %v1927
        %v1929 = vrot.slane %v1922, 4
        %v1930 = vsel %vm765, 0.0, %v1929
        %v1931 = vsel %vm765, %v1869, %v1850
        %v1933 = vunpack.c.l.s4 1983009808
        %v1934 = vunpack.c.0.s8 %v1933
        %v1935 = vperm.slane %v1931, %v1934
        %v1936 = vrot.slane %v1870, 4
        %v1937 = vsel %vm765, %v1936, %v1868
        %v1939 = vunpack.c.l.s4 1983009808
        %v1940 = vunpack.c.0.s8 %v1939
        %v1941 = vperm.slane %v1937, %v1940
        %v1942 = vsel %vm765, %v1873, %v1862
        %v1944 = vunpack.c.l.s4 1983009808
        %v1945 = vunpack.c.0.s8 %v1944
        %v1946 = vperm.slane %v1942, %v1945
        %v1947 = vrot.slane %v1874, 4
        %v1948 = vsel %vm765, %v1947, %v1872
        %v1950 = vunpack.c.l.s4 1983009808
        %v1951 = vunpack.c.0.s8 %v1950
        %v1952 = vperm.slane %v1948, %v1951
        %v1953 = vrot.slane %v1941, 4
        %v1954 = vsel %vm765, %v1953, %v1935
        %v1955 = vrot.slane %v1935, 4
        %v1956 = vsel %vm765, %v1941, %v1955
        %v1958 = vunpack.c.l.s4 1934713408
        %v1959 = vunpack.c.0.s8 %v1958
        %v1960 = vperm.slane %v1954, %v1959
        %v1962 = vunpack.c.l.s4 1934713408
        %v1963 = vunpack.c.0.s8 %v1962
        %v1964 = vperm.slane %v1956, %v1963
        %v1965 = vrot.slane %v1952, 4
        %v1966 = vsel %vm765, %v1965, %v1946
        %v1967 = vrot.slane %v1946, 4
        %v1968 = vsel %vm765, %v1952, %v1967
        %v1970 = vunpack.c.l.s4 1934713408
        %v1971 = vunpack.c.0.s8 %v1970
        %v1972 = vperm.slane %v1966, %v1971
        %v1974 = vunpack.c.l.s4 1934713408
        %v1975 = vunpack.c.0.s8 %v1974
        %v1976 = vperm.slane %v1968, %v1975
        %v1977 = vrot.slane %v1972, 4
        %v1978 = vsel %vm765, %v1977, %v1960
        %v1979 = vrot.slane %v1960, 4
        %v1980 = vsel %vm765, %v1972, %v1979
        %v1981 = vrot.slane %v1976, 4
        %v1982 = vsel %vm765, %v1981, %v1964
        %v1983 = vrot.slane %v1964, 4
        %v1984 = vsel %vm765, %v1976, %v1983
        %v1985 = vsel %vm765, %v1925, %v1906
        %v1987 = vunpack.c.l.s4 1983009808
        %v1988 = vunpack.c.0.s8 %v1987
        %v1989 = vperm.slane %v1985, %v1988
        %v1990 = vrot.slane %v1926, 4
        %v1991 = vsel %vm765, %v1990, %v1924
        %v1993 = vunpack.c.l.s4 1983009808
        %v1994 = vunpack.c.0.s8 %v1993
        %v1995 = vperm.slane %v1991, %v1994
        %v1996 = vsel %vm765, %v1929, %v1918
        %v1998 = vunpack.c.l.s4 1983009808
        %v1999 = vunpack.c.0.s8 %v1998
        %v2000 = vperm.slane %v1996, %v1999
        %v2001 = vrot.slane %v1930, 4
        %v2002 = vsel %vm765, %v2001, %v1928
        %v2004 = vunpack.c.l.s4 1983009808
        %v2005 = vunpack.c.0.s8 %v2004
        %v2006 = vperm.slane %v2002, %v2005
        %v2007 = vrot.slane %v1995, 4
        %v2008 = vsel %vm765, %v2007, %v1989
        %v2009 = vrot.slane %v1989, 4
        %v2010 = vsel %vm765, %v1995, %v2009
        %v2012 = vunpack.c.l.s4 1934713408
        %v2013 = vunpack.c.0.s8 %v2012
        %v2014 = vperm.slane %v2008, %v2013
        %v2016 = vunpack.c.l.s4 1934713408
        %v2017 = vunpack.c.0.s8 %v2016
        %v2018 = vperm.slane %v2010, %v2017
        %v2019 = vrot.slane %v2006, 4
        %v2020 = vsel %vm765, %v2019, %v2000
        %v2021 = vrot.slane %v2000, 4
        %v2022 = vsel %vm765, %v2006, %v2021
        %v2024 = vunpack.c.l.s4 1934713408
        %v2025 = vunpack.c.0.s8 %v2024
        %v2026 = vperm.slane %v2020, %v2025
        %v2028 = vunpack.c.l.s4 1934713408
        %v2029 = vunpack.c.0.s8 %v2028
        %v2030 = vperm.slane %v2022, %v2029
        %v2031 = vrot.slane %v2026, 4
        %v2032 = vsel %vm765, %v2031, %v2014
        %v2033 = vrot.slane %v2014, 4
        %v2034 = vsel %vm765, %v2026, %v2033
        %v2035 = vrot.slane %v2030, 4
        %v2036 = vsel %vm765, %v2035, %v2018
        %v2037 = vrot.slane %v2018, 4
        %v2038 = vsel %vm765, %v2030, %v2037
        %2041 = vrot.lane.b32.xlu0 %v1980, 32
        %v2042 = vpop.permute.xlu0 %2041
        %2043 = vrot.lane.b32.xlu0 %v2034, 32
        %v2044 = vpop.permute.xlu0 %2043
        %2049 = vrot.lane.b32.xlu0 %v1982, 64
        %v2050 = vpop.permute.xlu0 %2049
        %2051 = vrot.lane.b32.xlu0 %v2036, 64
        %v2052 = vpop.permute.xlu0 %2051
        %2057 = vrot.lane.b32.xlu0 %v1984, 96
        %v2058 = vpop.permute.xlu0 %2057
        %2059 = vrot.lane.b32.xlu0 %v2038, 96
        %v2060 = vpop.permute.xlu0 %2059
        %v2063 = vsel %vm1499, %v1978, %v2042
        %v2064 = vsel %vm1499, %v2032, %v2044
        %vm2065 = vcmask 523264
        %v2066 = vsel %vm2065, %v2063, %v2050
        %v2067 = vsel %vm2065, %v2064, %v2052
        %vm2068 = vcmask 785408
        %v2069 = vsel %vm2068, %v2066, %v2058
        %v2070 = vsel %vm2068, %v2067, %v2060
        %v2071 = vpack.c.bf16 %v2070, %v2069
        %v2072 = vld [vmem:[#allocation5] sm:$0xf]
        %v2073 = vld [vmem:[#allocation5 + $0x4] sm:$0xf]
        %v2074 = vld [vmem:[#allocation5 + $0x8] sm:$0xf]
        %v2075 = vld [vmem:[#allocation5 + $0xc] sm:$0xf]
        %v2076 = vld [vmem:[#allocation5 + $0x10] sm:$0xf]
        %v2077 = vld [vmem:[#allocation5 + $0x14] sm:$0xf]
        %v2078 = vld [vmem:[#allocation5 + $0x18] sm:$0xf]
        %v2079 = vld [vmem:[#allocation5 + $0x1c] sm:$0xf]
        %v2080 = vld [vmem:[#allocation5 + $0x20] sm:$0xf]
        %v2081 = vld [vmem:[#allocation5 + $0x24] sm:$0xf]
        %v2082 = vld [vmem:[#allocation5 + $0x28] sm:$0xf]
        %v2083 = vld [vmem:[#allocation5 + $0x2c] sm:$0xf]
        %v2084 = vld [vmem:[#allocation5 + $0x30] sm:$0xf]
        %v2085 = vld [vmem:[#allocation5 + $0x34] sm:$0xf]
        %v2086 = vld [vmem:[#allocation5 + $0x38] sm:$0xf]
        %v2087 = vld [vmem:[#allocation5 + $0x3c] sm:$0xf]
        %v2088 = vld [vmem:[%s5] sm:$0x1]
        %v2090 = vperm.slane %v2088, 0
        %v2108 = vunpack.c.l.b16 %v2072
        %v2109 = vunpack.c.l.b16 %v2073
        %v2110 = vunpack.c.l.b16 %v2074
        %v2111 = vunpack.c.l.b16 %v2075
        %v2112 = vunpack.c.l.b16 %v2076
        %v2113 = vunpack.c.l.b16 %v2077
        %v2114 = vunpack.c.l.b16 %v2078
        %v2115 = vunpack.c.l.b16 %v2079
        %v2116 = vunpack.c.l.b16 %v2080
        %v2117 = vunpack.c.l.b16 %v2081
        %v2118 = vunpack.c.l.b16 %v2082
        %v2119 = vunpack.c.l.b16 %v2083
        %v2120 = vunpack.c.l.b16 %v2084
        %v2121 = vunpack.c.l.b16 %v2085
        %v2122 = vunpack.c.l.b16 %v2086
        %v2123 = vunpack.c.l.b16 %v2087
        %v2124 = vpack.c.b16 %v2109, %v2108
        %v2125 = vpack.c.b16 %v2111, %v2110
        %v2126 = vpack.c.b16 %v2113, %v2112
        %v2127 = vpack.c.b16 %v2115, %v2114
        %v2128 = vpack.c.b16 %v2117, %v2116
        %v2129 = vpack.c.b16 %v2119, %v2118
        %v2130 = vpack.c.b16 %v2121, %v2120
        %v2131 = vpack.c.b16 %v2123, %v2122
        %2140 = vmatpush.bf16.msra.mxu0 %v2131
        %2141 = vmatpush.bf16.msra.mxu0 %v2130
        %2142 = vmatpush.bf16.msra.mxu0 %v2129
        %2143 = vmatpush.bf16.msra.mxu0 %v2128
        %2144 = vmatpush.bf16.msra.mxu0 %v2127
        %2145 = vmatpush.bf16.msra.mxu0 %v2126
        %2146 = vmatpush.bf16.msra.mxu0 %v2125
        %2147 = vmatpush.bf16.msra.mxu0 %v2124
        %2148 = vmatmul.bf16.gmra.mxu0 %v2071
        %v2149 = vpop.f32.mrf.mxu0
        %v2150 = vadd.f32 %v2090, %v2149
        %v2151 = vpop.f32.mrf.mxu0
        %v2152 = vadd.f32 %v2090, %v2151
        %2153 = vdwg.mxu0
        %v2154 = vadd.f32 %v480, %v2150
        %v2155 = vadd.f32 %v481, %v2152
        %v2156 = vld [vmem:[%s6] sm:$0x1]
        %v2157 = vld [vmem:[%s7] sm:$0x1]
        %2158 = vadd.xlane.f32.xlu0 %v2154
        %v2159 = vpop.xlane.xlu0 %2158
        %2160 = vadd.xlane.f32.xlu0 %v2155
        %v2161 = vpop.xlane.xlu0 %2160
        %v2162 = vmul.f32 %v2159, %v494
        %v2163 = vmul.f32 %v2161, %v494
        %v2164 = vsub.f32 %v2154, %v2162
        %v2165 = vsub.f32 %v2155, %v2163
        %v2166 = vmul.f32 %v2164, %v2164
        %v2167 = vmul.f32 %v2165, %v2165
        %2168 = vadd.xlane.f32.xlu0 %v2166
        %v2169 = vpop.xlane.xlu0 %2168
        %2170 = vadd.xlane.f32.xlu0 %v2167
        %v2171 = vpop.xlane.xlu0 %2170
        %v2172 = vmul.f32 %v2169, %v494
        %v2173 = vmul.f32 %v2171, %v494
        %v2174 = vadd.f32 %v2172, 1e-05
        %v2175 = vadd.f32 %v2173, 1e-05
        %v2176 = vrsqrt.pop %v2174
        %v2177 = vmul.f32 %v2176, %v2174
        %v2178 = vmul.f32 %v2177, %v2176
        %v2179 = vmul.f32 0.5, %v2178
        %v2180 = vsub.f32 1.5, %v2179
        %v2181 = vmul.f32 %v2176, %v2180
        %vm2182 = vweird.f32 %v2174
        %vm2183 = vweird.f32 %v2176
        %vm2184 = vmor %vm2182, %vm2183
        %v2185 = vsel %vm2184, %v2176, %v2181
        %v2186 = vrsqrt.pop %v2175
        %v2187 = vmul.f32 %v2186, %v2175
        %v2188 = vmul.f32 %v2187, %v2186
        %v2189 = vmul.f32 0.5, %v2188
        %v2190 = vsub.f32 1.5, %v2189
        %v2191 = vmul.f32 %v2186, %v2190
        %vm2192 = vweird.f32 %v2175
        %vm2193 = vweird.f32 %v2186
        %vm2194 = vmor %vm2192, %vm2193
        %v2195 = vsel %vm2194, %v2186, %v2191
        %v2196 = vmul.f32 %v2164, %v2185
        %v2197 = vmul.f32 %v2165, %v2195
        %v2199 = vperm.slane %v2156, 0
        %v2201 = vmul.f32 %v2196, %v2199
        %v2202 = vmul.f32 %v2197, %v2199
        %v2204 = vperm.slane %v2157, 0
        %v2206 = vadd.f32 %v2201, %v2204
        %v2207 = vadd.f32 %v2202, %v2204
        %v2208 = vpack.c.bf16 %v2207, %v2206
        %v2209 = vld [vmem:[#allocation7] sm:$0xff]
        %v2210 = vld [vmem:[#allocation7 + $0x8] sm:$0xff]
        %v2211 = vld [vmem:[#allocation7 + $0x10] sm:$0xff]
        %v2212 = vld [vmem:[#allocation7 + $0x18] sm:$0xff]
        %v2213 = vld [vmem:[#allocation7 + $0x20] sm:$0xff]
        %v2214 = vld [vmem:[#allocation7 + $0x28] sm:$0xff]
        %v2215 = vld [vmem:[#allocation7 + $0x30] sm:$0xff]
        %v2216 = vld [vmem:[#allocation7 + $0x38] sm:$0xff]
        %v2217 = vld [vmem:[#allocation7 + $0x40] sm:$0xff]
        %v2218 = vld [vmem:[#allocation7 + $0x48] sm:$0xff]
        %v2219 = vld [vmem:[#allocation7 + $0x50] sm:$0xff]
        %v2220 = vld [vmem:[#allocation7 + $0x58] sm:$0xff]
        %v2221 = vld [vmem:[#allocation7 + $0x60] sm:$0xff]
        %v2222 = vld [vmem:[#allocation7 + $0x68] sm:$0xff]
        %v2223 = vld [vmem:[#allocation7 + $0x70] sm:$0xff]
        %v2224 = vld [vmem:[#allocation7 + $0x78] sm:$0xff]
        %v2225 = vld [vmem:[%s9] sm:$0x3]
        %v2227 = vperm.slane %v2225, 0
        %v2228 = vperm.slane %v2225, 1
        %v2247 = vunpack.c.l.b16 %v2209
        %v2248 = vunpack.c.h.b16 %v2209
        %v2249 = vunpack.c.l.b16 %v2210
        %v2250 = vunpack.c.h.b16 %v2210
        %v2251 = vunpack.c.l.b16 %v2211
        %v2252 = vunpack.c.h.b16 %v2211
        %v2253 = vunpack.c.l.b16 %v2212
        %v2254 = vunpack.c.h.b16 %v2212
        %v2255 = vunpack.c.l.b16 %v2213
        %v2256 = vunpack.c.h.b16 %v2213
        %v2257 = vunpack.c.l.b16 %v2214
        %v2258 = vunpack.c.h.b16 %v2214
        %v2259 = vunpack.c.l.b16 %v2215
        %v2260 = vunpack.c.h.b16 %v2215
        %v2261 = vunpack.c.l.b16 %v2216
        %v2262 = vunpack.c.h.b16 %v2216
        %v2263 = vunpack.c.l.b16 %v2217
        %v2264 = vunpack.c.h.b16 %v2217
        %v2265 = vunpack.c.l.b16 %v2218
        %v2266 = vunpack.c.h.b16 %v2218
        %v2267 = vunpack.c.l.b16 %v2219
        %v2268 = vunpack.c.h.b16 %v2219
        %v2269 = vunpack.c.l.b16 %v2220
        %v2270 = vunpack.c.h.b16 %v2220
        %v2271 = vunpack.c.l.b16 %v2221
        %v2272 = vunpack.c.h.b16 %v2221
        %v2273 = vunpack.c.l.b16 %v2222
        %v2274 = vunpack.c.h.b16 %v2222
        %v2275 = vunpack.c.l.b16 %v2223
        %v2276 = vunpack.c.h.b16 %v2223
        %v2277 = vunpack.c.l.b16 %v2224
        %v2278 = vunpack.c.h.b16 %v2224
        %v2279 = vpack.c.b16 %v2249, %v2247
        %v2280 = vpack.c.b16 %v2250, %v2248
        %v2281 = vpack.c.b16 %v2253, %v2251
        %v2282 = vpack.c.b16 %v2254, %v2252
        %v2283 = vpack.c.b16 %v2257, %v2255
        %v2284 = vpack.c.b16 %v2258, %v2256
        %v2285 = vpack.c.b16 %v2261, %v2259
        %v2286 = vpack.c.b16 %v2262, %v2260
        %v2287 = vpack.c.b16 %v2265, %v2263
        %v2288 = vpack.c.b16 %v2266, %v2264
        %v2289 = vpack.c.b16 %v2269, %v2267
        %v2290 = vpack.c.b16 %v2270, %v2268
        %v2291 = vpack.c.b16 %v2273, %v2271
        %v2292 = vpack.c.b16 %v2274, %v2272
        %v2293 = vpack.c.b16 %v2277, %v2275
        %v2294 = vpack.c.b16 %v2278, %v2276
        %2311 = vmatpush.bf16.msra.mxu0 %v2293
        %2312 = vmatpush.bf16.msra.mxu0 %v2291
        %2313 = vmatpush.bf16.msra.mxu0 %v2289
        %2314 = vmatpush.bf16.msra.mxu0 %v2287
        %2315 = vmatpush.bf16.msra.mxu0 %v2285
        %2316 = vmatpush.bf16.msra.mxu0 %v2283
        %2317 = vmatpush.bf16.msra.mxu0 %v2281
        %2318 = vmatpush.bf16.msra.mxu0 %v2279
        %2319 = vmatmul.bf16.gmra.mxu0 %v2208
        %v2320 = vpop.f32.mrf.mxu0
        %v2321 = vadd.f32 %v2227, %v2320
        %v2322 = vpop.f32.mrf.mxu0
        %v2323 = vadd.f32 %v2227, %v2322
        %2324 = vdwg.mxu0
        %2325 = vmatpush.bf16.msra.mxu0 %v2294
        %2326 = vmatpush.bf16.msra.mxu0 %v2292
        %2327 = vmatpush.bf16.msra.mxu0 %v2290
        %2328 = vmatpush.bf16.msra.mxu0 %v2288
        %2329 = vmatpush.bf16.msra.mxu0 %v2286
        %2330 = vmatpush.bf16.msra.mxu0 %v2284
        %2331 = vmatpush.bf16.msra.mxu0 %v2282
        %2332 = vmatpush.bf16.msra.mxu0 %v2280
        %2333 = vmatmul.bf16.gmra.mxu0 %v2208
        %v2334 = vpop.f32.mrf.mxu0
        %v2335 = vadd.f32 %v2228, %v2334
        %v2336 = vpop.f32.mrf.mxu0
        %v2337 = vadd.f32 %v2228, %v2336
        %2338 = vdwg.mxu0
        %v2339 = vmax.f32 %v2321, 0.0
        %v2340 = vmax.f32 %v2335, 0.0
        %v2341 = vmax.f32 %v2323, 0.0
        %v2342 = vmax.f32 %v2337, 0.0
        %v2343 = vpack.c.bf16 %v2341, %v2339
        %v2344 = vpack.c.bf16 %v2342, %v2340
        %v2345 = vld [vmem:[#allocation8] sm:$0xf]
        %v2346 = vld [vmem:[#allocation8 + $0x4] sm:$0xf]
        %v2347 = vld [vmem:[#allocation8 + $0x8] sm:$0xf]
        %v2348 = vld [vmem:[#allocation8 + $0xc] sm:$0xf]
        %v2349 = vld [vmem:[#allocation8 + $0x10] sm:$0xf]
        %v2350 = vld [vmem:[#allocation8 + $0x14] sm:$0xf]
        %v2351 = vld [vmem:[#allocation8 + $0x18] sm:$0xf]
        %v2352 = vld [vmem:[#allocation8 + $0x1c] sm:$0xf]
        %v2353 = vld [vmem:[#allocation8 + $0x20] sm:$0xf]
        %v2354 = vld [vmem:[#allocation8 + $0x24] sm:$0xf]
        %v2355 = vld [vmem:[#allocation8 + $0x28] sm:$0xf]
        %v2356 = vld [vmem:[#allocation8 + $0x2c] sm:$0xf]
        %v2357 = vld [vmem:[#allocation8 + $0x30] sm:$0xf]
        %v2358 = vld [vmem:[#allocation8 + $0x34] sm:$0xf]
        %v2359 = vld [vmem:[#allocation8 + $0x38] sm:$0xf]
        %v2360 = vld [vmem:[#allocation8 + $0x3c] sm:$0xf]
        %v2361 = vld [vmem:[#allocation8 + $0x40] sm:$0xf]
        %v2362 = vld [vmem:[#allocation8 + $0x44] sm:$0xf]
        %v2363 = vld [vmem:[#allocation8 + $0x48] sm:$0xf]
        %v2364 = vld [vmem:[#allocation8 + $0x4c] sm:$0xf]
        %v2365 = vld [vmem:[#allocation8 + $0x50] sm:$0xf]
        %v2366 = vld [vmem:[#allocation8 + $0x54] sm:$0xf]
        %v2367 = vld [vmem:[#allocation8 + $0x58] sm:$0xf]
        %v2368 = vld [vmem:[#allocation8 + $0x5c] sm:$0xf]
        %v2369 = vld [vmem:[#allocation8 + $0x60] sm:$0xf]
        %v2370 = vld [vmem:[#allocation8 + $0x64] sm:$0xf]
        %v2371 = vld [vmem:[#allocation8 + $0x68] sm:$0xf]
        %v2372 = vld [vmem:[#allocation8 + $0x6c] sm:$0xf]
        %v2373 = vld [vmem:[#allocation8 + $0x70] sm:$0xf]
        %v2374 = vld [vmem:[#allocation8 + $0x74] sm:$0xf]
        %v2375 = vld [vmem:[#allocation8 + $0x78] sm:$0xf]
        %v2376 = vld [vmem:[#allocation8 + $0x7c] sm:$0xf]
        %v2377 = vld [vmem:[%s11] sm:$0x1]
        %v2379 = vperm.slane %v2377, 0
        %v2413 = vunpack.c.l.b16 %v2345
        %v2414 = vunpack.c.l.b16 %v2346
        %v2415 = vunpack.c.l.b16 %v2347
        %v2416 = vunpack.c.l.b16 %v2348
        %v2417 = vunpack.c.l.b16 %v2349
        %v2418 = vunpack.c.l.b16 %v2350
        %v2419 = vunpack.c.l.b16 %v2351
        %v2420 = vunpack.c.l.b16 %v2352
        %v2421 = vunpack.c.l.b16 %v2353
        %v2422 = vunpack.c.l.b16 %v2354
        %v2423 = vunpack.c.l.b16 %v2355
        %v2424 = vunpack.c.l.b16 %v2356
        %v2425 = vunpack.c.l.b16 %v2357
        %v2426 = vunpack.c.l.b16 %v2358
        %v2427 = vunpack.c.l.b16 %v2359
        %v2428 = vunpack.c.l.b16 %v2360
        %v2429 = vunpack.c.l.b16 %v2361
        %v2430 = vunpack.c.l.b16 %v2362
        %v2431 = vunpack.c.l.b16 %v2363
        %v2432 = vunpack.c.l.b16 %v2364
        %v2433 = vunpack.c.l.b16 %v2365
        %v2434 = vunpack.c.l.b16 %v2366
        %v2435 = vunpack.c.l.b16 %v2367
        %v2436 = vunpack.c.l.b16 %v2368
        %v2437 = vunpack.c.l.b16 %v2369
        %v2438 = vunpack.c.l.b16 %v2370
        %v2439 = vunpack.c.l.b16 %v2371
        %v2440 = vunpack.c.l.b16 %v2372
        %v2441 = vunpack.c.l.b16 %v2373
        %v2442 = vunpack.c.l.b16 %v2374
        %v2443 = vunpack.c.l.b16 %v2375
        %v2444 = vunpack.c.l.b16 %v2376
        %v2445 = vpack.c.b16 %v2414, %v2413
        %v2446 = vpack.c.b16 %v2416, %v2415
        %v2447 = vpack.c.b16 %v2418, %v2417
        %v2448 = vpack.c.b16 %v2420, %v2419
        %v2449 = vpack.c.b16 %v2422, %v2421
        %v2450 = vpack.c.b16 %v2424, %v2423
        %v2451 = vpack.c.b16 %v2426, %v2425
        %v2452 = vpack.c.b16 %v2428, %v2427
        %v2453 = vpack.c.b16 %v2430, %v2429
        %v2454 = vpack.c.b16 %v2432, %v2431
        %v2455 = vpack.c.b16 %v2434, %v2433
        %v2456 = vpack.c.b16 %v2436, %v2435
        %v2457 = vpack.c.b16 %v2438, %v2437
        %v2458 = vpack.c.b16 %v2440, %v2439
        %v2459 = vpack.c.b16 %v2442, %v2441
        %v2460 = vpack.c.b16 %v2444, %v2443
        %2477 = vmatpush.bf16.msra.mxu0 %v2452
        %2478 = vmatpush.bf16.msra.mxu0 %v2451
        %2479 = vmatpush.bf16.msra.mxu0 %v2450
        %2480 = vmatpush.bf16.msra.mxu0 %v2449
        %2481 = vmatpush.bf16.msra.mxu0 %v2448
        %2482 = vmatpush.bf16.msra.mxu0 %v2447
        %2483 = vmatpush.bf16.msra.mxu0 %v2446
        %2484 = vmatpush.bf16.msra.mxu0 %v2445
        %2485 = vmatmul.bf16.gmra.mxu0 %v2343
        %v2486 = vpop.f32.mrf.mxu0
        %v2487 = vadd.f32 %v2379, %v2486
        %v2488 = vpop.f32.mrf.mxu0
        %v2489 = vadd.f32 %v2379, %v2488
        %2490 = vdwg.mxu0
        %2491 = vmatpush.bf16.msra.mxu0 %v2460
        %2492 = vmatpush.bf16.msra.mxu0 %v2459
        %2493 = vmatpush.bf16.msra.mxu0 %v2458
        %2494 = vmatpush.bf16.msra.mxu0 %v2457
        %2495 = vmatpush.bf16.msra.mxu0 %v2456
        %2496 = vmatpush.bf16.msra.mxu0 %v2455
        %2497 = vmatpush.bf16.msra.mxu0 %v2454
        %2498 = vmatpush.bf16.msra.mxu0 %v2453
        %2499 = vmatmul.bf16.gmra.mxu0 %v2344
        %v2500 = vpop.f32.mrf.mxu0
        %v2501 = vadd.f32 %v2487, %v2500
        %v2502 = vpop.f32.mrf.mxu0
        %v2503 = vadd.f32 %v2489, %v2502
        %2504 = vdwg.mxu0
        %v2505 = vadd.f32 %v2154, %v2501
        %v2506 = vadd.f32 %v2155, %v2503
        %2507 = vst [vmem:[%s473] sm:$0xff] %v2505
        %2508 = vst [vmem:[%s473 + $0x8] sm:$0xff] %v2506
        %s2509 = sand.u32 %s294, 1
        %s2510 = scalar_lea.sflag [#allocation4], %s2509
        %s2511 = sand.u32 %s294, 1
        %s2512 = smul.addr %s2511, 16
        %s2513 = scalar_lea.vmem [#allocation10], %s2512
        // Predicated region
        $region85: #{transformer_forward.3} parent=67 // pred_check
          %p2514 = pneg %p304
        $region86: #{transformer_forward.3} parent=67 // pred_check_branch
          %2516 = sbr.rel (%p2514) target = $region88
        $region87: #{transformer_forward.3} parent=67 // pred_region
          %2518 = vsyncadd %s2510, 0
          %s2519 = smul.addr %s29, 2
          %s2520 = smul.addr %s2519, 8
          %s2521 = scalar_lea.hbm %s12, %s2520
          %s2522 = sshll.u32 %s2513, 4
          %s2523 = int_to_ptr.vmem [resolvable:$true] %s2522
          %s2524 = sshll.u32 %s2521, 4
          %s2525 = int_to_ptr.hbm [resolvable:$true] %s2524
          %2530 = dma.vmem_to_hbm [thread:$0]  %s2523, 256, %s2525, %s2510, 128, 128, 8
        $region88: #{transformer_forward.3} parent=67 // pred_fallthru
          _
      $region68: #{transformer_forward.3} parent=5 // pred_fallthru
        _
      %p2531 = scmp.le.s32.totalorder 2, %s24
      // Predicated region
      $region89: #{transformer_forward.3} parent=5 // pred_check
        %p2532 = pneg %p2531
      $region90: #{transformer_forward.3} parent=5 // pred_check_branch
        %2534 = sbr.rel (%p2532) target = $region92
      $region91: #{transformer_forward.3} parent=5 // pred_region
        %s2535 = ssub.s32 %s24, 2
        // Predicated region
        $region93: #{transformer_forward.3} parent=91 // pred_check
          %p2536 = pneg %p310
        $region94: #{transformer_forward.3} parent=91 // pred_check_branch
          %2538 = sbr.rel (%p2536) target = $region96
        $region95: #{transformer_forward.3} parent=91 // pred_region
          %s2539 = sand.u32 %s295, 1
          %s2540 = scalar_lea.sflag [#allocation4], %s2539
          %s2541 = sand.u32 %s295, 1
          %s2542 = smul.addr %s2541, 16
          %s2543 = scalar_lea.vmem [#allocation10], %s2542
          %2545 = dma.done %s2540, 256
        $region96: #{transformer_forward.3} parent=91 // pred_fallthru
          _
      $region92: #{transformer_forward.3} parent=5 // pred_fallthru
        _
    $region6: #{transformer_forward.3} parent=1 // loop_footer
      %s28 = sadd.s32 1, %s24
    $region7: #{transformer_forward.3} parent=1 // loop_footer_branch
      %23 = sbr.rel target = $region3
    $region8: #{transformer_forward.3} parent=1 // loop_exit
      _
    %2546 = vsyncpa [#allocation3], 1
    %s2547 = scalar_lea.sflag [#allocation3], 1
    %2548 = vsyncpa %s2547, 1
    %2549 = vsyncpa [#allocation6], 1
    %2550 = vsyncpa [#allocation9], 1
    %2551 = vsyncpa [#allocation4], 1
    %s2552 = scalar_lea.sflag [#allocation4], 1
    %2553 = vsyncpa %s2552, 1

</llo_original>
